<compile_context>
chip_gen: v7x
topology: tpu7x:2x2x1
jax: 0.10.0
libtpu: 0.0.40
codegen_flags: <defaults>
</compile_context>

<pallas_src>
import functools

import jax
import jax.numpy as jnp
from jax.experimental import pallas as pl
from jax.experimental.pallas import tpu as pltpu

# Logical (PyTorch) dims and lane-padded dims used by the kernel.
IN_DIM = 600
HIDDEN_DIMS = (1024, 512, 256, 128)
NUM_CLASSES = 100

IN_DIM_PAD = 640        # 5 * 128 lanes
HEAD_DIM_PAD = 128      # classifier head padded 100 -> 128
MAX_BATCH_TILE = 512    # per-grid-step batch rows


def _round_up(x, m):
    return (x + m - 1) // m * m


def _cdiv(a, b):
    return -(-a // b)


def _bf16_math_supported():
    """bf16 VPU/EUP exists on v6e/v7x; v5e (and older) keep the f32 tanh path."""
    try:
        kind = jax.devices()[0].device_kind.lower()
    except Exception:
        return False
    return any(tag in kind for tag in ("v6", "v7", "7x"))


def _choose_batch_tile(batch):
    """Pick the per-grid-step batch tile.

    Goals: as large as possible (amortize ~0.35us/step pipeline overhead) but
    <= MAX_BATCH_TILE; >= 2 grid steps whenever the batch allows it (keeps both
    v7x TensorCores busy); a multiple of 16 so the kernel can split it into two
    8-row-aligned halves; minimal zero-row padding waste.
    """
    if batch <= 16:
        return max(8, _round_up(batch, 8))
    steps = max(2, _cdiv(batch, MAX_BATCH_TILE))
    return min(MAX_BATCH_TILE, _round_up(_cdiv(batch, steps), 16))


def _fused_mlp_kernel(x_ref,
                      w1_ref, b1_ref, w2_ref, b2_ref, w3_ref, b3_ref,
                      w4_ref, b4_ref, w5_ref, b5_ref,
                      logits_ref, hidden_ref,
                      *, num_splits, act_dtype):
    """All 5 layers of PurchaseClassifier, fully VMEM-resident.

    The batch tile is processed as `num_splits` independent row groups so the
    compiler can interleave one group's MXU matmul with another group's EUP
    tanh (the 5-layer chain is otherwise a single serial dependency chain).
    """
    rows = x_ref.shape[0]
    sub = rows // num_splits

    def layer(h_bf16, w_ref, b_ref, apply_tanh):
        y = jnp.dot(h_bf16, w_ref[...], preferred_element_type=jnp.float32)
        y = y + b_ref[...]                 # f32 bias add on the f32 MXU output
        if apply_tanh:
            # bf16 tanh on v6e/v7x (bf16 EUP), f32 on v5e; returned as bf16 so
            # the next MXU matmul needs no extra cast.
            return jnp.tanh(y.astype(act_dtype)).astype(jnp.bfloat16)
        return y

    for s in range(num_splits):           # static unroll -> independent chains
        lo, hi = s * sub, (s + 1) * sub
        h = x_ref[lo:hi, :]                               # already bf16
        h = layer(h, w1_ref, b1_ref, True)
        h = layer(h, w2_ref, b2_ref, True)
        h = layer(h, w3_ref, b3_ref, True)
        h = layer(h, w4_ref, b4_ref, True)                # hidden_out (bf16)
        hidden_ref[lo:hi, :] = h.astype(hidden_ref.dtype)
        logits = layer(h, w5_ref, b5_ref, False)          # padded head, f32
        logits_ref[lo:hi, :] = logits.astype(logits_ref.dtype)


def _fused_forward(x_pad, packed_params, *, batch_tile, num_splits, act_dtype):
    """x_pad: [B_pad, IN_DIM_PAD] bf16; packed_params: flat [w1,b1,...,w5,b5]."""
    b_pad = x_pad.shape[0]
    grid = (b_pad // batch_tile,)

    def resident_spec(shape):
        # Same full-array block for every grid step (weights/biases stay put,
        # fetched once; constant index_map -> no re-DMA across steps).
        return pl.BlockSpec(shape, lambda i: (0, 0))

    in_specs = [pl.BlockSpec((batch_tile, IN_DIM_PAD), lambda i: (i, 0))]
    in_specs += [resident_spec(p.shape) for p in packed_params]

    out_specs = [
        pl.BlockSpec((batch_tile, HEAD_DIM_PAD), lambda i: (i, 0)),      # logits (padded)
        pl.BlockSpec((batch_tile, HIDDEN_DIMS[-1]), lambda i: (i, 0)),   # hidden_out
    ]

    kernel = functools.partial(_fused_mlp_kernel,
                               num_splits=num_splits, act_dtype=act_dtype)

    logits_pad, hidden = pl.pallas_call(
        kernel,
        out_shape=(
            jax.ShapeDtypeStruct((b_pad, HEAD_DIM_PAD), jnp.float32),
            jax.ShapeDtypeStruct((b_pad, HIDDEN_DIMS[-1]), jnp.float32),
        ),
        grid=grid,
        in_specs=in_specs,
        out_specs=out_specs,
        compiler_params=pltpu.CompilerParams(
            dimension_semantics=("parallel",),
            vmem_limit_bytes=32 * 1024 * 1024),
    )(x_pad, *packed_params)
    return logits_pad, hidden


def init_linear_params(key, in_dim, out_dim):
    """Deterministic init mimicking torch.nn.Linear (uniform +/- 1/sqrt(fan_in))."""
    kw, kb = jax.random.split(key)
    bound = 1.0 / jnp.sqrt(jnp.float32(in_dim))
    w = jax.random.uniform(kw, (in_dim, out_dim), jnp.float32, -bound, bound)
    b = jax.random.uniform(kb, (1, out_dim), jnp.float32, -bound, bound)
    return w, b


def init_purchase_classifier_params(key, num_classes=NUM_CLASSES):
    dims = [(IN_DIM, HIDDEN_DIMS[0])]
    dims += list(zip(HIDDEN_DIMS[:-1], HIDDEN_DIMS[1:]))
    dims += [(HIDDEN_DIMS[-1], num_classes)]
    keys = jax.random.split(key, len(dims))
    return [init_linear_params(k, i, o) for k, (i, o) in zip(keys, dims)]


def pack_params(params):
    """Pad weights/biases to lane-aligned shapes and cast weights to bf16.

    Zero-padding rows 600:640 of W1 and cols 100:128 of W5/b5 keeps the math
    identical to the unpadded model.
    """
    packed = []
    for idx, (w, b) in enumerate(params):
        in_dim, out_dim = w.shape
        in_pad = IN_DIM_PAD if idx == 0 else in_dim
        out_pad = _round_up(out_dim, 128)
        w_p = jnp.zeros((in_pad, out_pad), jnp.float32).at[:in_dim, :out_dim].set(w)
        b_p = jnp.zeros((1, out_pad), jnp.float32).at[:, :out_dim].set(b)
        packed.append(w_p.astype(jnp.bfloat16))   # bf16 weights (MXU inputs)
        packed.append(b_p)                        # f32 bias
    return packed


@jax.jit
def purchase_classifier_forward(packed_params, x):
    batch = x.shape[0]
    batch_tile = _choose_batch_tile(batch)
    b_pad = _round_up(batch, batch_tile)
    num_splits = 2 if (batch_tile % 16 == 0 and batch_tile >= 64) else 1
    act_dtype = jnp.bfloat16 if _bf16_math_supported() else jnp.float32

    # Fold the bf16 cast into the pad-to-640 op (halves the per-step x DMA).
    x_pad = jnp.zeros((b_pad, IN_DIM_PAD), jnp.bfloat16)
    x_pad = x_pad.at[:batch, :IN_DIM].set(x.astype(jnp.bfloat16))

    logits_pad, hidden_pad = _fused_forward(
        x_pad, packed_params, batch_tile=batch_tile,
        num_splits=num_splits, act_dtype=act_dtype)
    return logits_pad[:batch, :NUM_CLASSES], hidden_pad[:batch]


def reference_forward(params, x):
    """Pure-JAX f32 reference matching the PyTorch module."""
    h = x
    for (w, b) in params[:-1]:
        h = jnp.tanh(h @ w + b)
    w, b = params[-1]
    return h @ w + b, h


if __name__ == "__main__":
    key = jax.random.PRNGKey(0)
    pkey, xkey = jax.random.split(key)

    params = init_purchase_classifier_params(pkey, num_classes=NUM_CLASSES)
    packed = pack_params(params)

    batch = 8
    x = jax.random.normal(xkey, (batch, IN_DIM), dtype=jnp.float32)

    logits, hidden = purchase_classifier_forward(packed, x)
    jax.block_until_ready((logits, hidden))

    assert logits.shape == (batch, NUM_CLASSES), logits.shape
    assert hidden.shape == (batch, HIDDEN_DIMS[-1]), hidden.shape
    assert bool(jnp.all(jnp.isfinite(logits)))
    assert bool(jnp.all(jnp.abs(hidden) <= 1.0))  # tanh range

    # Numerical check vs f32 reference (bf16 matmuls/tanh -> ~1e-2 deviation).
    ref_logits, ref_hidden = reference_forward(params, x)
    assert float(jnp.max(jnp.abs(logits - ref_logits))) < 1.5e-1
    assert float(jnp.max(jnp.abs(hidden - ref_hidden))) < 1.5e-1

    # Exercise a batch that is not a tile multiple (multi-step grid path).
    x2 = jax.random.normal(jax.random.PRNGKey(1), (3, IN_DIM), dtype=jnp.float32)
    l2, h2 = purchase_classifier_forward(packed, x2)
    jax.block_until_ready((l2, h2))
    assert l2.shape == (3, NUM_CLASSES) and h2.shape == (3, HIDDEN_DIMS[-1])

    print("KERNEL_OK")
</pallas_src>

<mosaic_0001>
module attributes {stable_mosaic.version = 11 : i64} {
  func.func @_fused_mlp_kernel(%arg0: i32, %arg1: memref<8x640xbf16, #tpu.memory_space<vmem>>, %arg2: memref<640x1024xbf16, #tpu.memory_space<vmem>>, %arg3: memref<1x1024xf32, #tpu.memory_space<vmem>>, %arg4: memref<1024x512xbf16, #tpu.memory_space<vmem>>, %arg5: memref<1x512xf32, #tpu.memory_space<vmem>>, %arg6: memref<512x256xbf16, #tpu.memory_space<vmem>>, %arg7: memref<1x256xf32, #tpu.memory_space<vmem>>, %arg8: memref<256x128xbf16, #tpu.memory_space<vmem>>, %arg9: memref<1x128xf32, #tpu.memory_space<vmem>>, %arg10: memref<128x128xbf16, #tpu.memory_space<vmem>>, %arg11: memref<1x128xf32, #tpu.memory_space<vmem>>, %arg12: memref<8x128xf32, #tpu.memory_space<vmem>>, %arg13: memref<8x128xf32, #tpu.memory_space<vmem>>) attributes {dimension_semantics = [#tpu.dimension_semantics<parallel>], iteration_bounds = array<i64: 1>, scalar_prefetch = 0 : i64, scratch_operands = 0 : i64, tpu.core_type = #tpu.core_type<tc>, window_params = [{transform_indices = @transform_0, window_bounds = array<i64: 8, 640>}, {pipeline_mode = #tpu.pipeline_mode<synchronous>, transform_indices = @transform_1, window_bounds = array<i64: 640, 1024>}, {pipeline_mode = #tpu.pipeline_mode<synchronous>, transform_indices = @transform_2, window_bounds = array<i64: 1, 1024>}, {pipeline_mode = #tpu.pipeline_mode<synchronous>, transform_indices = @transform_3, window_bounds = array<i64: 1024, 512>}, {pipeline_mode = #tpu.pipeline_mode<synchronous>, transform_indices = @transform_4, window_bounds = array<i64: 1, 512>}, {pipeline_mode = #tpu.pipeline_mode<synchronous>, transform_indices = @transform_5, window_bounds = array<i64: 512, 256>}, {pipeline_mode = #tpu.pipeline_mode<synchronous>, transform_indices = @transform_6, window_bounds = array<i64: 1, 256>}, {pipeline_mode = #tpu.pipeline_mode<synchronous>, transform_indices = @transform_7, window_bounds = array<i64: 256, 128>}, {pipeline_mode = #tpu.pipeline_mode<synchronous>, transform_indices = @transform_8, window_bounds = array<i64: 1, 128>}, {pipeline_mode = #tpu.pipeline_mode<synchronous>, transform_indices = @transform_9, window_bounds = array<i64: 128, 128>}, {pipeline_mode = #tpu.pipeline_mode<synchronous>, transform_indices = @transform_10, window_bounds = array<i64: 1, 128>}, {transform_indices = @transform_11, window_bounds = array<i64: 8, 128>}, {transform_indices = @transform_12, window_bounds = array<i64: 8, 128>}]} {
    %c0 = arith.constant 0 : index
    %c0_0 = arith.constant 0 : index
    %0 = vector.load %arg1[%c0, %c0_0] : memref<8x640xbf16, #tpu.memory_space<vmem>>, vector<8x640xbf16>
    %c0_1 = arith.constant 0 : index
    %c0_2 = arith.constant 0 : index
    %1 = vector.load %arg2[%c0_1, %c0_2] : memref<640x1024xbf16, #tpu.memory_space<vmem>>, vector<640x1024xbf16>
    %cst = arith.constant dense<0.000000e+00> : vector<8x1024xf32>
    %2 = tpu.matmul %0, %1, %cst {dimension_numbers = #tpu.dot_dimension_numbers<[1], [0], [0], [1], [0, 0, 1, 1], [], []>} : vector<8x640xbf16>, vector<640x1024xbf16>, vector<8x1024xf32> -> vector<8x1024xf32>
    %c0_3 = arith.constant 0 : index
    %c0_4 = arith.constant 0 : index
    %3 = vector.load %arg3[%c0_3, %c0_4] : memref<1x1024xf32, #tpu.memory_space<vmem>>, vector<1x1024xf32>
    %4 = vector.broadcast %3 : vector<1x1024xf32> to vector<8x1024xf32>
    %5 = arith.addf %2, %4 : vector<8x1024xf32>
    %6 = math.tanh %5 : vector<8x1024xf32>
    %7 = arith.truncf %6 : vector<8x1024xf32> to vector<8x1024xbf16>
    %c0_5 = arith.constant 0 : index
    %c0_6 = arith.constant 0 : index
    %8 = vector.load %arg4[%c0_5, %c0_6] : memref<1024x512xbf16, #tpu.memory_space<vmem>>, vector<1024x512xbf16>
    %cst_7 = arith.constant dense<0.000000e+00> : vector<8x512xf32>
    %9 = tpu.matmul %7, %8, %cst_7 {dimension_numbers = #tpu.dot_dimension_numbers<[1], [0], [0], [1], [0, 0, 1, 1], [], []>} : vector<8x1024xbf16>, vector<1024x512xbf16>, vector<8x512xf32> -> vector<8x512xf32>
    %c0_8 = arith.constant 0 : index
    %c0_9 = arith.constant 0 : index
    %10 = vector.load %arg5[%c0_8, %c0_9] : memref<1x512xf32, #tpu.memory_space<vmem>>, vector<1x512xf32>
    %11 = vector.broadcast %10 : vector<1x512xf32> to vector<8x512xf32>
    %12 = arith.addf %9, %11 : vector<8x512xf32>
    %13 = math.tanh %12 : vector<8x512xf32>
    %14 = arith.truncf %13 : vector<8x512xf32> to vector<8x512xbf16>
    %c0_10 = arith.constant 0 : index
    %c0_11 = arith.constant 0 : index
    %15 = vector.load %arg6[%c0_10, %c0_11] : memref<512x256xbf16, #tpu.memory_space<vmem>>, vector<512x256xbf16>
    %cst_12 = arith.constant dense<0.000000e+00> : vector<8x256xf32>
    %16 = tpu.matmul %14, %15, %cst_12 {dimension_numbers = #tpu.dot_dimension_numbers<[1], [0], [0], [1], [0, 0, 1, 1], [], []>} : vector<8x512xbf16>, vector<512x256xbf16>, vector<8x256xf32> -> vector<8x256xf32>
    %c0_13 = arith.constant 0 : index
    %c0_14 = arith.constant 0 : index
    %17 = vector.load %arg7[%c0_13, %c0_14] : memref<1x256xf32, #tpu.memory_space<vmem>>, vector<1x256xf32>
    %18 = vector.broadcast %17 : vector<1x256xf32> to vector<8x256xf32>
    %19 = arith.addf %16, %18 : vector<8x256xf32>
    %20 = math.tanh %19 : vector<8x256xf32>
    %21 = arith.truncf %20 : vector<8x256xf32> to vector<8x256xbf16>
    %c0_15 = arith.constant 0 : index
    %c0_16 = arith.constant 0 : index
    %22 = vector.load %arg8[%c0_15, %c0_16] : memref<256x128xbf16, #tpu.memory_space<vmem>>, vector<256x128xbf16>
    %cst_17 = arith.constant dense<0.000000e+00> : vector<8x128xf32>
    %23 = tpu.matmul %21, %22, %cst_17 {dimension_numbers = #tpu.dot_dimension_numbers<[1], [0], [0], [1], [0, 0, 1, 1], [], []>} : vector<8x256xbf16>, vector<256x128xbf16>, vector<8x128xf32> -> vector<8x128xf32>
    %c0_18 = arith.constant 0 : index
    %c0_19 = arith.constant 0 : index
    %24 = vector.load %arg9[%c0_18, %c0_19] : memref<1x128xf32, #tpu.memory_space<vmem>>, vector<1x128xf32>
    %25 = vector.broadcast %24 : vector<1x128xf32> to vector<8x128xf32>
    %26 = arith.addf %23, %25 : vector<8x128xf32>
    %27 = math.tanh %26 : vector<8x128xf32>
    %28 = arith.truncf %27 : vector<8x128xf32> to vector<8x128xbf16>
    %29 = arith.extf %28 : vector<8x128xbf16> to vector<8x128xf32>
    %c0_20 = arith.constant 0 : index
    %c0_21 = arith.constant 0 : index
    %30 = vector.load %arg13[%c0_20, %c0_21] : memref<8x128xf32, #tpu.memory_space<vmem>>, vector<8x128xf32>
    tpu.vector_store %arg13[%c0_20, %c0_21], %29 {strides = array<i32>} : memref<8x128xf32, #tpu.memory_space<vmem>>, vector<8x128xf32>,
    %c0_22 = arith.constant 0 : index
    %c0_23 = arith.constant 0 : index
    %31 = vector.load %arg10[%c0_22, %c0_23] : memref<128x128xbf16, #tpu.memory_space<vmem>>, vector<128x128xbf16>
    %cst_24 = arith.constant dense<0.000000e+00> : vector<8x128xf32>
    %32 = tpu.matmul %28, %31, %cst_24 {dimension_numbers = #tpu.dot_dimension_numbers<[1], [0], [0], [1], [0, 0, 1, 1], [], []>} : vector<8x128xbf16>, vector<128x128xbf16>, vector<8x128xf32> -> vector<8x128xf32>
    %c0_25 = arith.constant 0 : index
    %c0_26 = arith.constant 0 : index
    %33 = vector.load %arg11[%c0_25, %c0_26] : memref<1x128xf32, #tpu.memory_space<vmem>>, vector<1x128xf32>
    %34 = vector.broadcast %33 : vector<1x128xf32> to vector<8x128xf32>
    %35 = arith.addf %32, %34 : vector<8x128xf32>
    %c0_27 = arith.constant 0 : index
    %c0_28 = arith.constant 0 : index
    %36 = vector.load %arg12[%c0_27, %c0_28] : memref<8x128xf32, #tpu.memory_space<vmem>>, vector<8x128xf32>
    tpu.vector_store %arg12[%c0_27, %c0_28], %35 {strides = array<i32>} : memref<8x128xf32, #tpu.memory_space<vmem>>, vector<8x128xf32>,
    return
  }
  func.func @transform_0(%arg0: i32) -> (i32, i32) {
    %c0_i32 = arith.constant 0 : i32
    %c0_i32_0 = arith.constant 0 : i32
    return %arg0, %c0_i32 : i32, i32
  }
  func.func @transform_1(%arg0: i32) -> (i32, i32) {
    %c0_i32 = arith.constant 0 : i32
    %c0_i32_0 = arith.constant 0 : i32
    %c0_i32_1 = arith.constant 0 : i32
    return %c0_i32, %c0_i32_0 : i32, i32
  }
  func.func @transform_2(%arg0: i32) -> (i32, i32) {
    %c0_i32 = arith.constant 0 : i32
    %c0_i32_0 = arith.constant 0 : i32
    %c0_i32_1 = arith.constant 0 : i32
    return %c0_i32, %c0_i32_0 : i32, i32
  }
  func.func @transform_3(%arg0: i32) -> (i32, i32) {
    %c0_i32 = arith.constant 0 : i32
    %c0_i32_0 = arith.constant 0 : i32
    %c0_i32_1 = arith.constant 0 : i32
    return %c0_i32, %c0_i32_0 : i32, i32
  }
  func.func @transform_4(%arg0: i32) -> (i32, i32) {
    %c0_i32 = arith.constant 0 : i32
    %c0_i32_0 = arith.constant 0 : i32
    %c0_i32_1 = arith.constant 0 : i32
    return %c0_i32, %c0_i32_0 : i32, i32
  }
  func.func @transform_5(%arg0: i32) -> (i32, i32) {
    %c0_i32 = arith.constant 0 : i32
    %c0_i32_0 = arith.constant 0 : i32
    %c0_i32_1 = arith.constant 0 : i32
    return %c0_i32, %c0_i32_0 : i32, i32
  }
  func.func @transform_6(%arg0: i32) -> (i32, i32) {
    %c0_i32 = arith.constant 0 : i32
    %c0_i32_0 = arith.constant 0 : i32
    %c0_i32_1 = arith.constant 0 : i32
    return %c0_i32, %c0_i32_0 : i32, i32
  }
  func.func @transform_7(%arg0: i32) -> (i32, i32) {
    %c0_i32 = arith.constant 0 : i32
    %c0_i32_0 = arith.constant 0 : i32
    %c0_i32_1 = arith.constant 0 : i32
    return %c0_i32, %c0_i32_0 : i32, i32
  }
  func.func @transform_8(%arg0: i32) -> (i32, i32) {
    %c0_i32 = arith.constant 0 : i32
    %c0_i32_0 = arith.constant 0 : i32
    %c0_i32_1 = arith.constant 0 : i32
    return %c0_i32, %c0_i32_0 : i32, i32
  }
  func.func @transform_9(%arg0: i32) -> (i32, i32) {
    %c0_i32 = arith.constant 0 : i32
    %c0_i32_0 = arith.constant 0 : i32
    %c0_i32_1 = arith.constant 0 : i32
    return %c0_i32, %c0_i32_0 : i32, i32
  }
  func.func @transform_10(%arg0: i32) -> (i32, i32) {
    %c0_i32 = arith.constant 0 : i32
    %c0_i32_0 = arith.constant 0 : i32
    %c0_i32_1 = arith.constant 0 : i32
    return %c0_i32, %c0_i32_0 : i32, i32
  }
  func.func @transform_11(%arg0: i32) -> (i32, i32) {
    %c0_i32 = arith.constant 0 : i32
    %c0_i32_0 = arith.constant 0 : i32
    return %arg0, %c0_i32 : i32, i32
  }
  func.func @transform_12(%arg0: i32) -> (i32, i32) {
    %c0_i32 = arith.constant 0 : i32
    %c0_i32_0 = arith.constant 0 : i32
    return %arg0, %c0_i32 : i32, i32
  }
}

</mosaic_0001>

<llo_original>
// kernel: purchase_classifier_forward.1
$region0: #{purchase_classifier_forward.1}
  #allocation0 [shape = 'u32[]', space=smem, size = 0x4, offset = 0x4, fixed_abs, tag = 'smem constant byte address 0x4 - core index']
  #allocation1 [shape = 'u32[144,128]{1,0:T(1,128)}', space=vmem, size = 0x12000, scoped, tag = 'internal scratch']
  %s0 = inlined_call_operand.vmem [shape: bf16[8,640], index: 0, kind: input, shape index: {}]
  %s1 = inlined_call_operand.hbm [shape: bf16[640,1024], index: 1, kind: input, shape index: {}]
  %s2 = inlined_call_operand.hbm [shape: f32[1,1024], index: 2, kind: input, shape index: {}]
  %s3 = inlined_call_operand.hbm [shape: bf16[1024,512], index: 3, kind: input, shape index: {}]
  %s4 = inlined_call_operand.hbm [shape: f32[1,512], index: 4, kind: input, shape index: {}]
  %s5 = inlined_call_operand.hbm [shape: bf16[512,256], index: 5, kind: input, shape index: {}]
  %s6 = inlined_call_operand.hbm [shape: f32[1,256], index: 6, kind: input, shape index: {}]
  %s7 = inlined_call_operand.hbm [shape: bf16[256,128], index: 7, kind: input, shape index: {}]
  %s8 = inlined_call_operand.hbm [shape: f32[1,128], index: 8, kind: input, shape index: {}]
  %s9 = inlined_call_operand.hbm [shape: bf16[128,128], index: 9, kind: input, shape index: {}]
  %s10 = inlined_call_operand.hbm [shape: f32[1,128], index: 10, kind: input, shape index: {}]
  %s11 = inlined_call_operand.hbm [shape: f32[8,128], index: 11, kind: output, shape index: {0}]
  %s12 = inlined_call_operand.hbm [shape: f32[8,128], index: 12, kind: output, shape index: {1}]
  %13 = xla_tuple %s11, %s12
  %s14 = sld [smem:[#allocation0]]
  $region102: #{purchase_classifier_forward.1} parent=0
    _
  %s16 = ssub.s32 1, %s14
  %s17 = scalar_select 0, %s16, %s14
  $region1: #{purchase_classifier_forward.1} parent=0
    #allocation2 [shape = 'u8[1310720]{0}', space=vmem, size = 0x140000, scoped, tag = 'input window, operand 1, single buffered']
    #allocation3 [shape = 's32[1]{0}', space=sflag, size = 0x4, scoped, tag = 'scoped memory for purchase_classifier_forward.1']
    #allocation4 [shape = 's32[1]{0}', space=sflag, size = 0x4, scoped, tag = 'scoped memory for purchase_classifier_forward.1']
    #allocation5 [shape = 'u8[4096]{0}', space=vmem, size = 0x1000, scoped, tag = 'input window, operand 2, single buffered']
    #allocation6 [shape = 's32[1]{0}', space=sflag, size = 0x4, scoped, tag = 'scoped memory for purchase_classifier_forward.1']
    #allocation7 [shape = 'u8[1048576]{0}', space=vmem, size = 0x100000, scoped, tag = 'input window, operand 3, single buffered']
    #allocation8 [shape = 'u8[2048]{0}', space=vmem, size = 0x800, scoped, tag = 'input window, operand 4, single buffered']
    #allocation9 [shape = 's32[1]{0}', space=sflag, size = 0x4, scoped, tag = 'scoped memory for purchase_classifier_forward.1']
    #allocation10 [shape = 'u8[262144]{0}', space=vmem, size = 0x40000, scoped, tag = 'input window, operand 5, single buffered']
    #allocation11 [shape = 'u8[1024]{0}', space=vmem, size = 0x400, scoped, tag = 'input window, operand 6, single buffered']
    #allocation12 [shape = 's32[1]{0}', space=sflag, size = 0x4, scoped, tag = 'scoped memory for purchase_classifier_forward.1']
    #allocation13 [shape = 'u8[65536]{0}', space=vmem, size = 0x10000, scoped, tag = 'input window, operand 7, single buffered']
    #allocation14 [shape = 'u8[512]{0}', space=vmem, size = 0x400, scoped, tag = 'input window, operand 8, single buffered']
    #allocation15 [shape = 's32[1]{0}', space=sflag, size = 0x4, scoped, tag = 'scoped memory for purchase_classifier_forward.1']
    #allocation16 [shape = 'u8[32768]{0}', space=vmem, size = 0x8000, scoped, tag = 'input window, operand 9, single buffered']
    #allocation17 [shape = 'u8[512]{0}', space=vmem, size = 0x400, scoped, tag = 'input window, operand 10, single buffered']
    #allocation18 [shape = 's32[1]{0}', space=sflag, size = 0x4, scoped, tag = 'scoped memory for purchase_classifier_forward.1']
    #allocation19 [shape = 'u8[4096]{0}', space=vmem, size = 0x1000, scoped, tag = 'output window, operand 0, single buffered']
    #allocation20 [shape = 'u8[4096]{0}', space=vmem, size = 0x1000, scoped, tag = 'output window, operand 1, single buffered']
    #allocation21 [shape = 's32[1]{0}', space=sflag, size = 0x4, scoped, tag = 'scoped memory for purchase_classifier_forward.1']
    %18 = vsyncpa [#allocation3], 0
    %19 = vsyncpa [#allocation6], 0
    %20 = vsyncpa [#allocation9], 0
    %21 = vsyncpa [#allocation12], 0
    %22 = vsyncpa [#allocation15], 0
    %23 = vsyncpa [#allocation18], 0
    %24 = vsyncpa [#allocation4], 0
    %25 = vsyncpa [#allocation21], 0
    // Predicated region
    $region2: #{purchase_classifier_forward.1} parent=1 // pred_check
      _
    $region3: #{purchase_classifier_forward.1} parent=1 // pred_check_branch
      %27 = sbr.rel (0) target = $region5
    $region4: #{purchase_classifier_forward.1} parent=1 // pred_region
      _
    $region5: #{purchase_classifier_forward.1} parent=1 // pred_fallthru
      _
    // Predicated region
    $region6: #{purchase_classifier_forward.1} parent=1 // pred_check
      _
    $region7: #{purchase_classifier_forward.1} parent=1 // pred_check_branch
      %29 = sbr.rel (0) target = $region9
    $region8: #{purchase_classifier_forward.1} parent=1 // pred_region
      %s31 = ssub.s32 40960, 40960
      %32 = vsyncadd [#allocation3], %s31
      %s33 = sshll.u32 [#allocation2], 4
      %s34 = int_to_ptr.vmem [resolvable:$true] %s33
      %39 = dma.hbm_to_vmem [thread:$0]  %s1, 40960, %s34, [#allocation3], 512, 512, 32
    $region9: #{purchase_classifier_forward.1} parent=1 // pred_fallthru
      _
    // Predicated region
    $region10: #{purchase_classifier_forward.1} parent=1 // pred_check
      _
    $region11: #{purchase_classifier_forward.1} parent=1 // pred_check_branch
      %41 = sbr.rel (0) target = $region13
    $region12: #{purchase_classifier_forward.1} parent=1 // pred_region
      %s43 = ssub.s32 128, 128
      %44 = vsyncadd [#allocation6], %s43
      %s46 = sshll.u32 [#allocation5], 4
      %s47 = int_to_ptr.vmem [resolvable:$true] %s46
      %49 = dma.hbm_to_vmem [thread:$0]  %s2, 128, %s47, [#allocation6]
    $region13: #{purchase_classifier_forward.1} parent=1 // pred_fallthru
      _
    // Predicated region
    $region14: #{purchase_classifier_forward.1} parent=1 // pred_check
      _
    $region15: #{purchase_classifier_forward.1} parent=1 // pred_check_branch
      %51 = sbr.rel (0) target = $region17
    $region16: #{purchase_classifier_forward.1} parent=1 // pred_region
      %s53 = ssub.s32 32768, 32768
      %54 = vsyncadd [#allocation6], %s53
      %s55 = sshll.u32 [#allocation7], 4
      %s56 = int_to_ptr.vmem [resolvable:$true] %s55
      %61 = dma.hbm_to_vmem [thread:$0]  %s3, 32768, %s56, [#allocation6], 256, 256, 16
    $region17: #{purchase_classifier_forward.1} parent=1 // pred_fallthru
      _
    // Predicated region
    $region18: #{purchase_classifier_forward.1} parent=1 // pred_check
      _
    $region19: #{purchase_classifier_forward.1} parent=1 // pred_check_branch
      %63 = sbr.rel (0) target = $region21
    $region20: #{purchase_classifier_forward.1} parent=1 // pred_region
      %s65 = ssub.s32 64, 64
      %66 = vsyncadd [#allocation9], %s65
      %s68 = sshll.u32 [#allocation8], 4
      %s69 = int_to_ptr.vmem [resolvable:$true] %s68
      %71 = dma.hbm_to_vmem [thread:$0]  %s4, 64, %s69, [#allocation9]
    $region21: #{purchase_classifier_forward.1} parent=1 // pred_fallthru
      _
    // Predicated region
    $region22: #{purchase_classifier_forward.1} parent=1 // pred_check
      _
    $region23: #{purchase_classifier_forward.1} parent=1 // pred_check_branch
      %73 = sbr.rel (0) target = $region25
    $region24: #{purchase_classifier_forward.1} parent=1 // pred_region
      %s75 = ssub.s32 8192, 8192
      %76 = vsyncadd [#allocation9], %s75
      %s77 = sshll.u32 [#allocation10], 4
      %s78 = int_to_ptr.vmem [resolvable:$true] %s77
      %83 = dma.hbm_to_vmem [thread:$0]  %s5, 8192, %s78, [#allocation9], 128, 128, 8
    $region25: #{purchase_classifier_forward.1} parent=1 // pred_fallthru
      _
    // Predicated region
    $region26: #{purchase_classifier_forward.1} parent=1 // pred_check
      _
    $region27: #{purchase_classifier_forward.1} parent=1 // pred_check_branch
      %85 = sbr.rel (0) target = $region29
    $region28: #{purchase_classifier_forward.1} parent=1 // pred_region
      %s87 = ssub.s32 32, 32
      %88 = vsyncadd [#allocation12], %s87
      %s90 = sshll.u32 [#allocation11], 4
      %s91 = int_to_ptr.vmem [resolvable:$true] %s90
      %93 = dma.hbm_to_vmem [thread:$0]  %s6, 32, %s91, [#allocation12]
    $region29: #{purchase_classifier_forward.1} parent=1 // pred_fallthru
      _
    // Predicated region
    $region30: #{purchase_classifier_forward.1} parent=1 // pred_check
      _
    $region31: #{purchase_classifier_forward.1} parent=1 // pred_check_branch
      %95 = sbr.rel (0) target = $region33
    $region32: #{purchase_classifier_forward.1} parent=1 // pred_region
      %s97 = ssub.s32 2048, 2048
      %98 = vsyncadd [#allocation12], %s97
      %s99 = sshll.u32 [#allocation13], 4
      %s100 = int_to_ptr.vmem [resolvable:$true] %s99
      %105 = dma.hbm_to_vmem [thread:$0]  %s7, 2048, %s100, [#allocation12], 64, 64, 4
    $region33: #{purchase_classifier_forward.1} parent=1 // pred_fallthru
      _
    // Predicated region
    $region34: #{purchase_classifier_forward.1} parent=1 // pred_check
      _
    $region35: #{purchase_classifier_forward.1} parent=1 // pred_check_branch
      %107 = sbr.rel (0) target = $region37
    $region36: #{purchase_classifier_forward.1} parent=1 // pred_region
      %s109 = ssub.s32 16, 16
      %110 = vsyncadd [#allocation15], %s109
      %s112 = sshll.u32 [#allocation14], 4
      %s113 = int_to_ptr.vmem [resolvable:$true] %s112
      %115 = dma.hbm_to_vmem [thread:$0]  %s8, 16, %s113, [#allocation15]
    $region37: #{purchase_classifier_forward.1} parent=1 // pred_fallthru
      _
    // Predicated region
    $region38: #{purchase_classifier_forward.1} parent=1 // pred_check
      _
    $region39: #{purchase_classifier_forward.1} parent=1 // pred_check_branch
      %117 = sbr.rel (0) target = $region41
    $region40: #{purchase_classifier_forward.1} parent=1 // pred_region
      %s119 = ssub.s32 1024, 1024
      %120 = vsyncadd [#allocation15], %s119
      %s121 = sshll.u32 [#allocation16], 4
      %s122 = int_to_ptr.vmem [resolvable:$true] %s121
      %127 = dma.hbm_to_vmem [thread:$0]  %s9, 1024, %s122, [#allocation15], 64, 64, 4
    $region41: #{purchase_classifier_forward.1} parent=1 // pred_fallthru
      _
    // Predicated region
    $region42: #{purchase_classifier_forward.1} parent=1 // pred_check
      _
    $region43: #{purchase_classifier_forward.1} parent=1 // pred_check_branch
      %129 = sbr.rel (0) target = $region45
    $region44: #{purchase_classifier_forward.1} parent=1 // pred_region
      %s131 = ssub.s32 16, 16
      %132 = vsyncadd [#allocation18], %s131
      %s134 = sshll.u32 [#allocation17], 4
      %s135 = int_to_ptr.vmem [resolvable:$true] %s134
      %137 = dma.hbm_to_vmem [thread:$0]  %s10, 16, %s135, [#allocation18]
    $region45: #{purchase_classifier_forward.1} parent=1 // pred_fallthru
      _
    // Predicated region
    $region46: #{purchase_classifier_forward.1} parent=1 // pred_check
      _
    $region47: #{purchase_classifier_forward.1} parent=1 // pred_check_branch
      %139 = sbr.rel (0) target = $region49
    $region48: #{purchase_classifier_forward.1} parent=1 // pred_region
      %140 = dma.done [#allocation3], 40960
    $region49: #{purchase_classifier_forward.1} parent=1 // pred_fallthru
      _
    // Predicated region
    $region50: #{purchase_classifier_forward.1} parent=1 // pred_check
      _
    $region51: #{purchase_classifier_forward.1} parent=1 // pred_check_branch
      %142 = sbr.rel (0) target = $region53
    $region52: #{purchase_classifier_forward.1} parent=1 // pred_region
      %143 = dma.done [#allocation6], 128
    $region53: #{purchase_classifier_forward.1} parent=1 // pred_fallthru
      _
    // Predicated region
    $region54: #{purchase_classifier_forward.1} parent=1 // pred_check
      _
    $region55: #{purchase_classifier_forward.1} parent=1 // pred_check_branch
      %145 = sbr.rel (0) target = $region57
    $region56: #{purchase_classifier_forward.1} parent=1 // pred_region
      %146 = dma.done [#allocation6], 32768
    $region57: #{purchase_classifier_forward.1} parent=1 // pred_fallthru
      _
    // Predicated region
    $region58: #{purchase_classifier_forward.1} parent=1 // pred_check
      _
    $region59: #{purchase_classifier_forward.1} parent=1 // pred_check_branch
      %148 = sbr.rel (0) target = $region61
    $region60: #{purchase_classifier_forward.1} parent=1 // pred_region
      %149 = dma.done [#allocation9], 64
    $region61: #{purchase_classifier_forward.1} parent=1 // pred_fallthru
      _
    // Predicated region
    $region62: #{purchase_classifier_forward.1} parent=1 // pred_check
      _
    $region63: #{purchase_classifier_forward.1} parent=1 // pred_check_branch
      %151 = sbr.rel (0) target = $region65
    $region64: #{purchase_classifier_forward.1} parent=1 // pred_region
      %152 = dma.done [#allocation9], 8192
    $region65: #{purchase_classifier_forward.1} parent=1 // pred_fallthru
      _
    // Predicated region
    $region66: #{purchase_classifier_forward.1} parent=1 // pred_check
      _
    $region67: #{purchase_classifier_forward.1} parent=1 // pred_check_branch
      %154 = sbr.rel (0) target = $region69
    $region68: #{purchase_classifier_forward.1} parent=1 // pred_region
      %155 = dma.done [#allocation12], 32
    $region69: #{purchase_classifier_forward.1} parent=1 // pred_fallthru
      _
    // Predicated region
    $region70: #{purchase_classifier_forward.1} parent=1 // pred_check
      _
    $region71: #{purchase_classifier_forward.1} parent=1 // pred_check_branch
      %157 = sbr.rel (0) target = $region73
    $region72: #{purchase_classifier_forward.1} parent=1 // pred_region
      %158 = dma.done [#allocation12], 2048
    $region73: #{purchase_classifier_forward.1} parent=1 // pred_fallthru
      _
    // Predicated region
    $region74: #{purchase_classifier_forward.1} parent=1 // pred_check
      _
    $region75: #{purchase_classifier_forward.1} parent=1 // pred_check_branch
      %160 = sbr.rel (0) target = $region77
    $region76: #{purchase_classifier_forward.1} parent=1 // pred_region
      %161 = dma.done [#allocation15], 16
    $region77: #{purchase_classifier_forward.1} parent=1 // pred_fallthru
      _
    // Predicated region
    $region78: #{purchase_classifier_forward.1} parent=1 // pred_check
      _
    $region79: #{purchase_classifier_forward.1} parent=1 // pred_check_branch
      %163 = sbr.rel (0) target = $region81
    $region80: #{purchase_classifier_forward.1} parent=1 // pred_region
      %164 = dma.done [#allocation15], 1024
    $region81: #{purchase_classifier_forward.1} parent=1 // pred_fallthru
      _
    // Predicated region
    $region82: #{purchase_classifier_forward.1} parent=1 // pred_check
      _
    $region83: #{purchase_classifier_forward.1} parent=1 // pred_check_branch
      %166 = sbr.rel (0) target = $region85
    $region84: #{purchase_classifier_forward.1} parent=1 // pred_region
      %167 = dma.done [#allocation18], 16
    $region85: #{purchase_classifier_forward.1} parent=1 // pred_fallthru
      _
    %v169 = vld [vmem:[%s0] sm:$0xff]
    %v170 = vld [vmem:[%s0 + $0x8] sm:$0xff]
    %v171 = vld [vmem:[%s0 + $0x10] sm:$0xf]
    %v172 = vld [vmem:[#allocation2] sm:$0xff]
    %v173 = vld [vmem:[#allocation2 + $0x8] sm:$0xff]
    %v174 = vld [vmem:[#allocation2 + $0x10] sm:$0xff]
    %v175 = vld [vmem:[#allocation2 + $0x18] sm:$0xff]
    %v176 = vld [vmem:[#allocation2 + $0x20] sm:$0xff]
    %v177 = vld [vmem:[#allocation2 + $0x28] sm:$0xff]
    %v178 = vld [vmem:[#allocation2 + $0x30] sm:$0xff]
    %v179 = vld [vmem:[#allocation2 + $0x38] sm:$0xff]
    %v180 = vld [vmem:[#allocation2 + $0x40] sm:$0xff]
    %v181 = vld [vmem:[#allocation2 + $0x48] sm:$0xff]
    %v182 = vld [vmem:[#allocation2 + $0x50] sm:$0xff]
    %v183 = vld [vmem:[#allocation2 + $0x58] sm:$0xff]
    %v184 = vld [vmem:[#allocation2 + $0x60] sm:$0xff]
    %v185 = vld [vmem:[#allocation2 + $0x68] sm:$0xff]
    %v186 = vld [vmem:[#allocation2 + $0x70] sm:$0xff]
    %v187 = vld [vmem:[#allocation2 + $0x78] sm:$0xff]
    %v188 = vld [vmem:[#allocation2 + $0x80] sm:$0xff]
    %v189 = vld [vmem:[#allocation2 + $0x88] sm:$0xff]
    %v190 = vld [vmem:[#allocation2 + $0x90] sm:$0xff]
    %v191 = vld [vmem:[#allocation2 + $0x98] sm:$0xff]
    %v192 = vld [vmem:[#allocation2 + $0xa0] sm:$0xff]
    %v193 = vld [vmem:[#allocation2 + $0xa8] sm:$0xff]
    %v194 = vld [vmem:[#allocation2 + $0xb0] sm:$0xff]
    %v195 = vld [vmem:[#allocation2 + $0xb8] sm:$0xff]
    %v196 = vld [vmem:[#allocation2 + $0xc0] sm:$0xff]
    %v197 = vld [vmem:[#allocation2 + $0xc8] sm:$0xff]
    %v198 = vld [vmem:[#allocation2 + $0xd0] sm:$0xff]
    %v199 = vld [vmem:[#allocation2 + $0xd8] sm:$0xff]
    %v200 = vld [vmem:[#allocation2 + $0xe0] sm:$0xff]
    %v201 = vld [vmem:[#allocation2 + $0xe8] sm:$0xff]
    %v202 = vld [vmem:[#allocation2 + $0xf0] sm:$0xff]
    %v203 = vld [vmem:[#allocation2 + $0xf8] sm:$0xff]
    %v204 = vld [vmem:[#allocation2 + $0x100] sm:$0xff]
    %v205 = vld [vmem:[#allocation2 + $0x108] sm:$0xff]
    %v206 = vld [vmem:[#allocation2 + $0x110] sm:$0xff]
    %v207 = vld [vmem:[#allocation2 + $0x118] sm:$0xff]
    %v208 = vld [vmem:[#allocation2 + $0x120] sm:$0xff]
    %v209 = vld [vmem:[#allocation2 + $0x128] sm:$0xff]
    %v210 = vld [vmem:[#allocation2 + $0x130] sm:$0xff]
    %v211 = vld [vmem:[#allocation2 + $0x138] sm:$0xff]
    %v212 = vld [vmem:[#allocation2 + $0x140] sm:$0xff]
    %v213 = vld [vmem:[#allocation2 + $0x148] sm:$0xff]
    %v214 = vld [vmem:[#allocation2 + $0x150] sm:$0xff]
    %v215 = vld [vmem:[#allocation2 + $0x158] sm:$0xff]
    %v216 = vld [vmem:[#allocation2 + $0x160] sm:$0xff]
    %v217 = vld [vmem:[#allocation2 + $0x168] sm:$0xff]
    %v218 = vld [vmem:[#allocation2 + $0x170] sm:$0xff]
    %v219 = vld [vmem:[#allocation2 + $0x178] sm:$0xff]
    %v220 = vld [vmem:[#allocation2 + $0x180] sm:$0xff]
    %v221 = vld [vmem:[#allocation2 + $0x188] sm:$0xff]
    %v222 = vld [vmem:[#allocation2 + $0x190] sm:$0xff]
    %v223 = vld [vmem:[#allocation2 + $0x198] sm:$0xff]
    %v224 = vld [vmem:[#allocation2 + $0x1a0] sm:$0xff]
    %v225 = vld [vmem:[#allocation2 + $0x1a8] sm:$0xff]
    %v226 = vld [vmem:[#allocation2 + $0x1b0] sm:$0xff]
    %v227 = vld [vmem:[#allocation2 + $0x1b8] sm:$0xff]
    %v228 = vld [vmem:[#allocation2 + $0x1c0] sm:$0xff]
    %v229 = vld [vmem:[#allocation2 + $0x1c8] sm:$0xff]
    %v230 = vld [vmem:[#allocation2 + $0x1d0] sm:$0xff]
    %v231 = vld [vmem:[#allocation2 + $0x1d8] sm:$0xff]
    %v232 = vld [vmem:[#allocation2 + $0x1e0] sm:$0xff]
    %v233 = vld [vmem:[#allocation2 + $0x1e8] sm:$0xff]
    %v234 = vld [vmem:[#allocation2 + $0x1f0] sm:$0xff]
    %v235 = vld [vmem:[#allocation2 + $0x1f8] sm:$0xff]
    %v236 = vld [vmem:[#allocation2 + $0x200] sm:$0xff]
    %v237 = vld [vmem:[#allocation2 + $0x208] sm:$0xff]
    %v238 = vld [vmem:[#allocation2 + $0x210] sm:$0xff]
    %v239 = vld [vmem:[#allocation2 + $0x218] sm:$0xff]
    %v240 = vld [vmem:[#allocation2 + $0x220] sm:$0xff]
    %v241 = vld [vmem:[#allocation2 + $0x228] sm:$0xff]
    %v242 = vld [vmem:[#allocation2 + $0x230] sm:$0xff]
    %v243 = vld [vmem:[#allocation2 + $0x238] sm:$0xff]
    %v244 = vld [vmem:[#allocation2 + $0x240] sm:$0xff]
    %v245 = vld [vmem:[#allocation2 + $0x248] sm:$0xff]
    %v246 = vld [vmem:[#allocation2 + $0x250] sm:$0xff]
    %v247 = vld [vmem:[#allocation2 + $0x258] sm:$0xff]
    %v248 = vld [vmem:[#allocation2 + $0x260] sm:$0xff]
    %v249 = vld [vmem:[#allocation2 + $0x268] sm:$0xff]
    %v250 = vld [vmem:[#allocation2 + $0x270] sm:$0xff]
    %v251 = vld [vmem:[#allocation2 + $0x278] sm:$0xff]
    %v252 = vld [vmem:[#allocation2 + $0x280] sm:$0xff]
    %v253 = vld [vmem:[#allocation2 + $0x288] sm:$0xff]
    %v254 = vld [vmem:[#allocation2 + $0x290] sm:$0xff]
    %v255 = vld [vmem:[#allocation2 + $0x298] sm:$0xff]
    %v256 = vld [vmem:[#allocation2 + $0x2a0] sm:$0xff]
    %v257 = vld [vmem:[#allocation2 + $0x2a8] sm:$0xff]
    %v258 = vld [vmem:[#allocation2 + $0x2b0] sm:$0xff]
    %v259 = vld [vmem:[#allocation2 + $0x2b8] sm:$0xff]
    %v260 = vld [vmem:[#allocation2 + $0x2c0] sm:$0xff]
    %v261 = vld [vmem:[#allocation2 + $0x2c8] sm:$0xff]
    %v262 = vld [vmem:[#allocation2 + $0x2d0] sm:$0xff]
    %v263 = vld [vmem:[#allocation2 + $0x2d8] sm:$0xff]
    %v264 = vld [vmem:[#allocation2 + $0x2e0] sm:$0xff]
    %v265 = vld [vmem:[#allocation2 + $0x2e8] sm:$0xff]
    %v266 = vld [vmem:[#allocation2 + $0x2f0] sm:$0xff]
    %v267 = vld [vmem:[#allocation2 + $0x2f8] sm:$0xff]
    %v268 = vld [vmem:[#allocation2 + $0x300] sm:$0xff]
    %v269 = vld [vmem:[#allocation2 + $0x308] sm:$0xff]
    %v270 = vld [vmem:[#allocation2 + $0x310] sm:$0xff]
    %v271 = vld [vmem:[#allocation2 + $0x318] sm:$0xff]
    %v272 = vld [vmem:[#allocation2 + $0x320] sm:$0xff]
    %v273 = vld [vmem:[#allocation2 + $0x328] sm:$0xff]
    %v274 = vld [vmem:[#allocation2 + $0x330] sm:$0xff]
    %v275 = vld [vmem:[#allocation2 + $0x338] sm:$0xff]
    %v276 = vld [vmem:[#allocation2 + $0x340] sm:$0xff]
    %v277 = vld [vmem:[#allocation2 + $0x348] sm:$0xff]
    %v278 = vld [vmem:[#allocation2 + $0x350] sm:$0xff]
    %v279 = vld [vmem:[#allocation2 + $0x358] sm:$0xff]
    %v280 = vld [vmem:[#allocation2 + $0x360] sm:$0xff]
    %v281 = vld [vmem:[#allocation2 + $0x368] sm:$0xff]
    %v282 = vld [vmem:[#allocation2 + $0x370] sm:$0xff]
    %v283 = vld [vmem:[#allocation2 + $0x378] sm:$0xff]
    %v284 = vld [vmem:[#allocation2 + $0x380] sm:$0xff]
    %v285 = vld [vmem:[#allocation2 + $0x388] sm:$0xff]
    %v286 = vld [vmem:[#allocation2 + $0x390] sm:$0xff]
    %v287 = vld [vmem:[#allocation2 + $0x398] sm:$0xff]
    %v288 = vld [vmem:[#allocation2 + $0x3a0] sm:$0xff]
    %v289 = vld [vmem:[#allocation2 + $0x3a8] sm:$0xff]
    %v290 = vld [vmem:[#allocation2 + $0x3b0] sm:$0xff]
    %v291 = vld [vmem:[#allocation2 + $0x3b8] sm:$0xff]
    %v292 = vld [vmem:[#allocation2 + $0x3c0] sm:$0xff]
    %v293 = vld [vmem:[#allocation2 + $0x3c8] sm:$0xff]
    %v294 = vld [vmem:[#allocation2 + $0x3d0] sm:$0xff]
    %v295 = vld [vmem:[#allocation2 + $0x3d8] sm:$0xff]
    %v296 = vld [vmem:[#allocation2 + $0x3e0] sm:$0xff]
    %v297 = vld [vmem:[#allocation2 + $0x3e8] sm:$0xff]
    %v298 = vld [vmem:[#allocation2 + $0x3f0] sm:$0xff]
    %v299 = vld [vmem:[#allocation2 + $0x3f8] sm:$0xff]
    %v300 = vld [vmem:[#allocation2 + $0x400] sm:$0xff]
    %v301 = vld [vmem:[#allocation2 + $0x408] sm:$0xff]
    %v302 = vld [vmem:[#allocation2 + $0x410] sm:$0xff]
    %v303 = vld [vmem:[#allocation2 + $0x418] sm:$0xff]
    %v304 = vld [vmem:[#allocation2 + $0x420] sm:$0xff]
    %v305 = vld [vmem:[#allocation2 + $0x428] sm:$0xff]
    %v306 = vld [vmem:[#allocation2 + $0x430] sm:$0xff]
    %v307 = vld [vmem:[#allocation2 + $0x438] sm:$0xff]
    %v308 = vld [vmem:[#allocation2 + $0x440] sm:$0xff]
    %v309 = vld [vmem:[#allocation2 + $0x448] sm:$0xff]
    %v310 = vld [vmem:[#allocation2 + $0x450] sm:$0xff]
    %v311 = vld [vmem:[#allocation2 + $0x458] sm:$0xff]
    %v312 = vld [vmem:[#allocation2 + $0x460] sm:$0xff]
    %v313 = vld [vmem:[#allocation2 + $0x468] sm:$0xff]
    %v314 = vld [vmem:[#allocation2 + $0x470] sm:$0xff]
    %v315 = vld [vmem:[#allocation2 + $0x478] sm:$0xff]
    %v316 = vld [vmem:[#allocation2 + $0x480] sm:$0xff]
    %v317 = vld [vmem:[#allocation2 + $0x488] sm:$0xff]
    %v318 = vld [vmem:[#allocation2 + $0x490] sm:$0xff]
    %v319 = vld [vmem:[#allocation2 + $0x498] sm:$0xff]
    %v320 = vld [vmem:[#allocation2 + $0x4a0] sm:$0xff]
    %v321 = vld [vmem:[#allocation2 + $0x4a8] sm:$0xff]
    %v322 = vld [vmem:[#allocation2 + $0x4b0] sm:$0xff]
    %v323 = vld [vmem:[#allocation2 + $0x4b8] sm:$0xff]
    %v324 = vld [vmem:[#allocation2 + $0x4c0] sm:$0xff]
    %v325 = vld [vmem:[#allocation2 + $0x4c8] sm:$0xff]
    %v326 = vld [vmem:[#allocation2 + $0x4d0] sm:$0xff]
    %v327 = vld [vmem:[#allocation2 + $0x4d8] sm:$0xff]
    %v328 = vld [vmem:[#allocation2 + $0x4e0] sm:$0xff]
    %v329 = vld [vmem:[#allocation2 + $0x4e8] sm:$0xff]
    %v330 = vld [vmem:[#allocation2 + $0x4f0] sm:$0xff]
    %v331 = vld [vmem:[#allocation2 + $0x4f8] sm:$0xff]
    %v332 = vld [vmem:[#allocation2 + $0x500] sm:$0xff]
    %v333 = vld [vmem:[#allocation2 + $0x508] sm:$0xff]
    %v334 = vld [vmem:[#allocation2 + $0x510] sm:$0xff]
    %v335 = vld [vmem:[#allocation2 + $0x518] sm:$0xff]
    %v336 = vld [vmem:[#allocation2 + $0x520] sm:$0xff]
    %v337 = vld [vmem:[#allocation2 + $0x528] sm:$0xff]
    %v338 = vld [vmem:[#allocation2 + $0x530] sm:$0xff]
    %v339 = vld [vmem:[#allocation2 + $0x538] sm:$0xff]
    %v340 = vld [vmem:[#allocation2 + $0x540] sm:$0xff]
    %v341 = vld [vmem:[#allocation2 + $0x548] sm:$0xff]
    %v342 = vld [vmem:[#allocation2 + $0x550] sm:$0xff]
    %v343 = vld [vmem:[#allocation2 + $0x558] sm:$0xff]
    %v344 = vld [vmem:[#allocation2 + $0x560] sm:$0xff]
    %v345 = vld [vmem:[#allocation2 + $0x568] sm:$0xff]
    %v346 = vld [vmem:[#allocation2 + $0x570] sm:$0xff]
    %v347 = vld [vmem:[#allocation2 + $0x578] sm:$0xff]
    %v348 = vld [vmem:[#allocation2 + $0x580] sm:$0xff]
    %v349 = vld [vmem:[#allocation2 + $0x588] sm:$0xff]
    %v350 = vld [vmem:[#allocation2 + $0x590] sm:$0xff]
    %v351 = vld [vmem:[#allocation2 + $0x598] sm:$0xff]
    %v352 = vld [vmem:[#allocation2 + $0x5a0] sm:$0xff]
    %v353 = vld [vmem:[#allocation2 + $0x5a8] sm:$0xff]
    %v354 = vld [vmem:[#allocation2 + $0x5b0] sm:$0xff]
    %v355 = vld [vmem:[#allocation2 + $0x5b8] sm:$0xff]
    %v356 = vld [vmem:[#allocation2 + $0x5c0] sm:$0xff]
    %v357 = vld [vmem:[#allocation2 + $0x5c8] sm:$0xff]
    %v358 = vld [vmem:[#allocation2 + $0x5d0] sm:$0xff]
    %v359 = vld [vmem:[#allocation2 + $0x5d8] sm:$0xff]
    %v360 = vld [vmem:[#allocation2 + $0x5e0] sm:$0xff]
    %v361 = vld [vmem:[#allocation2 + $0x5e8] sm:$0xff]
    %v362 = vld [vmem:[#allocation2 + $0x5f0] sm:$0xff]
    %v363 = vld [vmem:[#allocation2 + $0x5f8] sm:$0xff]
    %v364 = vld [vmem:[#allocation2 + $0x600] sm:$0xff]
    %v365 = vld [vmem:[#allocation2 + $0x608] sm:$0xff]
    %v366 = vld [vmem:[#allocation2 + $0x610] sm:$0xff]
    %v367 = vld [vmem:[#allocation2 + $0x618] sm:$0xff]
    %v368 = vld [vmem:[#allocation2 + $0x620] sm:$0xff]
    %v369 = vld [vmem:[#allocation2 + $0x628] sm:$0xff]
    %v370 = vld [vmem:[#allocation2 + $0x630] sm:$0xff]
    %v371 = vld [vmem:[#allocation2 + $0x638] sm:$0xff]
    %v372 = vld [vmem:[#allocation2 + $0x640] sm:$0xff]
    %v373 = vld [vmem:[#allocation2 + $0x648] sm:$0xff]
    %v374 = vld [vmem:[#allocation2 + $0x650] sm:$0xff]
    %v375 = vld [vmem:[#allocation2 + $0x658] sm:$0xff]
    %v376 = vld [vmem:[#allocation2 + $0x660] sm:$0xff]
    %v377 = vld [vmem:[#allocation2 + $0x668] sm:$0xff]
    %v378 = vld [vmem:[#allocation2 + $0x670] sm:$0xff]
    %v379 = vld [vmem:[#allocation2 + $0x678] sm:$0xff]
    %v380 = vld [vmem:[#allocation2 + $0x680] sm:$0xff]
    %v381 = vld [vmem:[#allocation2 + $0x688] sm:$0xff]
    %v382 = vld [vmem:[#allocation2 + $0x690] sm:$0xff]
    %v383 = vld [vmem:[#allocation2 + $0x698] sm:$0xff]
    %v384 = vld [vmem:[#allocation2 + $0x6a0] sm:$0xff]
    %v385 = vld [vmem:[#allocation2 + $0x6a8] sm:$0xff]
    %v386 = vld [vmem:[#allocation2 + $0x6b0] sm:$0xff]
    %v387 = vld [vmem:[#allocation2 + $0x6b8] sm:$0xff]
    %v388 = vld [vmem:[#allocation2 + $0x6c0] sm:$0xff]
    %v389 = vld [vmem:[#allocation2 + $0x6c8] sm:$0xff]
    %v390 = vld [vmem:[#allocation2 + $0x6d0] sm:$0xff]
    %v391 = vld [vmem:[#allocation2 + $0x6d8] sm:$0xff]
    %v392 = vld [vmem:[#allocation2 + $0x6e0] sm:$0xff]
    %v393 = vld [vmem:[#allocation2 + $0x6e8] sm:$0xff]
    %v394 = vld [vmem:[#allocation2 + $0x6f0] sm:$0xff]
    %v395 = vld [vmem:[#allocation2 + $0x6f8] sm:$0xff]
    %v396 = vld [vmem:[#allocation2 + $0x700] sm:$0xff]
    %v397 = vld [vmem:[#allocation2 + $0x708] sm:$0xff]
    %v398 = vld [vmem:[#allocation2 + $0x710] sm:$0xff]
    %v399 = vld [vmem:[#allocation2 + $0x718] sm:$0xff]
    %v400 = vld [vmem:[#allocation2 + $0x720] sm:$0xff]
    %v401 = vld [vmem:[#allocation2 + $0x728] sm:$0xff]
    %v402 = vld [vmem:[#allocation2 + $0x730] sm:$0xff]
    %v403 = vld [vmem:[#allocation2 + $0x738] sm:$0xff]
    %v404 = vld [vmem:[#allocation2 + $0x740] sm:$0xff]
    %v405 = vld [vmem:[#allocation2 + $0x748] sm:$0xff]
    %v406 = vld [vmem:[#allocation2 + $0x750] sm:$0xff]
    %v407 = vld [vmem:[#allocation2 + $0x758] sm:$0xff]
    %v408 = vld [vmem:[#allocation2 + $0x760] sm:$0xff]
    %v409 = vld [vmem:[#allocation2 + $0x768] sm:$0xff]
    %v410 = vld [vmem:[#allocation2 + $0x770] sm:$0xff]
    %v411 = vld [vmem:[#allocation2 + $0x778] sm:$0xff]
    %v412 = vld [vmem:[#allocation2 + $0x780] sm:$0xff]
    %v413 = vld [vmem:[#allocation2 + $0x788] sm:$0xff]
    %v414 = vld [vmem:[#allocation2 + $0x790] sm:$0xff]
    %v415 = vld [vmem:[#allocation2 + $0x798] sm:$0xff]
    %v416 = vld [vmem:[#allocation2 + $0x7a0] sm:$0xff]
    %v417 = vld [vmem:[#allocation2 + $0x7a8] sm:$0xff]
    %v418 = vld [vmem:[#allocation2 + $0x7b0] sm:$0xff]
    %v419 = vld [vmem:[#allocation2 + $0x7b8] sm:$0xff]
    %v420 = vld [vmem:[#allocation2 + $0x7c0] sm:$0xff]
    %v421 = vld [vmem:[#allocation2 + $0x7c8] sm:$0xff]
    %v422 = vld [vmem:[#allocation2 + $0x7d0] sm:$0xff]
    %v423 = vld [vmem:[#allocation2 + $0x7d8] sm:$0xff]
    %v424 = vld [vmem:[#allocation2 + $0x7e0] sm:$0xff]
    %v425 = vld [vmem:[#allocation2 + $0x7e8] sm:$0xff]
    %v426 = vld [vmem:[#allocation2 + $0x7f0] sm:$0xff]
    %v427 = vld [vmem:[#allocation2 + $0x7f8] sm:$0xff]
    %v428 = vld [vmem:[#allocation2 + $0x800] sm:$0xff]
    %v429 = vld [vmem:[#allocation2 + $0x808] sm:$0xff]
    %v430 = vld [vmem:[#allocation2 + $0x810] sm:$0xff]
    %v431 = vld [vmem:[#allocation2 + $0x818] sm:$0xff]
    %v432 = vld [vmem:[#allocation2 + $0x820] sm:$0xff]
    %v433 = vld [vmem:[#allocation2 + $0x828] sm:$0xff]
    %v434 = vld [vmem:[#allocation2 + $0x830] sm:$0xff]
    %v435 = vld [vmem:[#allocation2 + $0x838] sm:$0xff]
    %v436 = vld [vmem:[#allocation2 + $0x840] sm:$0xff]
    %v437 = vld [vmem:[#allocation2 + $0x848] sm:$0xff]
    %v438 = vld [vmem:[#allocation2 + $0x850] sm:$0xff]
    %v439 = vld [vmem:[#allocation2 + $0x858] sm:$0xff]
    %v440 = vld [vmem:[#allocation2 + $0x860] sm:$0xff]
    %v441 = vld [vmem:[#allocation2 + $0x868] sm:$0xff]
    %v442 = vld [vmem:[#allocation2 + $0x870] sm:$0xff]
    %v443 = vld [vmem:[#allocation2 + $0x878] sm:$0xff]
    %v444 = vld [vmem:[#allocation2 + $0x880] sm:$0xff]
    %v445 = vld [vmem:[#allocation2 + $0x888] sm:$0xff]
    %v446 = vld [vmem:[#allocation2 + $0x890] sm:$0xff]
    %v447 = vld [vmem:[#allocation2 + $0x898] sm:$0xff]
    %v448 = vld [vmem:[#allocation2 + $0x8a0] sm:$0xff]
    %v449 = vld [vmem:[#allocation2 + $0x8a8] sm:$0xff]
    %v450 = vld [vmem:[#allocation2 + $0x8b0] sm:$0xff]
    %v451 = vld [vmem:[#allocation2 + $0x8b8] sm:$0xff]
    %v452 = vld [vmem:[#allocation2 + $0x8c0] sm:$0xff]
    %v453 = vld [vmem:[#allocation2 + $0x8c8] sm:$0xff]
    %v454 = vld [vmem:[#allocation2 + $0x8d0] sm:$0xff]
    %v455 = vld [vmem:[#allocation2 + $0x8d8] sm:$0xff]
    %v456 = vld [vmem:[#allocation2 + $0x8e0] sm:$0xff]
    %v457 = vld [vmem:[#allocation2 + $0x8e8] sm:$0xff]
    %v458 = vld [vmem:[#allocation2 + $0x8f0] sm:$0xff]
    %v459 = vld [vmem:[#allocation2 + $0x8f8] sm:$0xff]
    %v460 = vld [vmem:[#allocation2 + $0x900] sm:$0xff]
    %v461 = vld [vmem:[#allocation2 + $0x908] sm:$0xff]
    %v462 = vld [vmem:[#allocation2 + $0x910] sm:$0xff]
    %v463 = vld [vmem:[#allocation2 + $0x918] sm:$0xff]
    %v464 = vld [vmem:[#allocation2 + $0x920] sm:$0xff]
    %v465 = vld [vmem:[#allocation2 + $0x928] sm:$0xff]
    %v466 = vld [vmem:[#allocation2 + $0x930] sm:$0xff]
    %v467 = vld [vmem:[#allocation2 + $0x938] sm:$0xff]
    %v468 = vld [vmem:[#allocation2 + $0x940] sm:$0xff]
    %v469 = vld [vmem:[#allocation2 + $0x948] sm:$0xff]
    %v470 = vld [vmem:[#allocation2 + $0x950] sm:$0xff]
    %v471 = vld [vmem:[#allocation2 + $0x958] sm:$0xff]
    %v472 = vld [vmem:[#allocation2 + $0x960] sm:$0xff]
    %v473 = vld [vmem:[#allocation2 + $0x968] sm:$0xff]
    %v474 = vld [vmem:[#allocation2 + $0x970] sm:$0xff]
    %v475 = vld [vmem:[#allocation2 + $0x978] sm:$0xff]
    %v476 = vld [vmem:[#allocation2 + $0x980] sm:$0xff]
    %v477 = vld [vmem:[#allocation2 + $0x988] sm:$0xff]
    %v478 = vld [vmem:[#allocation2 + $0x990] sm:$0xff]
    %v479 = vld [vmem:[#allocation2 + $0x998] sm:$0xff]
    %v480 = vld [vmem:[#allocation2 + $0x9a0] sm:$0xff]
    %v481 = vld [vmem:[#allocation2 + $0x9a8] sm:$0xff]
    %v482 = vld [vmem:[#allocation2 + $0x9b0] sm:$0xff]
    %v483 = vld [vmem:[#allocation2 + $0x9b8] sm:$0xff]
    %v484 = vld [vmem:[#allocation2 + $0x9c0] sm:$0xff]
    %v485 = vld [vmem:[#allocation2 + $0x9c8] sm:$0xff]
    %v486 = vld [vmem:[#allocation2 + $0x9d0] sm:$0xff]
    %v487 = vld [vmem:[#allocation2 + $0x9d8] sm:$0xff]
    %v488 = vld [vmem:[#allocation2 + $0x9e0] sm:$0xff]
    %v489 = vld [vmem:[#allocation2 + $0x9e8] sm:$0xff]
    %v490 = vld [vmem:[#allocation2 + $0x9f0] sm:$0xff]
    %v491 = vld [vmem:[#allocation2 + $0x9f8] sm:$0xff]
    %v492 = vld [vmem:[#allocation5] sm:$0xff]
    %v494 = vlaneseq
    %v495 = vshrl.u32 %v494, 7
    %v496 = vsub.s32 0, %v495
    %v497 = vrot.slane %v492, %v496
    %v498 = vlaneseq
    %v499 = vshrl.u32 %v498, 7
    %v500 = vsub.s32 1, %v499
    %v501 = vrot.slane %v492, %v500
    %v502 = vlaneseq
    %v503 = vshrl.u32 %v502, 7
    %v504 = vsub.s32 2, %v503
    %v505 = vrot.slane %v492, %v504
    %v506 = vlaneseq
    %v507 = vshrl.u32 %v506, 7
    %v508 = vsub.s32 3, %v507
    %v509 = vrot.slane %v492, %v508
    %v510 = vlaneseq
    %v511 = vshrl.u32 %v510, 7
    %v512 = vsub.s32 4, %v511
    %v513 = vrot.slane %v492, %v512
    %v514 = vlaneseq
    %v515 = vshrl.u32 %v514, 7
    %v516 = vsub.s32 5, %v515
    %v517 = vrot.slane %v492, %v516
    %v518 = vlaneseq
    %v519 = vshrl.u32 %v518, 7
    %v520 = vsub.s32 6, %v519
    %v521 = vrot.slane %v492, %v520
    %v522 = vlaneseq
    %v523 = vshrl.u32 %v522, 7
    %v524 = vsub.s32 7, %v523
    %v525 = vrot.slane %v492, %v524
    %v537 = vunpack.c.l.b16 %v169
    %v538 = vunpack.c.h.b16 %v169
    %v539 = vunpack.c.l.b16 %v170
    %v540 = vunpack.c.h.b16 %v170
    %v541 = vunpack.c.l.b16 %v171
    %v542 = vpack.c.b16 %v537, %v537
    %v543 = vpack.c.b16 %v538, %v538
    %v544 = vpack.c.b16 %v539, %v539
    %v545 = vpack.c.b16 %v540, %v540
    %v546 = vpack.c.b16 %v541, %v541
    %v872 = vunpack.c.l.b16 %v172
    %v873 = vunpack.c.h.b16 %v172
    %v874 = vunpack.c.l.b16 %v173
    %v875 = vunpack.c.h.b16 %v173
    %v876 = vunpack.c.l.b16 %v174
    %v877 = vunpack.c.h.b16 %v174
    %v878 = vunpack.c.l.b16 %v175
    %v879 = vunpack.c.h.b16 %v175
    %v880 = vunpack.c.l.b16 %v176
    %v881 = vunpack.c.h.b16 %v176
    %v882 = vunpack.c.l.b16 %v177
    %v883 = vunpack.c.h.b16 %v177
    %v884 = vunpack.c.l.b16 %v178
    %v885 = vunpack.c.h.b16 %v178
    %v886 = vunpack.c.l.b16 %v179
    %v887 = vunpack.c.h.b16 %v179
    %v888 = vunpack.c.l.b16 %v180
    %v889 = vunpack.c.h.b16 %v180
    %v890 = vunpack.c.l.b16 %v181
    %v891 = vunpack.c.h.b16 %v181
    %v892 = vunpack.c.l.b16 %v182
    %v893 = vunpack.c.h.b16 %v182
    %v894 = vunpack.c.l.b16 %v183
    %v895 = vunpack.c.h.b16 %v183
    %v896 = vunpack.c.l.b16 %v184
    %v897 = vunpack.c.h.b16 %v184
    %v898 = vunpack.c.l.b16 %v185
    %v899 = vunpack.c.h.b16 %v185
    %v900 = vunpack.c.l.b16 %v186
    %v901 = vunpack.c.h.b16 %v186
    %v902 = vunpack.c.l.b16 %v187
    %v903 = vunpack.c.h.b16 %v187
    %v904 = vunpack.c.l.b16 %v188
    %v905 = vunpack.c.h.b16 %v188
    %v906 = vunpack.c.l.b16 %v189
    %v907 = vunpack.c.h.b16 %v189
    %v908 = vunpack.c.l.b16 %v190
    %v909 = vunpack.c.h.b16 %v190
    %v910 = vunpack.c.l.b16 %v191
    %v911 = vunpack.c.h.b16 %v191
    %v912 = vunpack.c.l.b16 %v192
    %v913 = vunpack.c.h.b16 %v192
    %v914 = vunpack.c.l.b16 %v193
    %v915 = vunpack.c.h.b16 %v193
    %v916 = vunpack.c.l.b16 %v194
    %v917 = vunpack.c.h.b16 %v194
    %v918 = vunpack.c.l.b16 %v195
    %v919 = vunpack.c.h.b16 %v195
    %v920 = vunpack.c.l.b16 %v196
    %v921 = vunpack.c.h.b16 %v196
    %v922 = vunpack.c.l.b16 %v197
    %v923 = vunpack.c.h.b16 %v197
    %v924 = vunpack.c.l.b16 %v198
    %v925 = vunpack.c.h.b16 %v198
    %v926 = vunpack.c.l.b16 %v199
    %v927 = vunpack.c.h.b16 %v199
    %v928 = vunpack.c.l.b16 %v200
    %v929 = vunpack.c.h.b16 %v200
    %v930 = vunpack.c.l.b16 %v201
    %v931 = vunpack.c.h.b16 %v201
    %v932 = vunpack.c.l.b16 %v202
    %v933 = vunpack.c.h.b16 %v202
    %v934 = vunpack.c.l.b16 %v203
    %v935 = vunpack.c.h.b16 %v203
    %v936 = vunpack.c.l.b16 %v204
    %v937 = vunpack.c.h.b16 %v204
    %v938 = vunpack.c.l.b16 %v205
    %v939 = vunpack.c.h.b16 %v205
    %v940 = vunpack.c.l.b16 %v206
    %v941 = vunpack.c.h.b16 %v206
    %v942 = vunpack.c.l.b16 %v207
    %v943 = vunpack.c.h.b16 %v207
    %v944 = vunpack.c.l.b16 %v208
    %v945 = vunpack.c.h.b16 %v208
    %v946 = vunpack.c.l.b16 %v209
    %v947 = vunpack.c.h.b16 %v209
    %v948 = vunpack.c.l.b16 %v210
    %v949 = vunpack.c.h.b16 %v210
    %v950 = vunpack.c.l.b16 %v211
    %v951 = vunpack.c.h.b16 %v211
    %v952 = vunpack.c.l.b16 %v212
    %v953 = vunpack.c.h.b16 %v212
    %v954 = vunpack.c.l.b16 %v213
    %v955 = vunpack.c.h.b16 %v213
    %v956 = vunpack.c.l.b16 %v214
    %v957 = vunpack.c.h.b16 %v214
    %v958 = vunpack.c.l.b16 %v215
    %v959 = vunpack.c.h.b16 %v215
    %v960 = vunpack.c.l.b16 %v216
    %v961 = vunpack.c.h.b16 %v216
    %v962 = vunpack.c.l.b16 %v217
    %v963 = vunpack.c.h.b16 %v217
    %v964 = vunpack.c.l.b16 %v218
    %v965 = vunpack.c.h.b16 %v218
    %v966 = vunpack.c.l.b16 %v219
    %v967 = vunpack.c.h.b16 %v219
    %v968 = vunpack.c.l.b16 %v220
    %v969 = vunpack.c.h.b16 %v220
    %v970 = vunpack.c.l.b16 %v221
    %v971 = vunpack.c.h.b16 %v221
    %v972 = vunpack.c.l.b16 %v222
    %v973 = vunpack.c.h.b16 %v222
    %v974 = vunpack.c.l.b16 %v223
    %v975 = vunpack.c.h.b16 %v223
    %v976 = vunpack.c.l.b16 %v224
    %v977 = vunpack.c.h.b16 %v224
    %v978 = vunpack.c.l.b16 %v225
    %v979 = vunpack.c.h.b16 %v225
    %v980 = vunpack.c.l.b16 %v226
    %v981 = vunpack.c.h.b16 %v226
    %v982 = vunpack.c.l.b16 %v227
    %v983 = vunpack.c.h.b16 %v227
    %v984 = vunpack.c.l.b16 %v228
    %v985 = vunpack.c.h.b16 %v228
    %v986 = vunpack.c.l.b16 %v229
    %v987 = vunpack.c.h.b16 %v229
    %v988 = vunpack.c.l.b16 %v230
    %v989 = vunpack.c.h.b16 %v230
    %v990 = vunpack.c.l.b16 %v231
    %v991 = vunpack.c.h.b16 %v231
    %v992 = vunpack.c.l.b16 %v232
    %v993 = vunpack.c.h.b16 %v232
    %v994 = vunpack.c.l.b16 %v233
    %v995 = vunpack.c.h.b16 %v233
    %v996 = vunpack.c.l.b16 %v234
    %v997 = vunpack.c.h.b16 %v234
    %v998 = vunpack.c.l.b16 %v235
    %v999 = vunpack.c.h.b16 %v235
    %v1000 = vunpack.c.l.b16 %v236
    %v1001 = vunpack.c.h.b16 %v236
    %v1002 = vunpack.c.l.b16 %v237
    %v1003 = vunpack.c.h.b16 %v237
    %v1004 = vunpack.c.l.b16 %v238
    %v1005 = vunpack.c.h.b16 %v238
    %v1006 = vunpack.c.l.b16 %v239
    %v1007 = vunpack.c.h.b16 %v239
    %v1008 = vunpack.c.l.b16 %v240
    %v1009 = vunpack.c.h.b16 %v240
    %v1010 = vunpack.c.l.b16 %v241
    %v1011 = vunpack.c.h.b16 %v241
    %v1012 = vunpack.c.l.b16 %v242
    %v1013 = vunpack.c.h.b16 %v242
    %v1014 = vunpack.c.l.b16 %v243
    %v1015 = vunpack.c.h.b16 %v243
    %v1016 = vunpack.c.l.b16 %v244
    %v1017 = vunpack.c.h.b16 %v244
    %v1018 = vunpack.c.l.b16 %v245
    %v1019 = vunpack.c.h.b16 %v245
    %v1020 = vunpack.c.l.b16 %v246
    %v1021 = vunpack.c.h.b16 %v246
    %v1022 = vunpack.c.l.b16 %v247
    %v1023 = vunpack.c.h.b16 %v247
    %v1024 = vunpack.c.l.b16 %v248
    %v1025 = vunpack.c.h.b16 %v248
    %v1026 = vunpack.c.l.b16 %v249
    %v1027 = vunpack.c.h.b16 %v249
    %v1028 = vunpack.c.l.b16 %v250
    %v1029 = vunpack.c.h.b16 %v250
    %v1030 = vunpack.c.l.b16 %v251
    %v1031 = vunpack.c.h.b16 %v251
    %v1032 = vunpack.c.l.b16 %v252
    %v1033 = vunpack.c.h.b16 %v252
    %v1034 = vunpack.c.l.b16 %v253
    %v1035 = vunpack.c.h.b16 %v253
    %v1036 = vunpack.c.l.b16 %v254
    %v1037 = vunpack.c.h.b16 %v254
    %v1038 = vunpack.c.l.b16 %v255
    %v1039 = vunpack.c.h.b16 %v255
    %v1040 = vunpack.c.l.b16 %v256
    %v1041 = vunpack.c.h.b16 %v256
    %v1042 = vunpack.c.l.b16 %v257
    %v1043 = vunpack.c.h.b16 %v257
    %v1044 = vunpack.c.l.b16 %v258
    %v1045 = vunpack.c.h.b16 %v258
    %v1046 = vunpack.c.l.b16 %v259
    %v1047 = vunpack.c.h.b16 %v259
    %v1048 = vunpack.c.l.b16 %v260
    %v1049 = vunpack.c.h.b16 %v260
    %v1050 = vunpack.c.l.b16 %v261
    %v1051 = vunpack.c.h.b16 %v261
    %v1052 = vunpack.c.l.b16 %v262
    %v1053 = vunpack.c.h.b16 %v262
    %v1054 = vunpack.c.l.b16 %v263
    %v1055 = vunpack.c.h.b16 %v263
    %v1056 = vunpack.c.l.b16 %v264
    %v1057 = vunpack.c.h.b16 %v264
    %v1058 = vunpack.c.l.b16 %v265
    %v1059 = vunpack.c.h.b16 %v265
    %v1060 = vunpack.c.l.b16 %v266
    %v1061 = vunpack.c.h.b16 %v266
    %v1062 = vunpack.c.l.b16 %v267
    %v1063 = vunpack.c.h.b16 %v267
    %v1064 = vunpack.c.l.b16 %v268
    %v1065 = vunpack.c.h.b16 %v268
    %v1066 = vunpack.c.l.b16 %v269
    %v1067 = vunpack.c.h.b16 %v269
    %v1068 = vunpack.c.l.b16 %v270
    %v1069 = vunpack.c.h.b16 %v270
    %v1070 = vunpack.c.l.b16 %v271
    %v1071 = vunpack.c.h.b16 %v271
    %v1072 = vunpack.c.l.b16 %v272
    %v1073 = vunpack.c.h.b16 %v272
    %v1074 = vunpack.c.l.b16 %v273
    %v1075 = vunpack.c.h.b16 %v273
    %v1076 = vunpack.c.l.b16 %v274
    %v1077 = vunpack.c.h.b16 %v274
    %v1078 = vunpack.c.l.b16 %v275
    %v1079 = vunpack.c.h.b16 %v275
    %v1080 = vunpack.c.l.b16 %v276
    %v1081 = vunpack.c.h.b16 %v276
    %v1082 = vunpack.c.l.b16 %v277
    %v1083 = vunpack.c.h.b16 %v277
    %v1084 = vunpack.c.l.b16 %v278
    %v1085 = vunpack.c.h.b16 %v278
    %v1086 = vunpack.c.l.b16 %v279
    %v1087 = vunpack.c.h.b16 %v279
    %v1088 = vunpack.c.l.b16 %v280
    %v1089 = vunpack.c.h.b16 %v280
    %v1090 = vunpack.c.l.b16 %v281
    %v1091 = vunpack.c.h.b16 %v281
    %v1092 = vunpack.c.l.b16 %v282
    %v1093 = vunpack.c.h.b16 %v282
    %v1094 = vunpack.c.l.b16 %v283
    %v1095 = vunpack.c.h.b16 %v283
    %v1096 = vunpack.c.l.b16 %v284
    %v1097 = vunpack.c.h.b16 %v284
    %v1098 = vunpack.c.l.b16 %v285
    %v1099 = vunpack.c.h.b16 %v285
    %v1100 = vunpack.c.l.b16 %v286
    %v1101 = vunpack.c.h.b16 %v286
    %v1102 = vunpack.c.l.b16 %v287
    %v1103 = vunpack.c.h.b16 %v287
    %v1104 = vunpack.c.l.b16 %v288
    %v1105 = vunpack.c.h.b16 %v288
    %v1106 = vunpack.c.l.b16 %v289
    %v1107 = vunpack.c.h.b16 %v289
    %v1108 = vunpack.c.l.b16 %v290
    %v1109 = vunpack.c.h.b16 %v290
    %v1110 = vunpack.c.l.b16 %v291
    %v1111 = vunpack.c.h.b16 %v291
    %v1112 = vunpack.c.l.b16 %v292
    %v1113 = vunpack.c.h.b16 %v292
    %v1114 = vunpack.c.l.b16 %v293
    %v1115 = vunpack.c.h.b16 %v293
    %v1116 = vunpack.c.l.b16 %v294
    %v1117 = vunpack.c.h.b16 %v294
    %v1118 = vunpack.c.l.b16 %v295
    %v1119 = vunpack.c.h.b16 %v295
    %v1120 = vunpack.c.l.b16 %v296
    %v1121 = vunpack.c.h.b16 %v296
    %v1122 = vunpack.c.l.b16 %v297
    %v1123 = vunpack.c.h.b16 %v297
    %v1124 = vunpack.c.l.b16 %v298
    %v1125 = vunpack.c.h.b16 %v298
    %v1126 = vunpack.c.l.b16 %v299
    %v1127 = vunpack.c.h.b16 %v299
    %v1128 = vunpack.c.l.b16 %v300
    %v1129 = vunpack.c.h.b16 %v300
    %v1130 = vunpack.c.l.b16 %v301
    %v1131 = vunpack.c.h.b16 %v301
    %v1132 = vunpack.c.l.b16 %v302
    %v1133 = vunpack.c.h.b16 %v302
    %v1134 = vunpack.c.l.b16 %v303
    %v1135 = vunpack.c.h.b16 %v303
    %v1136 = vunpack.c.l.b16 %v304
    %v1137 = vunpack.c.h.b16 %v304
    %v1138 = vunpack.c.l.b16 %v305
    %v1139 = vunpack.c.h.b16 %v305
    %v1140 = vunpack.c.l.b16 %v306
    %v1141 = vunpack.c.h.b16 %v306
    %v1142 = vunpack.c.l.b16 %v307
    %v1143 = vunpack.c.h.b16 %v307
    %v1144 = vunpack.c.l.b16 %v308
    %v1145 = vunpack.c.h.b16 %v308
    %v1146 = vunpack.c.l.b16 %v309
    %v1147 = vunpack.c.h.b16 %v309
    %v1148 = vunpack.c.l.b16 %v310
    %v1149 = vunpack.c.h.b16 %v310
    %v1150 = vunpack.c.l.b16 %v311
    %v1151 = vunpack.c.h.b16 %v311
    %v1152 = vunpack.c.l.b16 %v312
    %v1153 = vunpack.c.h.b16 %v312
    %v1154 = vunpack.c.l.b16 %v313
    %v1155 = vunpack.c.h.b16 %v313
    %v1156 = vunpack.c.l.b16 %v314
    %v1157 = vunpack.c.h.b16 %v314
    %v1158 = vunpack.c.l.b16 %v315
    %v1159 = vunpack.c.h.b16 %v315
    %v1160 = vunpack.c.l.b16 %v316
    %v1161 = vunpack.c.h.b16 %v316
    %v1162 = vunpack.c.l.b16 %v317
    %v1163 = vunpack.c.h.b16 %v317
    %v1164 = vunpack.c.l.b16 %v318
    %v1165 = vunpack.c.h.b16 %v318
    %v1166 = vunpack.c.l.b16 %v319
    %v1167 = vunpack.c.h.b16 %v319
    %v1168 = vunpack.c.l.b16 %v320
    %v1169 = vunpack.c.h.b16 %v320
    %v1170 = vunpack.c.l.b16 %v321
    %v1171 = vunpack.c.h.b16 %v321
    %v1172 = vunpack.c.l.b16 %v322
    %v1173 = vunpack.c.h.b16 %v322
    %v1174 = vunpack.c.l.b16 %v323
    %v1175 = vunpack.c.h.b16 %v323
    %v1176 = vunpack.c.l.b16 %v324
    %v1177 = vunpack.c.h.b16 %v324
    %v1178 = vunpack.c.l.b16 %v325
    %v1179 = vunpack.c.h.b16 %v325
    %v1180 = vunpack.c.l.b16 %v326
    %v1181 = vunpack.c.h.b16 %v326
    %v1182 = vunpack.c.l.b16 %v327
    %v1183 = vunpack.c.h.b16 %v327
    %v1184 = vunpack.c.l.b16 %v328
    %v1185 = vunpack.c.h.b16 %v328
    %v1186 = vunpack.c.l.b16 %v329
    %v1187 = vunpack.c.h.b16 %v329
    %v1188 = vunpack.c.l.b16 %v330
    %v1189 = vunpack.c.h.b16 %v330
    %v1190 = vunpack.c.l.b16 %v331
    %v1191 = vunpack.c.h.b16 %v331
    %v1192 = vunpack.c.l.b16 %v332
    %v1193 = vunpack.c.h.b16 %v332
    %v1194 = vunpack.c.l.b16 %v333
    %v1195 = vunpack.c.h.b16 %v333
    %v1196 = vunpack.c.l.b16 %v334
    %v1197 = vunpack.c.h.b16 %v334
    %v1198 = vunpack.c.l.b16 %v335
    %v1199 = vunpack.c.h.b16 %v335
    %v1200 = vunpack.c.l.b16 %v336
    %v1201 = vunpack.c.h.b16 %v336
    %v1202 = vunpack.c.l.b16 %v337
    %v1203 = vunpack.c.h.b16 %v337
    %v1204 = vunpack.c.l.b16 %v338
    %v1205 = vunpack.c.h.b16 %v338
    %v1206 = vunpack.c.l.b16 %v339
    %v1207 = vunpack.c.h.b16 %v339
    %v1208 = vunpack.c.l.b16 %v340
    %v1209 = vunpack.c.h.b16 %v340
    %v1210 = vunpack.c.l.b16 %v341
    %v1211 = vunpack.c.h.b16 %v341
    %v1212 = vunpack.c.l.b16 %v342
    %v1213 = vunpack.c.h.b16 %v342
    %v1214 = vunpack.c.l.b16 %v343
    %v1215 = vunpack.c.h.b16 %v343
    %v1216 = vunpack.c.l.b16 %v344
    %v1217 = vunpack.c.h.b16 %v344
    %v1218 = vunpack.c.l.b16 %v345
    %v1219 = vunpack.c.h.b16 %v345
    %v1220 = vunpack.c.l.b16 %v346
    %v1221 = vunpack.c.h.b16 %v346
    %v1222 = vunpack.c.l.b16 %v347
    %v1223 = vunpack.c.h.b16 %v347
    %v1224 = vunpack.c.l.b16 %v348
    %v1225 = vunpack.c.h.b16 %v348
    %v1226 = vunpack.c.l.b16 %v349
    %v1227 = vunpack.c.h.b16 %v349
    %v1228 = vunpack.c.l.b16 %v350
    %v1229 = vunpack.c.h.b16 %v350
    %v1230 = vunpack.c.l.b16 %v351
    %v1231 = vunpack.c.h.b16 %v351
    %v1232 = vunpack.c.l.b16 %v352
    %v1233 = vunpack.c.h.b16 %v352
    %v1234 = vunpack.c.l.b16 %v353
    %v1235 = vunpack.c.h.b16 %v353
    %v1236 = vunpack.c.l.b16 %v354
    %v1237 = vunpack.c.h.b16 %v354
    %v1238 = vunpack.c.l.b16 %v355
    %v1239 = vunpack.c.h.b16 %v355
    %v1240 = vunpack.c.l.b16 %v356
    %v1241 = vunpack.c.h.b16 %v356
    %v1242 = vunpack.c.l.b16 %v357
    %v1243 = vunpack.c.h.b16 %v357
    %v1244 = vunpack.c.l.b16 %v358
    %v1245 = vunpack.c.h.b16 %v358
    %v1246 = vunpack.c.l.b16 %v359
    %v1247 = vunpack.c.h.b16 %v359
    %v1248 = vunpack.c.l.b16 %v360
    %v1249 = vunpack.c.h.b16 %v360
    %v1250 = vunpack.c.l.b16 %v361
    %v1251 = vunpack.c.h.b16 %v361
    %v1252 = vunpack.c.l.b16 %v362
    %v1253 = vunpack.c.h.b16 %v362
    %v1254 = vunpack.c.l.b16 %v363
    %v1255 = vunpack.c.h.b16 %v363
    %v1256 = vunpack.c.l.b16 %v364
    %v1257 = vunpack.c.h.b16 %v364
    %v1258 = vunpack.c.l.b16 %v365
    %v1259 = vunpack.c.h.b16 %v365
    %v1260 = vunpack.c.l.b16 %v366
    %v1261 = vunpack.c.h.b16 %v366
    %v1262 = vunpack.c.l.b16 %v367
    %v1263 = vunpack.c.h.b16 %v367
    %v1264 = vunpack.c.l.b16 %v368
    %v1265 = vunpack.c.h.b16 %v368
    %v1266 = vunpack.c.l.b16 %v369
    %v1267 = vunpack.c.h.b16 %v369
    %v1268 = vunpack.c.l.b16 %v370
    %v1269 = vunpack.c.h.b16 %v370
    %v1270 = vunpack.c.l.b16 %v371
    %v1271 = vunpack.c.h.b16 %v371
    %v1272 = vunpack.c.l.b16 %v372
    %v1273 = vunpack.c.h.b16 %v372
    %v1274 = vunpack.c.l.b16 %v373
    %v1275 = vunpack.c.h.b16 %v373
    %v1276 = vunpack.c.l.b16 %v374
    %v1277 = vunpack.c.h.b16 %v374
    %v1278 = vunpack.c.l.b16 %v375
    %v1279 = vunpack.c.h.b16 %v375
    %v1280 = vunpack.c.l.b16 %v376
    %v1281 = vunpack.c.h.b16 %v376
    %v1282 = vunpack.c.l.b16 %v377
    %v1283 = vunpack.c.h.b16 %v377
    %v1284 = vunpack.c.l.b16 %v378
    %v1285 = vunpack.c.h.b16 %v378
    %v1286 = vunpack.c.l.b16 %v379
    %v1287 = vunpack.c.h.b16 %v379
    %v1288 = vunpack.c.l.b16 %v380
    %v1289 = vunpack.c.h.b16 %v380
    %v1290 = vunpack.c.l.b16 %v381
    %v1291 = vunpack.c.h.b16 %v381
    %v1292 = vunpack.c.l.b16 %v382
    %v1293 = vunpack.c.h.b16 %v382
    %v1294 = vunpack.c.l.b16 %v383
    %v1295 = vunpack.c.h.b16 %v383
    %v1296 = vunpack.c.l.b16 %v384
    %v1297 = vunpack.c.h.b16 %v384
    %v1298 = vunpack.c.l.b16 %v385
    %v1299 = vunpack.c.h.b16 %v385
    %v1300 = vunpack.c.l.b16 %v386
    %v1301 = vunpack.c.h.b16 %v386
    %v1302 = vunpack.c.l.b16 %v387
    %v1303 = vunpack.c.h.b16 %v387
    %v1304 = vunpack.c.l.b16 %v388
    %v1305 = vunpack.c.h.b16 %v388
    %v1306 = vunpack.c.l.b16 %v389
    %v1307 = vunpack.c.h.b16 %v389
    %v1308 = vunpack.c.l.b16 %v390
    %v1309 = vunpack.c.h.b16 %v390
    %v1310 = vunpack.c.l.b16 %v391
    %v1311 = vunpack.c.h.b16 %v391
    %v1312 = vunpack.c.l.b16 %v392
    %v1313 = vunpack.c.h.b16 %v392
    %v1314 = vunpack.c.l.b16 %v393
    %v1315 = vunpack.c.h.b16 %v393
    %v1316 = vunpack.c.l.b16 %v394
    %v1317 = vunpack.c.h.b16 %v394
    %v1318 = vunpack.c.l.b16 %v395
    %v1319 = vunpack.c.h.b16 %v395
    %v1320 = vunpack.c.l.b16 %v396
    %v1321 = vunpack.c.h.b16 %v396
    %v1322 = vunpack.c.l.b16 %v397
    %v1323 = vunpack.c.h.b16 %v397
    %v1324 = vunpack.c.l.b16 %v398
    %v1325 = vunpack.c.h.b16 %v398
    %v1326 = vunpack.c.l.b16 %v399
    %v1327 = vunpack.c.h.b16 %v399
    %v1328 = vunpack.c.l.b16 %v400
    %v1329 = vunpack.c.h.b16 %v400
    %v1330 = vunpack.c.l.b16 %v401
    %v1331 = vunpack.c.h.b16 %v401
    %v1332 = vunpack.c.l.b16 %v402
    %v1333 = vunpack.c.h.b16 %v402
    %v1334 = vunpack.c.l.b16 %v403
    %v1335 = vunpack.c.h.b16 %v403
    %v1336 = vunpack.c.l.b16 %v404
    %v1337 = vunpack.c.h.b16 %v404
    %v1338 = vunpack.c.l.b16 %v405
    %v1339 = vunpack.c.h.b16 %v405
    %v1340 = vunpack.c.l.b16 %v406
    %v1341 = vunpack.c.h.b16 %v406
    %v1342 = vunpack.c.l.b16 %v407
    %v1343 = vunpack.c.h.b16 %v407
    %v1344 = vunpack.c.l.b16 %v408
    %v1345 = vunpack.c.h.b16 %v408
    %v1346 = vunpack.c.l.b16 %v409
    %v1347 = vunpack.c.h.b16 %v409
    %v1348 = vunpack.c.l.b16 %v410
    %v1349 = vunpack.c.h.b16 %v410
    %v1350 = vunpack.c.l.b16 %v411
    %v1351 = vunpack.c.h.b16 %v411
    %v1352 = vunpack.c.l.b16 %v412
    %v1353 = vunpack.c.h.b16 %v412
    %v1354 = vunpack.c.l.b16 %v413
    %v1355 = vunpack.c.h.b16 %v413
    %v1356 = vunpack.c.l.b16 %v414
    %v1357 = vunpack.c.h.b16 %v414
    %v1358 = vunpack.c.l.b16 %v415
    %v1359 = vunpack.c.h.b16 %v415
    %v1360 = vunpack.c.l.b16 %v416
    %v1361 = vunpack.c.h.b16 %v416
    %v1362 = vunpack.c.l.b16 %v417
    %v1363 = vunpack.c.h.b16 %v417
    %v1364 = vunpack.c.l.b16 %v418
    %v1365 = vunpack.c.h.b16 %v418
    %v1366 = vunpack.c.l.b16 %v419
    %v1367 = vunpack.c.h.b16 %v419
    %v1368 = vunpack.c.l.b16 %v420
    %v1369 = vunpack.c.h.b16 %v420
    %v1370 = vunpack.c.l.b16 %v421
    %v1371 = vunpack.c.h.b16 %v421
    %v1372 = vunpack.c.l.b16 %v422
    %v1373 = vunpack.c.h.b16 %v422
    %v1374 = vunpack.c.l.b16 %v423
    %v1375 = vunpack.c.h.b16 %v423
    %v1376 = vunpack.c.l.b16 %v424
    %v1377 = vunpack.c.h.b16 %v424
    %v1378 = vunpack.c.l.b16 %v425
    %v1379 = vunpack.c.h.b16 %v425
    %v1380 = vunpack.c.l.b16 %v426
    %v1381 = vunpack.c.h.b16 %v426
    %v1382 = vunpack.c.l.b16 %v427
    %v1383 = vunpack.c.h.b16 %v427
    %v1384 = vunpack.c.l.b16 %v428
    %v1385 = vunpack.c.h.b16 %v428
    %v1386 = vunpack.c.l.b16 %v429
    %v1387 = vunpack.c.h.b16 %v429
    %v1388 = vunpack.c.l.b16 %v430
    %v1389 = vunpack.c.h.b16 %v430
    %v1390 = vunpack.c.l.b16 %v431
    %v1391 = vunpack.c.h.b16 %v431
    %v1392 = vunpack.c.l.b16 %v432
    %v1393 = vunpack.c.h.b16 %v432
    %v1394 = vunpack.c.l.b16 %v433
    %v1395 = vunpack.c.h.b16 %v433
    %v1396 = vunpack.c.l.b16 %v434
    %v1397 = vunpack.c.h.b16 %v434
    %v1398 = vunpack.c.l.b16 %v435
    %v1399 = vunpack.c.h.b16 %v435
    %v1400 = vunpack.c.l.b16 %v436
    %v1401 = vunpack.c.h.b16 %v436
    %v1402 = vunpack.c.l.b16 %v437
    %v1403 = vunpack.c.h.b16 %v437
    %v1404 = vunpack.c.l.b16 %v438
    %v1405 = vunpack.c.h.b16 %v438
    %v1406 = vunpack.c.l.b16 %v439
    %v1407 = vunpack.c.h.b16 %v439
    %v1408 = vunpack.c.l.b16 %v440
    %v1409 = vunpack.c.h.b16 %v440
    %v1410 = vunpack.c.l.b16 %v441
    %v1411 = vunpack.c.h.b16 %v441
    %v1412 = vunpack.c.l.b16 %v442
    %v1413 = vunpack.c.h.b16 %v442
    %v1414 = vunpack.c.l.b16 %v443
    %v1415 = vunpack.c.h.b16 %v443
    %v1416 = vunpack.c.l.b16 %v444
    %v1417 = vunpack.c.h.b16 %v444
    %v1418 = vunpack.c.l.b16 %v445
    %v1419 = vunpack.c.h.b16 %v445
    %v1420 = vunpack.c.l.b16 %v446
    %v1421 = vunpack.c.h.b16 %v446
    %v1422 = vunpack.c.l.b16 %v447
    %v1423 = vunpack.c.h.b16 %v447
    %v1424 = vunpack.c.l.b16 %v448
    %v1425 = vunpack.c.h.b16 %v448
    %v1426 = vunpack.c.l.b16 %v449
    %v1427 = vunpack.c.h.b16 %v449
    %v1428 = vunpack.c.l.b16 %v450
    %v1429 = vunpack.c.h.b16 %v450
    %v1430 = vunpack.c.l.b16 %v451
    %v1431 = vunpack.c.h.b16 %v451
    %v1432 = vunpack.c.l.b16 %v452
    %v1433 = vunpack.c.h.b16 %v452
    %v1434 = vunpack.c.l.b16 %v453
    %v1435 = vunpack.c.h.b16 %v453
    %v1436 = vunpack.c.l.b16 %v454
    %v1437 = vunpack.c.h.b16 %v454
    %v1438 = vunpack.c.l.b16 %v455
    %v1439 = vunpack.c.h.b16 %v455
    %v1440 = vunpack.c.l.b16 %v456
    %v1441 = vunpack.c.h.b16 %v456
    %v1442 = vunpack.c.l.b16 %v457
    %v1443 = vunpack.c.h.b16 %v457
    %v1444 = vunpack.c.l.b16 %v458
    %v1445 = vunpack.c.h.b16 %v458
    %v1446 = vunpack.c.l.b16 %v459
    %v1447 = vunpack.c.h.b16 %v459
    %v1448 = vunpack.c.l.b16 %v460
    %v1449 = vunpack.c.h.b16 %v460
    %v1450 = vunpack.c.l.b16 %v461
    %v1451 = vunpack.c.h.b16 %v461
    %v1452 = vunpack.c.l.b16 %v462
    %v1453 = vunpack.c.h.b16 %v462
    %v1454 = vunpack.c.l.b16 %v463
    %v1455 = vunpack.c.h.b16 %v463
    %v1456 = vunpack.c.l.b16 %v464
    %v1457 = vunpack.c.h.b16 %v464
    %v1458 = vunpack.c.l.b16 %v465
    %v1459 = vunpack.c.h.b16 %v465
    %v1460 = vunpack.c.l.b16 %v466
    %v1461 = vunpack.c.h.b16 %v466
    %v1462 = vunpack.c.l.b16 %v467
    %v1463 = vunpack.c.h.b16 %v467
    %v1464 = vunpack.c.l.b16 %v468
    %v1465 = vunpack.c.h.b16 %v468
    %v1466 = vunpack.c.l.b16 %v469
    %v1467 = vunpack.c.h.b16 %v469
    %v1468 = vunpack.c.l.b16 %v470
    %v1469 = vunpack.c.h.b16 %v470
    %v1470 = vunpack.c.l.b16 %v471
    %v1471 = vunpack.c.h.b16 %v471
    %v1472 = vunpack.c.l.b16 %v472
    %v1473 = vunpack.c.h.b16 %v472
    %v1474 = vunpack.c.l.b16 %v473
    %v1475 = vunpack.c.h.b16 %v473
    %v1476 = vunpack.c.l.b16 %v474
    %v1477 = vunpack.c.h.b16 %v474
    %v1478 = vunpack.c.l.b16 %v475
    %v1479 = vunpack.c.h.b16 %v475
    %v1480 = vunpack.c.l.b16 %v476
    %v1481 = vunpack.c.h.b16 %v476
    %v1482 = vunpack.c.l.b16 %v477
    %v1483 = vunpack.c.h.b16 %v477
    %v1484 = vunpack.c.l.b16 %v478
    %v1485 = vunpack.c.h.b16 %v478
    %v1486 = vunpack.c.l.b16 %v479
    %v1487 = vunpack.c.h.b16 %v479
    %v1488 = vunpack.c.l.b16 %v480
    %v1489 = vunpack.c.h.b16 %v480
    %v1490 = vunpack.c.l.b16 %v481
    %v1491 = vunpack.c.h.b16 %v481
    %v1492 = vunpack.c.l.b16 %v482
    %v1493 = vunpack.c.h.b16 %v482
    %v1494 = vunpack.c.l.b16 %v483
    %v1495 = vunpack.c.h.b16 %v483
    %v1496 = vunpack.c.l.b16 %v484
    %v1497 = vunpack.c.h.b16 %v484
    %v1498 = vunpack.c.l.b16 %v485
    %v1499 = vunpack.c.h.b16 %v485
    %v1500 = vunpack.c.l.b16 %v486
    %v1501 = vunpack.c.h.b16 %v486
    %v1502 = vunpack.c.l.b16 %v487
    %v1503 = vunpack.c.h.b16 %v487
    %v1504 = vunpack.c.l.b16 %v488
    %v1505 = vunpack.c.h.b16 %v488
    %v1506 = vunpack.c.l.b16 %v489
    %v1507 = vunpack.c.h.b16 %v489
    %v1508 = vunpack.c.l.b16 %v490
    %v1509 = vunpack.c.h.b16 %v490
    %v1510 = vunpack.c.l.b16 %v491
    %v1511 = vunpack.c.h.b16 %v491
    %v1512 = vpack.c.b16 %v880, %v872
    %v1513 = vpack.c.b16 %v881, %v873
    %v1514 = vpack.c.b16 %v882, %v874
    %v1515 = vpack.c.b16 %v883, %v875
    %v1516 = vpack.c.b16 %v884, %v876
    %v1517 = vpack.c.b16 %v885, %v877
    %v1518 = vpack.c.b16 %v886, %v878
    %v1519 = vpack.c.b16 %v887, %v879
    %v1520 = vpack.c.b16 %v896, %v888
    %v1521 = vpack.c.b16 %v897, %v889
    %v1522 = vpack.c.b16 %v898, %v890
    %v1523 = vpack.c.b16 %v899, %v891
    %v1524 = vpack.c.b16 %v900, %v892
    %v1525 = vpack.c.b16 %v901, %v893
    %v1526 = vpack.c.b16 %v902, %v894
    %v1527 = vpack.c.b16 %v903, %v895
    %v1528 = vpack.c.b16 %v912, %v904
    %v1529 = vpack.c.b16 %v913, %v905
    %v1530 = vpack.c.b16 %v914, %v906
    %v1531 = vpack.c.b16 %v915, %v907
    %v1532 = vpack.c.b16 %v916, %v908
    %v1533 = vpack.c.b16 %v917, %v909
    %v1534 = vpack.c.b16 %v918, %v910
    %v1535 = vpack.c.b16 %v919, %v911
    %v1536 = vpack.c.b16 %v928, %v920
    %v1537 = vpack.c.b16 %v929, %v921
    %v1538 = vpack.c.b16 %v930, %v922
    %v1539 = vpack.c.b16 %v931, %v923
    %v1540 = vpack.c.b16 %v932, %v924
    %v1541 = vpack.c.b16 %v933, %v925
    %v1542 = vpack.c.b16 %v934, %v926
    %v1543 = vpack.c.b16 %v935, %v927
    %v1544 = vpack.c.b16 %v944, %v936
    %v1545 = vpack.c.b16 %v945, %v937
    %v1546 = vpack.c.b16 %v946, %v938
    %v1547 = vpack.c.b16 %v947, %v939
    %v1548 = vpack.c.b16 %v948, %v940
    %v1549 = vpack.c.b16 %v949, %v941
    %v1550 = vpack.c.b16 %v950, %v942
    %v1551 = vpack.c.b16 %v951, %v943
    %v1552 = vpack.c.b16 %v960, %v952
    %v1553 = vpack.c.b16 %v961, %v953
    %v1554 = vpack.c.b16 %v962, %v954
    %v1555 = vpack.c.b16 %v963, %v955
    %v1556 = vpack.c.b16 %v964, %v956
    %v1557 = vpack.c.b16 %v965, %v957
    %v1558 = vpack.c.b16 %v966, %v958
    %v1559 = vpack.c.b16 %v967, %v959
    %v1560 = vpack.c.b16 %v976, %v968
    %v1561 = vpack.c.b16 %v977, %v969
    %v1562 = vpack.c.b16 %v978, %v970
    %v1563 = vpack.c.b16 %v979, %v971
    %v1564 = vpack.c.b16 %v980, %v972
    %v1565 = vpack.c.b16 %v981, %v973
    %v1566 = vpack.c.b16 %v982, %v974
    %v1567 = vpack.c.b16 %v983, %v975
    %v1568 = vpack.c.b16 %v992, %v984
    %v1569 = vpack.c.b16 %v993, %v985
    %v1570 = vpack.c.b16 %v994, %v986
    %v1571 = vpack.c.b16 %v995, %v987
    %v1572 = vpack.c.b16 %v996, %v988
    %v1573 = vpack.c.b16 %v997, %v989
    %v1574 = vpack.c.b16 %v998, %v990
    %v1575 = vpack.c.b16 %v999, %v991
    %v1576 = vpack.c.b16 %v1008, %v1000
    %v1577 = vpack.c.b16 %v1009, %v1001
    %v1578 = vpack.c.b16 %v1010, %v1002
    %v1579 = vpack.c.b16 %v1011, %v1003
    %v1580 = vpack.c.b16 %v1012, %v1004
    %v1581 = vpack.c.b16 %v1013, %v1005
    %v1582 = vpack.c.b16 %v1014, %v1006
    %v1583 = vpack.c.b16 %v1015, %v1007
    %v1584 = vpack.c.b16 %v1024, %v1016
    %v1585 = vpack.c.b16 %v1025, %v1017
    %v1586 = vpack.c.b16 %v1026, %v1018
    %v1587 = vpack.c.b16 %v1027, %v1019
    %v1588 = vpack.c.b16 %v1028, %v1020
    %v1589 = vpack.c.b16 %v1029, %v1021
    %v1590 = vpack.c.b16 %v1030, %v1022
    %v1591 = vpack.c.b16 %v1031, %v1023
    %v1592 = vpack.c.b16 %v1040, %v1032
    %v1593 = vpack.c.b16 %v1041, %v1033
    %v1594 = vpack.c.b16 %v1042, %v1034
    %v1595 = vpack.c.b16 %v1043, %v1035
    %v1596 = vpack.c.b16 %v1044, %v1036
    %v1597 = vpack.c.b16 %v1045, %v1037
    %v1598 = vpack.c.b16 %v1046, %v1038
    %v1599 = vpack.c.b16 %v1047, %v1039
    %v1600 = vpack.c.b16 %v1056, %v1048
    %v1601 = vpack.c.b16 %v1057, %v1049
    %v1602 = vpack.c.b16 %v1058, %v1050
    %v1603 = vpack.c.b16 %v1059, %v1051
    %v1604 = vpack.c.b16 %v1060, %v1052
    %v1605 = vpack.c.b16 %v1061, %v1053
    %v1606 = vpack.c.b16 %v1062, %v1054
    %v1607 = vpack.c.b16 %v1063, %v1055
    %v1608 = vpack.c.b16 %v1072, %v1064
    %v1609 = vpack.c.b16 %v1073, %v1065
    %v1610 = vpack.c.b16 %v1074, %v1066
    %v1611 = vpack.c.b16 %v1075, %v1067
    %v1612 = vpack.c.b16 %v1076, %v1068
    %v1613 = vpack.c.b16 %v1077, %v1069
    %v1614 = vpack.c.b16 %v1078, %v1070
    %v1615 = vpack.c.b16 %v1079, %v1071
    %v1616 = vpack.c.b16 %v1088, %v1080
    %v1617 = vpack.c.b16 %v1089, %v1081
    %v1618 = vpack.c.b16 %v1090, %v1082
    %v1619 = vpack.c.b16 %v1091, %v1083
    %v1620 = vpack.c.b16 %v1092, %v1084
    %v1621 = vpack.c.b16 %v1093, %v1085
    %v1622 = vpack.c.b16 %v1094, %v1086
    %v1623 = vpack.c.b16 %v1095, %v1087
    %v1624 = vpack.c.b16 %v1104, %v1096
    %v1625 = vpack.c.b16 %v1105, %v1097
    %v1626 = vpack.c.b16 %v1106, %v1098
    %v1627 = vpack.c.b16 %v1107, %v1099
    %v1628 = vpack.c.b16 %v1108, %v1100
    %v1629 = vpack.c.b16 %v1109, %v1101
    %v1630 = vpack.c.b16 %v1110, %v1102
    %v1631 = vpack.c.b16 %v1111, %v1103
    %v1632 = vpack.c.b16 %v1120, %v1112
    %v1633 = vpack.c.b16 %v1121, %v1113
    %v1634 = vpack.c.b16 %v1122, %v1114
    %v1635 = vpack.c.b16 %v1123, %v1115
    %v1636 = vpack.c.b16 %v1124, %v1116
    %v1637 = vpack.c.b16 %v1125, %v1117
    %v1638 = vpack.c.b16 %v1126, %v1118
    %v1639 = vpack.c.b16 %v1127, %v1119
    %v1640 = vpack.c.b16 %v1136, %v1128
    %v1641 = vpack.c.b16 %v1137, %v1129
    %v1642 = vpack.c.b16 %v1138, %v1130
    %v1643 = vpack.c.b16 %v1139, %v1131
    %v1644 = vpack.c.b16 %v1140, %v1132
    %v1645 = vpack.c.b16 %v1141, %v1133
    %v1646 = vpack.c.b16 %v1142, %v1134
    %v1647 = vpack.c.b16 %v1143, %v1135
    %v1648 = vpack.c.b16 %v1152, %v1144
    %v1649 = vpack.c.b16 %v1153, %v1145
    %v1650 = vpack.c.b16 %v1154, %v1146
    %v1651 = vpack.c.b16 %v1155, %v1147
    %v1652 = vpack.c.b16 %v1156, %v1148
    %v1653 = vpack.c.b16 %v1157, %v1149
    %v1654 = vpack.c.b16 %v1158, %v1150
    %v1655 = vpack.c.b16 %v1159, %v1151
    %v1656 = vpack.c.b16 %v1168, %v1160
    %v1657 = vpack.c.b16 %v1169, %v1161
    %v1658 = vpack.c.b16 %v1170, %v1162
    %v1659 = vpack.c.b16 %v1171, %v1163
    %v1660 = vpack.c.b16 %v1172, %v1164
    %v1661 = vpack.c.b16 %v1173, %v1165
    %v1662 = vpack.c.b16 %v1174, %v1166
    %v1663 = vpack.c.b16 %v1175, %v1167
    %v1664 = vpack.c.b16 %v1184, %v1176
    %v1665 = vpack.c.b16 %v1185, %v1177
    %v1666 = vpack.c.b16 %v1186, %v1178
    %v1667 = vpack.c.b16 %v1187, %v1179
    %v1668 = vpack.c.b16 %v1188, %v1180
    %v1669 = vpack.c.b16 %v1189, %v1181
    %v1670 = vpack.c.b16 %v1190, %v1182
    %v1671 = vpack.c.b16 %v1191, %v1183
    %v1672 = vpack.c.b16 %v1200, %v1192
    %v1673 = vpack.c.b16 %v1201, %v1193
    %v1674 = vpack.c.b16 %v1202, %v1194
    %v1675 = vpack.c.b16 %v1203, %v1195
    %v1676 = vpack.c.b16 %v1204, %v1196
    %v1677 = vpack.c.b16 %v1205, %v1197
    %v1678 = vpack.c.b16 %v1206, %v1198
    %v1679 = vpack.c.b16 %v1207, %v1199
    %v1680 = vpack.c.b16 %v1216, %v1208
    %v1681 = vpack.c.b16 %v1217, %v1209
    %v1682 = vpack.c.b16 %v1218, %v1210
    %v1683 = vpack.c.b16 %v1219, %v1211
    %v1684 = vpack.c.b16 %v1220, %v1212
    %v1685 = vpack.c.b16 %v1221, %v1213
    %v1686 = vpack.c.b16 %v1222, %v1214
    %v1687 = vpack.c.b16 %v1223, %v1215
    %v1688 = vpack.c.b16 %v1232, %v1224
    %v1689 = vpack.c.b16 %v1233, %v1225
    %v1690 = vpack.c.b16 %v1234, %v1226
    %v1691 = vpack.c.b16 %v1235, %v1227
    %v1692 = vpack.c.b16 %v1236, %v1228
    %v1693 = vpack.c.b16 %v1237, %v1229
    %v1694 = vpack.c.b16 %v1238, %v1230
    %v1695 = vpack.c.b16 %v1239, %v1231
    %v1696 = vpack.c.b16 %v1248, %v1240
    %v1697 = vpack.c.b16 %v1249, %v1241
    %v1698 = vpack.c.b16 %v1250, %v1242
    %v1699 = vpack.c.b16 %v1251, %v1243
    %v1700 = vpack.c.b16 %v1252, %v1244
    %v1701 = vpack.c.b16 %v1253, %v1245
    %v1702 = vpack.c.b16 %v1254, %v1246
    %v1703 = vpack.c.b16 %v1255, %v1247
    %v1704 = vpack.c.b16 %v1264, %v1256
    %v1705 = vpack.c.b16 %v1265, %v1257
    %v1706 = vpack.c.b16 %v1266, %v1258
    %v1707 = vpack.c.b16 %v1267, %v1259
    %v1708 = vpack.c.b16 %v1268, %v1260
    %v1709 = vpack.c.b16 %v1269, %v1261
    %v1710 = vpack.c.b16 %v1270, %v1262
    %v1711 = vpack.c.b16 %v1271, %v1263
    %v1712 = vpack.c.b16 %v1280, %v1272
    %v1713 = vpack.c.b16 %v1281, %v1273
    %v1714 = vpack.c.b16 %v1282, %v1274
    %v1715 = vpack.c.b16 %v1283, %v1275
    %v1716 = vpack.c.b16 %v1284, %v1276
    %v1717 = vpack.c.b16 %v1285, %v1277
    %v1718 = vpack.c.b16 %v1286, %v1278
    %v1719 = vpack.c.b16 %v1287, %v1279
    %v1720 = vpack.c.b16 %v1296, %v1288
    %v1721 = vpack.c.b16 %v1297, %v1289
    %v1722 = vpack.c.b16 %v1298, %v1290
    %v1723 = vpack.c.b16 %v1299, %v1291
    %v1724 = vpack.c.b16 %v1300, %v1292
    %v1725 = vpack.c.b16 %v1301, %v1293
    %v1726 = vpack.c.b16 %v1302, %v1294
    %v1727 = vpack.c.b16 %v1303, %v1295
    %v1728 = vpack.c.b16 %v1312, %v1304
    %v1729 = vpack.c.b16 %v1313, %v1305
    %v1730 = vpack.c.b16 %v1314, %v1306
    %v1731 = vpack.c.b16 %v1315, %v1307
    %v1732 = vpack.c.b16 %v1316, %v1308
    %v1733 = vpack.c.b16 %v1317, %v1309
    %v1734 = vpack.c.b16 %v1318, %v1310
    %v1735 = vpack.c.b16 %v1319, %v1311
    %v1736 = vpack.c.b16 %v1328, %v1320
    %v1737 = vpack.c.b16 %v1329, %v1321
    %v1738 = vpack.c.b16 %v1330, %v1322
    %v1739 = vpack.c.b16 %v1331, %v1323
    %v1740 = vpack.c.b16 %v1332, %v1324
    %v1741 = vpack.c.b16 %v1333, %v1325
    %v1742 = vpack.c.b16 %v1334, %v1326
    %v1743 = vpack.c.b16 %v1335, %v1327
    %v1744 = vpack.c.b16 %v1344, %v1336
    %v1745 = vpack.c.b16 %v1345, %v1337
    %v1746 = vpack.c.b16 %v1346, %v1338
    %v1747 = vpack.c.b16 %v1347, %v1339
    %v1748 = vpack.c.b16 %v1348, %v1340
    %v1749 = vpack.c.b16 %v1349, %v1341
    %v1750 = vpack.c.b16 %v1350, %v1342
    %v1751 = vpack.c.b16 %v1351, %v1343
    %v1752 = vpack.c.b16 %v1360, %v1352
    %v1753 = vpack.c.b16 %v1361, %v1353
    %v1754 = vpack.c.b16 %v1362, %v1354
    %v1755 = vpack.c.b16 %v1363, %v1355
    %v1756 = vpack.c.b16 %v1364, %v1356
    %v1757 = vpack.c.b16 %v1365, %v1357
    %v1758 = vpack.c.b16 %v1366, %v1358
    %v1759 = vpack.c.b16 %v1367, %v1359
    %v1760 = vpack.c.b16 %v1376, %v1368
    %v1761 = vpack.c.b16 %v1377, %v1369
    %v1762 = vpack.c.b16 %v1378, %v1370
    %v1763 = vpack.c.b16 %v1379, %v1371
    %v1764 = vpack.c.b16 %v1380, %v1372
    %v1765 = vpack.c.b16 %v1381, %v1373
    %v1766 = vpack.c.b16 %v1382, %v1374
    %v1767 = vpack.c.b16 %v1383, %v1375
    %v1768 = vpack.c.b16 %v1392, %v1384
    %v1769 = vpack.c.b16 %v1393, %v1385
    %v1770 = vpack.c.b16 %v1394, %v1386
    %v1771 = vpack.c.b16 %v1395, %v1387
    %v1772 = vpack.c.b16 %v1396, %v1388
    %v1773 = vpack.c.b16 %v1397, %v1389
    %v1774 = vpack.c.b16 %v1398, %v1390
    %v1775 = vpack.c.b16 %v1399, %v1391
    %v1776 = vpack.c.b16 %v1408, %v1400
    %v1777 = vpack.c.b16 %v1409, %v1401
    %v1778 = vpack.c.b16 %v1410, %v1402
    %v1779 = vpack.c.b16 %v1411, %v1403
    %v1780 = vpack.c.b16 %v1412, %v1404
    %v1781 = vpack.c.b16 %v1413, %v1405
    %v1782 = vpack.c.b16 %v1414, %v1406
    %v1783 = vpack.c.b16 %v1415, %v1407
    %v1784 = vpack.c.b16 %v1424, %v1416
    %v1785 = vpack.c.b16 %v1425, %v1417
    %v1786 = vpack.c.b16 %v1426, %v1418
    %v1787 = vpack.c.b16 %v1427, %v1419
    %v1788 = vpack.c.b16 %v1428, %v1420
    %v1789 = vpack.c.b16 %v1429, %v1421
    %v1790 = vpack.c.b16 %v1430, %v1422
    %v1791 = vpack.c.b16 %v1431, %v1423
    %v1792 = vpack.c.b16 %v1440, %v1432
    %v1793 = vpack.c.b16 %v1441, %v1433
    %v1794 = vpack.c.b16 %v1442, %v1434
    %v1795 = vpack.c.b16 %v1443, %v1435
    %v1796 = vpack.c.b16 %v1444, %v1436
    %v1797 = vpack.c.b16 %v1445, %v1437
    %v1798 = vpack.c.b16 %v1446, %v1438
    %v1799 = vpack.c.b16 %v1447, %v1439
    %v1800 = vpack.c.b16 %v1456, %v1448
    %v1801 = vpack.c.b16 %v1457, %v1449
    %v1802 = vpack.c.b16 %v1458, %v1450
    %v1803 = vpack.c.b16 %v1459, %v1451
    %v1804 = vpack.c.b16 %v1460, %v1452
    %v1805 = vpack.c.b16 %v1461, %v1453
    %v1806 = vpack.c.b16 %v1462, %v1454
    %v1807 = vpack.c.b16 %v1463, %v1455
    %v1808 = vpack.c.b16 %v1472, %v1464
    %v1809 = vpack.c.b16 %v1473, %v1465
    %v1810 = vpack.c.b16 %v1474, %v1466
    %v1811 = vpack.c.b16 %v1475, %v1467
    %v1812 = vpack.c.b16 %v1476, %v1468
    %v1813 = vpack.c.b16 %v1477, %v1469
    %v1814 = vpack.c.b16 %v1478, %v1470
    %v1815 = vpack.c.b16 %v1479, %v1471
    %v1816 = vpack.c.b16 %v1488, %v1480
    %v1817 = vpack.c.b16 %v1489, %v1481
    %v1818 = vpack.c.b16 %v1490, %v1482
    %v1819 = vpack.c.b16 %v1491, %v1483
    %v1820 = vpack.c.b16 %v1492, %v1484
    %v1821 = vpack.c.b16 %v1493, %v1485
    %v1822 = vpack.c.b16 %v1494, %v1486
    %v1823 = vpack.c.b16 %v1495, %v1487
    %v1824 = vpack.c.b16 %v1504, %v1496
    %v1825 = vpack.c.b16 %v1505, %v1497
    %v1826 = vpack.c.b16 %v1506, %v1498
    %v1827 = vpack.c.b16 %v1507, %v1499
    %v1828 = vpack.c.b16 %v1508, %v1500
    %v1829 = vpack.c.b16 %v1509, %v1501
    %v1830 = vpack.c.b16 %v1510, %v1502
    %v1831 = vpack.c.b16 %v1511, %v1503
    %2152 = vmatprep.subr.bf16.mxu0 %v1513
    %2153 = vmatpush1.bf16.msra.mxu0 %v1512
    %2154 = vmatprep.subr.bf16.mxu0 %v1521
    %2155 = vmatpush1.bf16.msra.mxu0 %v1520
    %2156 = vmatprep.subr.bf16.mxu0 %v1529
    %2157 = vmatpush1.bf16.msra.mxu0 %v1528
    %2158 = vmatprep.subr.bf16.mxu0 %v1537
    %2159 = vmatpush1.bf16.msra.mxu0 %v1536
    %2160 = vmatprep.subr.bf16.mxu0 %v1545
    %2161 = vmatpush1.bf16.msra.mxu0 %v1544
    %2162 = vmatprep.subr.bf16.mxu0 %v1553
    %2163 = vmatpush1.bf16.msra.mxu0 %v1552
    %2164 = vmatprep.subr.bf16.mxu0 %v1561
    %2165 = vmatpush1.bf16.msra.mxu0 %v1560
    %2166 = vmatprep.subr.bf16.mxu0 %v1569
    %2167 = vmatpush1.bf16.msra.mxu0 %v1568
    %2168 = vmatprep.subr.bf16.mxu0 %v1577
    %2169 = vmatpush1.bf16.msra.mxu0 %v1576
    %2170 = vmatprep.subr.bf16.mxu0 %v1585
    %2171 = vmatpush1.bf16.msra.mxu0 %v1584
    %2172 = vmatprep.subr.bf16.mxu0 %v1593
    %2173 = vmatpush1.bf16.msra.mxu0 %v1592
    %2174 = vmatprep.subr.bf16.mxu0 %v1601
    %2175 = vmatpush1.bf16.msra.mxu0 %v1600
    %2176 = vmatprep.subr.bf16.mxu0 %v1609
    %2177 = vmatpush1.bf16.msra.mxu0 %v1608
    %2178 = vmatprep.subr.bf16.mxu0 %v1617
    %2179 = vmatpush1.bf16.msra.mxu0 %v1616
    %2180 = vmatprep.subr.bf16.mxu0 %v1625
    %2181 = vmatpush1.bf16.msra.mxu0 %v1624
    %2182 = vmatprep.subr.bf16.mxu0 %v1633
    %2183 = vmatpush1.bf16.msra.mxu0 %v1632
    %2184 = vmatprep.mubr.bf16.mxu0 %v543
    %2185 = vmatmul.mubr.bf16.gmra.mrb[0].mxu0 %v542
    %v2186 = vpop.f32.mrb[0].mxu0
    %v2187 = vadd.f32 %v497, %v2186
    %v2188 = vpop.f32.mrb[0].mxu0
    %v2189 = vadd.f32 %v501, %v2188
    %v2190 = vpop.f32.mrb[0].mxu0
    %v2191 = vpop.f32.mrb[0].mxu0
    %2192 = vdwg.mxu0
    %2193 = vmatprep.subr.bf16.mxu0 %v1641
    %2194 = vmatpush1.bf16.msra.mxu0 %v1640
    %2195 = vmatprep.subr.bf16.mxu0 %v1649
    %2196 = vmatpush1.bf16.msra.mxu0 %v1648
    %2197 = vmatprep.subr.bf16.mxu0 %v1657
    %2198 = vmatpush1.bf16.msra.mxu0 %v1656
    %2199 = vmatprep.subr.bf16.mxu0 %v1665
    %2200 = vmatpush1.bf16.msra.mxu0 %v1664
    %2201 = vmatprep.subr.bf16.mxu0 %v1673
    %2202 = vmatpush1.bf16.msra.mxu0 %v1672
    %2203 = vmatprep.subr.bf16.mxu0 %v1681
    %2204 = vmatpush1.bf16.msra.mxu0 %v1680
    %2205 = vmatprep.subr.bf16.mxu0 %v1689
    %2206 = vmatpush1.bf16.msra.mxu0 %v1688
    %2207 = vmatprep.subr.bf16.mxu0 %v1697
    %2208 = vmatpush1.bf16.msra.mxu0 %v1696
    %2209 = vmatprep.subr.bf16.mxu0 %v1705
    %2210 = vmatpush1.bf16.msra.mxu0 %v1704
    %2211 = vmatprep.subr.bf16.mxu0 %v1713
    %2212 = vmatpush1.bf16.msra.mxu0 %v1712
    %2213 = vmatprep.subr.bf16.mxu0 %v1721
    %2214 = vmatpush1.bf16.msra.mxu0 %v1720
    %2215 = vmatprep.subr.bf16.mxu0 %v1729
    %2216 = vmatpush1.bf16.msra.mxu0 %v1728
    %2217 = vmatprep.subr.bf16.mxu0 %v1737
    %2218 = vmatpush1.bf16.msra.mxu0 %v1736
    %2219 = vmatprep.subr.bf16.mxu0 %v1745
    %2220 = vmatpush1.bf16.msra.mxu0 %v1744
    %2221 = vmatprep.subr.bf16.mxu0 %v1753
    %2222 = vmatpush1.bf16.msra.mxu0 %v1752
    %2223 = vmatprep.subr.bf16.mxu0 %v1761
    %2224 = vmatpush1.bf16.msra.mxu0 %v1760
    %2225 = vmatprep.mubr.bf16.mxu0 %v545
    %2226 = vmatmul.mubr.bf16.gmra.mrb[0].mxu0 %v544
    %v2227 = vpop.f32.mrb[0].mxu0
    %v2228 = vadd.f32 %v2187, %v2227
    %v2229 = vpop.f32.mrb[0].mxu0
    %v2230 = vadd.f32 %v2189, %v2229
    %v2231 = vpop.f32.mrb[0].mxu0
    %v2232 = vpop.f32.mrb[0].mxu0
    %2233 = vdwg.mxu0
    %2234 = vmatprep.subr.bf16.mxu0 %v1769
    %2235 = vmatpush1.bf16.msra.mxu0 %v1768
    %2236 = vmatprep.subr.bf16.mxu0 %v1777
    %2237 = vmatpush1.bf16.msra.mxu0 %v1776
    %2238 = vmatprep.subr.bf16.mxu0 %v1785
    %2239 = vmatpush1.bf16.msra.mxu0 %v1784
    %2240 = vmatprep.subr.bf16.mxu0 %v1793
    %2241 = vmatpush1.bf16.msra.mxu0 %v1792
    %2242 = vmatprep.subr.bf16.mxu0 %v1801
    %2243 = vmatpush1.bf16.msra.mxu0 %v1800
    %2244 = vmatprep.subr.bf16.mxu0 %v1809
    %2245 = vmatpush1.bf16.msra.mxu0 %v1808
    %2246 = vmatprep.subr.bf16.mxu0 %v1817
    %2247 = vmatpush1.bf16.msra.mxu0 %v1816
    %2248 = vmatprep.subr.bf16.mxu0 %v1825
    %2249 = vmatpush1.bf16.msra.mxu0 %v1824
    %2250 = vmatprep.subr.bf16.mxu0 0
    %2251 = vmatpush1.bf16.msra.mxu0 0
    %2252 = vmatprep.subr.bf16.mxu0 0
    %2253 = vmatpush1.bf16.msra.mxu0 0
    %2254 = vmatprep.subr.bf16.mxu0 0
    %2255 = vmatpush1.bf16.msra.mxu0 0
    %2256 = vmatprep.subr.bf16.mxu0 0
    %2257 = vmatpush1.bf16.msra.mxu0 0
    %2258 = vmatprep.subr.bf16.mxu0 0
    %2259 = vmatpush1.bf16.msra.mxu0 0
    %2260 = vmatprep.subr.bf16.mxu0 0
    %2261 = vmatpush1.bf16.msra.mxu0 0
    %2262 = vmatprep.subr.bf16.mxu0 0
    %2263 = vmatpush1.bf16.msra.mxu0 0
    %2264 = vmatprep.subr.bf16.mxu0 0
    %2265 = vmatpush1.bf16.msra.mxu0 0
    %2266 = vmatprep.mubr.bf16.mxu0 0
    %2267 = vmatmul.mubr.bf16.gmra.mrb[0].mxu0 %v546
    %v2268 = vpop.f32.mrb[0].mxu0
    %v2269 = vadd.f32 %v2228, %v2268
    %v2270 = vpop.f32.mrb[0].mxu0
    %v2271 = vadd.f32 %v2230, %v2270
    %v2272 = vpop.f32.mrb[0].mxu0
    %v2273 = vpop.f32.mrb[0].mxu0
    %2274 = vdwg.mxu0
    %2275 = vmatprep.subr.bf16.mxu0 %v1515
    %2276 = vmatpush1.bf16.msra.mxu0 %v1514
    %2277 = vmatprep.subr.bf16.mxu0 %v1523
    %2278 = vmatpush1.bf16.msra.mxu0 %v1522
    %2279 = vmatprep.subr.bf16.mxu0 %v1531
    %2280 = vmatpush1.bf16.msra.mxu0 %v1530
    %2281 = vmatprep.subr.bf16.mxu0 %v1539
    %2282 = vmatpush1.bf16.msra.mxu0 %v1538
    %2283 = vmatprep.subr.bf16.mxu0 %v1547
    %2284 = vmatpush1.bf16.msra.mxu0 %v1546
    %2285 = vmatprep.subr.bf16.mxu0 %v1555
    %2286 = vmatpush1.bf16.msra.mxu0 %v1554
    %2287 = vmatprep.subr.bf16.mxu0 %v1563
    %2288 = vmatpush1.bf16.msra.mxu0 %v1562
    %2289 = vmatprep.subr.bf16.mxu0 %v1571
    %2290 = vmatpush1.bf16.msra.mxu0 %v1570
    %2291 = vmatprep.subr.bf16.mxu0 %v1579
    %2292 = vmatpush1.bf16.msra.mxu0 %v1578
    %2293 = vmatprep.subr.bf16.mxu0 %v1587
    %2294 = vmatpush1.bf16.msra.mxu0 %v1586
    %2295 = vmatprep.subr.bf16.mxu0 %v1595
    %2296 = vmatpush1.bf16.msra.mxu0 %v1594
    %2297 = vmatprep.subr.bf16.mxu0 %v1603
    %2298 = vmatpush1.bf16.msra.mxu0 %v1602
    %2299 = vmatprep.subr.bf16.mxu0 %v1611
    %2300 = vmatpush1.bf16.msra.mxu0 %v1610
    %2301 = vmatprep.subr.bf16.mxu0 %v1619
    %2302 = vmatpush1.bf16.msra.mxu0 %v1618
    %2303 = vmatprep.subr.bf16.mxu0 %v1627
    %2304 = vmatpush1.bf16.msra.mxu0 %v1626
    %2305 = vmatprep.subr.bf16.mxu0 %v1635
    %2306 = vmatpush1.bf16.msra.mxu0 %v1634
    %2307 = vmatprep.mubr.bf16.mxu0 %v543
    %2308 = vmatmul.mubr.bf16.gmra.mrb[0].mxu0 %v542
    %v2309 = vpop.f32.mrb[0].mxu0
    %v2310 = vadd.f32 %v505, %v2309
    %v2311 = vpop.f32.mrb[0].mxu0
    %v2312 = vadd.f32 %v509, %v2311
    %v2313 = vpop.f32.mrb[0].mxu0
    %v2314 = vpop.f32.mrb[0].mxu0
    %2315 = vdwg.mxu0
    %2316 = vmatprep.subr.bf16.mxu0 %v1643
    %2317 = vmatpush1.bf16.msra.mxu0 %v1642
    %2318 = vmatprep.subr.bf16.mxu0 %v1651
    %2319 = vmatpush1.bf16.msra.mxu0 %v1650
    %2320 = vmatprep.subr.bf16.mxu0 %v1659
    %2321 = vmatpush1.bf16.msra.mxu0 %v1658
    %2322 = vmatprep.subr.bf16.mxu0 %v1667
    %2323 = vmatpush1.bf16.msra.mxu0 %v1666
    %2324 = vmatprep.subr.bf16.mxu0 %v1675
    %2325 = vmatpush1.bf16.msra.mxu0 %v1674
    %2326 = vmatprep.subr.bf16.mxu0 %v1683
    %2327 = vmatpush1.bf16.msra.mxu0 %v1682
    %2328 = vmatprep.subr.bf16.mxu0 %v1691
    %2329 = vmatpush1.bf16.msra.mxu0 %v1690
    %2330 = vmatprep.subr.bf16.mxu0 %v1699
    %2331 = vmatpush1.bf16.msra.mxu0 %v1698
    %2332 = vmatprep.subr.bf16.mxu0 %v1707
    %2333 = vmatpush1.bf16.msra.mxu0 %v1706
    %2334 = vmatprep.subr.bf16.mxu0 %v1715
    %2335 = vmatpush1.bf16.msra.mxu0 %v1714
    %2336 = vmatprep.subr.bf16.mxu0 %v1723
    %2337 = vmatpush1.bf16.msra.mxu0 %v1722
    %2338 = vmatprep.subr.bf16.mxu0 %v1731
    %2339 = vmatpush1.bf16.msra.mxu0 %v1730
    %2340 = vmatprep.subr.bf16.mxu0 %v1739
    %2341 = vmatpush1.bf16.msra.mxu0 %v1738
    %2342 = vmatprep.subr.bf16.mxu0 %v1747
    %2343 = vmatpush1.bf16.msra.mxu0 %v1746
    %2344 = vmatprep.subr.bf16.mxu0 %v1755
    %2345 = vmatpush1.bf16.msra.mxu0 %v1754
    %2346 = vmatprep.subr.bf16.mxu0 %v1763
    %2347 = vmatpush1.bf16.msra.mxu0 %v1762
    %2348 = vmatprep.mubr.bf16.mxu0 %v545
    %2349 = vmatmul.mubr.bf16.gmra.mrb[0].mxu0 %v544
    %v2350 = vpop.f32.mrb[0].mxu0
    %v2351 = vadd.f32 %v2310, %v2350
    %v2352 = vpop.f32.mrb[0].mxu0
    %v2353 = vadd.f32 %v2312, %v2352
    %v2354 = vpop.f32.mrb[0].mxu0
    %v2355 = vpop.f32.mrb[0].mxu0
    %2356 = vdwg.mxu0
    %2357 = vmatprep.subr.bf16.mxu0 %v1771
    %2358 = vmatpush1.bf16.msra.mxu0 %v1770
    %2359 = vmatprep.subr.bf16.mxu0 %v1779
    %2360 = vmatpush1.bf16.msra.mxu0 %v1778
    %2361 = vmatprep.subr.bf16.mxu0 %v1787
    %2362 = vmatpush1.bf16.msra.mxu0 %v1786
    %2363 = vmatprep.subr.bf16.mxu0 %v1795
    %2364 = vmatpush1.bf16.msra.mxu0 %v1794
    %2365 = vmatprep.subr.bf16.mxu0 %v1803
    %2366 = vmatpush1.bf16.msra.mxu0 %v1802
    %2367 = vmatprep.subr.bf16.mxu0 %v1811
    %2368 = vmatpush1.bf16.msra.mxu0 %v1810
    %2369 = vmatprep.subr.bf16.mxu0 %v1819
    %2370 = vmatpush1.bf16.msra.mxu0 %v1818
    %2371 = vmatprep.subr.bf16.mxu0 %v1827
    %2372 = vmatpush1.bf16.msra.mxu0 %v1826
    %2373 = vmatprep.subr.bf16.mxu0 0
    %2374 = vmatpush1.bf16.msra.mxu0 0
    %2375 = vmatprep.subr.bf16.mxu0 0
    %2376 = vmatpush1.bf16.msra.mxu0 0
    %2377 = vmatprep.subr.bf16.mxu0 0
    %2378 = vmatpush1.bf16.msra.mxu0 0
    %2379 = vmatprep.subr.bf16.mxu0 0
    %2380 = vmatpush1.bf16.msra.mxu0 0
    %2381 = vmatprep.subr.bf16.mxu0 0
    %2382 = vmatpush1.bf16.msra.mxu0 0
    %2383 = vmatprep.subr.bf16.mxu0 0
    %2384 = vmatpush1.bf16.msra.mxu0 0
    %2385 = vmatprep.subr.bf16.mxu0 0
    %2386 = vmatpush1.bf16.msra.mxu0 0
    %2387 = vmatprep.subr.bf16.mxu0 0
    %2388 = vmatpush1.bf16.msra.mxu0 0
    %2389 = vmatprep.mubr.bf16.mxu0 0
    %2390 = vmatmul.mubr.bf16.gmra.mrb[0].mxu0 %v546
    %v2391 = vpop.f32.mrb[0].mxu0
    %v2392 = vadd.f32 %v2351, %v2391
    %v2393 = vpop.f32.mrb[0].mxu0
    %v2394 = vadd.f32 %v2353, %v2393
    %v2395 = vpop.f32.mrb[0].mxu0
    %v2396 = vpop.f32.mrb[0].mxu0
    %2397 = vdwg.mxu0
    %2398 = vmatprep.subr.bf16.mxu0 %v1517
    %2399 = vmatpush1.bf16.msra.mxu0 %v1516
    %2400 = vmatprep.subr.bf16.mxu0 %v1525
    %2401 = vmatpush1.bf16.msra.mxu0 %v1524
    %2402 = vmatprep.subr.bf16.mxu0 %v1533
    %2403 = vmatpush1.bf16.msra.mxu0 %v1532
    %2404 = vmatprep.subr.bf16.mxu0 %v1541
    %2405 = vmatpush1.bf16.msra.mxu0 %v1540
    %2406 = vmatprep.subr.bf16.mxu0 %v1549
    %2407 = vmatpush1.bf16.msra.mxu0 %v1548
    %2408 = vmatprep.subr.bf16.mxu0 %v1557
    %2409 = vmatpush1.bf16.msra.mxu0 %v1556
    %2410 = vmatprep.subr.bf16.mxu0 %v1565
    %2411 = vmatpush1.bf16.msra.mxu0 %v1564
    %2412 = vmatprep.subr.bf16.mxu0 %v1573
    %2413 = vmatpush1.bf16.msra.mxu0 %v1572
    %2414 = vmatprep.subr.bf16.mxu0 %v1581
    %2415 = vmatpush1.bf16.msra.mxu0 %v1580
    %2416 = vmatprep.subr.bf16.mxu0 %v1589
    %2417 = vmatpush1.bf16.msra.mxu0 %v1588
    %2418 = vmatprep.subr.bf16.mxu0 %v1597
    %2419 = vmatpush1.bf16.msra.mxu0 %v1596
    %2420 = vmatprep.subr.bf16.mxu0 %v1605
    %2421 = vmatpush1.bf16.msra.mxu0 %v1604
    %2422 = vmatprep.subr.bf16.mxu0 %v1613
    %2423 = vmatpush1.bf16.msra.mxu0 %v1612
    %2424 = vmatprep.subr.bf16.mxu0 %v1621
    %2425 = vmatpush1.bf16.msra.mxu0 %v1620
    %2426 = vmatprep.subr.bf16.mxu0 %v1629
    %2427 = vmatpush1.bf16.msra.mxu0 %v1628
    %2428 = vmatprep.subr.bf16.mxu0 %v1637
    %2429 = vmatpush1.bf16.msra.mxu0 %v1636
    %2430 = vmatprep.mubr.bf16.mxu0 %v543
    %2431 = vmatmul.mubr.bf16.gmra.mrb[0].mxu0 %v542
    %v2432 = vpop.f32.mrb[0].mxu0
    %v2433 = vadd.f32 %v513, %v2432
    %v2434 = vpop.f32.mrb[0].mxu0
    %v2435 = vadd.f32 %v517, %v2434
    %v2436 = vpop.f32.mrb[0].mxu0
    %v2437 = vpop.f32.mrb[0].mxu0
    %2438 = vdwg.mxu0
    %2439 = vmatprep.subr.bf16.mxu0 %v1645
    %2440 = vmatpush1.bf16.msra.mxu0 %v1644
    %2441 = vmatprep.subr.bf16.mxu0 %v1653
    %2442 = vmatpush1.bf16.msra.mxu0 %v1652
    %2443 = vmatprep.subr.bf16.mxu0 %v1661
    %2444 = vmatpush1.bf16.msra.mxu0 %v1660
    %2445 = vmatprep.subr.bf16.mxu0 %v1669
    %2446 = vmatpush1.bf16.msra.mxu0 %v1668
    %2447 = vmatprep.subr.bf16.mxu0 %v1677
    %2448 = vmatpush1.bf16.msra.mxu0 %v1676
    %2449 = vmatprep.subr.bf16.mxu0 %v1685
    %2450 = vmatpush1.bf16.msra.mxu0 %v1684
    %2451 = vmatprep.subr.bf16.mxu0 %v1693
    %2452 = vmatpush1.bf16.msra.mxu0 %v1692
    %2453 = vmatprep.subr.bf16.mxu0 %v1701
    %2454 = vmatpush1.bf16.msra.mxu0 %v1700
    %2455 = vmatprep.subr.bf16.mxu0 %v1709
    %2456 = vmatpush1.bf16.msra.mxu0 %v1708
    %2457 = vmatprep.subr.bf16.mxu0 %v1717
    %2458 = vmatpush1.bf16.msra.mxu0 %v1716
    %2459 = vmatprep.subr.bf16.mxu0 %v1725
    %2460 = vmatpush1.bf16.msra.mxu0 %v1724
    %2461 = vmatprep.subr.bf16.mxu0 %v1733
    %2462 = vmatpush1.bf16.msra.mxu0 %v1732
    %2463 = vmatprep.subr.bf16.mxu0 %v1741
    %2464 = vmatpush1.bf16.msra.mxu0 %v1740
    %2465 = vmatprep.subr.bf16.mxu0 %v1749
    %2466 = vmatpush1.bf16.msra.mxu0 %v1748
    %2467 = vmatprep.subr.bf16.mxu0 %v1757
    %2468 = vmatpush1.bf16.msra.mxu0 %v1756
    %2469 = vmatprep.subr.bf16.mxu0 %v1765
    %2470 = vmatpush1.bf16.msra.mxu0 %v1764
    %2471 = vmatprep.mubr.bf16.mxu0 %v545
    %2472 = vmatmul.mubr.bf16.gmra.mrb[0].mxu0 %v544
    %v2473 = vpop.f32.mrb[0].mxu0
    %v2474 = vadd.f32 %v2433, %v2473
    %v2475 = vpop.f32.mrb[0].mxu0
    %v2476 = vadd.f32 %v2435, %v2475
    %v2477 = vpop.f32.mrb[0].mxu0
    %v2478 = vpop.f32.mrb[0].mxu0
    %2479 = vdwg.mxu0
    %2480 = vmatprep.subr.bf16.mxu0 %v1773
    %2481 = vmatpush1.bf16.msra.mxu0 %v1772
    %2482 = vmatprep.subr.bf16.mxu0 %v1781
    %2483 = vmatpush1.bf16.msra.mxu0 %v1780
    %2484 = vmatprep.subr.bf16.mxu0 %v1789
    %2485 = vmatpush1.bf16.msra.mxu0 %v1788
    %2486 = vmatprep.subr.bf16.mxu0 %v1797
    %2487 = vmatpush1.bf16.msra.mxu0 %v1796
    %2488 = vmatprep.subr.bf16.mxu0 %v1805
    %2489 = vmatpush1.bf16.msra.mxu0 %v1804
    %2490 = vmatprep.subr.bf16.mxu0 %v1813
    %2491 = vmatpush1.bf16.msra.mxu0 %v1812
    %2492 = vmatprep.subr.bf16.mxu0 %v1821
    %2493 = vmatpush1.bf16.msra.mxu0 %v1820
    %2494 = vmatprep.subr.bf16.mxu0 %v1829
    %2495 = vmatpush1.bf16.msra.mxu0 %v1828
    %2496 = vmatprep.subr.bf16.mxu0 0
    %2497 = vmatpush1.bf16.msra.mxu0 0
    %2498 = vmatprep.subr.bf16.mxu0 0
    %2499 = vmatpush1.bf16.msra.mxu0 0
    %2500 = vmatprep.subr.bf16.mxu0 0
    %2501 = vmatpush1.bf16.msra.mxu0 0
    %2502 = vmatprep.subr.bf16.mxu0 0
    %2503 = vmatpush1.bf16.msra.mxu0 0
    %2504 = vmatprep.subr.bf16.mxu0 0
    %2505 = vmatpush1.bf16.msra.mxu0 0
    %2506 = vmatprep.subr.bf16.mxu0 0
    %2507 = vmatpush1.bf16.msra.mxu0 0
    %2508 = vmatprep.subr.bf16.mxu0 0
    %2509 = vmatpush1.bf16.msra.mxu0 0
    %2510 = vmatprep.subr.bf16.mxu0 0
    %2511 = vmatpush1.bf16.msra.mxu0 0
    %2512 = vmatprep.mubr.bf16.mxu0 0
    %2513 = vmatmul.mubr.bf16.gmra.mrb[0].mxu0 %v546
    %v2514 = vpop.f32.mrb[0].mxu0
    %v2515 = vadd.f32 %v2474, %v2514
    %v2516 = vpop.f32.mrb[0].mxu0
    %v2517 = vadd.f32 %v2476, %v2516
    %v2518 = vpop.f32.mrb[0].mxu0
    %v2519 = vpop.f32.mrb[0].mxu0
    %2520 = vdwg.mxu0
    %2521 = vmatprep.subr.bf16.mxu0 %v1519
    %2522 = vmatpush1.bf16.msra.mxu0 %v1518
    %2523 = vmatprep.subr.bf16.mxu0 %v1527
    %2524 = vmatpush1.bf16.msra.mxu0 %v1526
    %2525 = vmatprep.subr.bf16.mxu0 %v1535
    %2526 = vmatpush1.bf16.msra.mxu0 %v1534
    %2527 = vmatprep.subr.bf16.mxu0 %v1543
    %2528 = vmatpush1.bf16.msra.mxu0 %v1542
    %2529 = vmatprep.subr.bf16.mxu0 %v1551
    %2530 = vmatpush1.bf16.msra.mxu0 %v1550
    %2531 = vmatprep.subr.bf16.mxu0 %v1559
    %2532 = vmatpush1.bf16.msra.mxu0 %v1558
    %2533 = vmatprep.subr.bf16.mxu0 %v1567
    %2534 = vmatpush1.bf16.msra.mxu0 %v1566
    %2535 = vmatprep.subr.bf16.mxu0 %v1575
    %2536 = vmatpush1.bf16.msra.mxu0 %v1574
    %2537 = vmatprep.subr.bf16.mxu0 %v1583
    %2538 = vmatpush1.bf16.msra.mxu0 %v1582
    %2539 = vmatprep.subr.bf16.mxu0 %v1591
    %2540 = vmatpush1.bf16.msra.mxu0 %v1590
    %2541 = vmatprep.subr.bf16.mxu0 %v1599
    %2542 = vmatpush1.bf16.msra.mxu0 %v1598
    %2543 = vmatprep.subr.bf16.mxu0 %v1607
    %2544 = vmatpush1.bf16.msra.mxu0 %v1606
    %2545 = vmatprep.subr.bf16.mxu0 %v1615
    %2546 = vmatpush1.bf16.msra.mxu0 %v1614
    %2547 = vmatprep.subr.bf16.mxu0 %v1623
    %2548 = vmatpush1.bf16.msra.mxu0 %v1622
    %2549 = vmatprep.subr.bf16.mxu0 %v1631
    %2550 = vmatpush1.bf16.msra.mxu0 %v1630
    %2551 = vmatprep.subr.bf16.mxu0 %v1639
    %2552 = vmatpush1.bf16.msra.mxu0 %v1638
    %2553 = vmatprep.mubr.bf16.mxu0 %v543
    %2554 = vmatmul.mubr.bf16.gmra.mrb[0].mxu0 %v542
    %v2555 = vpop.f32.mrb[0].mxu0
    %v2556 = vadd.f32 %v521, %v2555
    %v2557 = vpop.f32.mrb[0].mxu0
    %v2558 = vadd.f32 %v525, %v2557
    %v2559 = vpop.f32.mrb[0].mxu0
    %v2560 = vpop.f32.mrb[0].mxu0
    %2561 = vdwg.mxu0
    %2562 = vmatprep.subr.bf16.mxu0 %v1647
    %2563 = vmatpush1.bf16.msra.mxu0 %v1646
    %2564 = vmatprep.subr.bf16.mxu0 %v1655
    %2565 = vmatpush1.bf16.msra.mxu0 %v1654
    %2566 = vmatprep.subr.bf16.mxu0 %v1663
    %2567 = vmatpush1.bf16.msra.mxu0 %v1662
    %2568 = vmatprep.subr.bf16.mxu0 %v1671
    %2569 = vmatpush1.bf16.msra.mxu0 %v1670
    %2570 = vmatprep.subr.bf16.mxu0 %v1679
    %2571 = vmatpush1.bf16.msra.mxu0 %v1678
    %2572 = vmatprep.subr.bf16.mxu0 %v1687
    %2573 = vmatpush1.bf16.msra.mxu0 %v1686
    %2574 = vmatprep.subr.bf16.mxu0 %v1695
    %2575 = vmatpush1.bf16.msra.mxu0 %v1694
    %2576 = vmatprep.subr.bf16.mxu0 %v1703
    %2577 = vmatpush1.bf16.msra.mxu0 %v1702
    %2578 = vmatprep.subr.bf16.mxu0 %v1711
    %2579 = vmatpush1.bf16.msra.mxu0 %v1710
    %2580 = vmatprep.subr.bf16.mxu0 %v1719
    %2581 = vmatpush1.bf16.msra.mxu0 %v1718
    %2582 = vmatprep.subr.bf16.mxu0 %v1727
    %2583 = vmatpush1.bf16.msra.mxu0 %v1726
    %2584 = vmatprep.subr.bf16.mxu0 %v1735
    %2585 = vmatpush1.bf16.msra.mxu0 %v1734
    %2586 = vmatprep.subr.bf16.mxu0 %v1743
    %2587 = vmatpush1.bf16.msra.mxu0 %v1742
    %2588 = vmatprep.subr.bf16.mxu0 %v1751
    %2589 = vmatpush1.bf16.msra.mxu0 %v1750
    %2590 = vmatprep.subr.bf16.mxu0 %v1759
    %2591 = vmatpush1.bf16.msra.mxu0 %v1758
    %2592 = vmatprep.subr.bf16.mxu0 %v1767
    %2593 = vmatpush1.bf16.msra.mxu0 %v1766
    %2594 = vmatprep.mubr.bf16.mxu0 %v545
    %2595 = vmatmul.mubr.bf16.gmra.mrb[0].mxu0 %v544
    %v2596 = vpop.f32.mrb[0].mxu0
    %v2597 = vadd.f32 %v2556, %v2596
    %v2598 = vpop.f32.mrb[0].mxu0
    %v2599 = vadd.f32 %v2558, %v2598
    %v2600 = vpop.f32.mrb[0].mxu0
    %v2601 = vpop.f32.mrb[0].mxu0
    %2602 = vdwg.mxu0
    %2603 = vmatprep.subr.bf16.mxu0 %v1775
    %2604 = vmatpush1.bf16.msra.mxu0 %v1774
    %2605 = vmatprep.subr.bf16.mxu0 %v1783
    %2606 = vmatpush1.bf16.msra.mxu0 %v1782
    %2607 = vmatprep.subr.bf16.mxu0 %v1791
    %2608 = vmatpush1.bf16.msra.mxu0 %v1790
    %2609 = vmatprep.subr.bf16.mxu0 %v1799
    %2610 = vmatpush1.bf16.msra.mxu0 %v1798
    %2611 = vmatprep.subr.bf16.mxu0 %v1807
    %2612 = vmatpush1.bf16.msra.mxu0 %v1806
    %2613 = vmatprep.subr.bf16.mxu0 %v1815
    %2614 = vmatpush1.bf16.msra.mxu0 %v1814
    %2615 = vmatprep.subr.bf16.mxu0 %v1823
    %2616 = vmatpush1.bf16.msra.mxu0 %v1822
    %2617 = vmatprep.subr.bf16.mxu0 %v1831
    %2618 = vmatpush1.bf16.msra.mxu0 %v1830
    %2619 = vmatprep.subr.bf16.mxu0 0
    %2620 = vmatpush1.bf16.msra.mxu0 0
    %2621 = vmatprep.subr.bf16.mxu0 0
    %2622 = vmatpush1.bf16.msra.mxu0 0
    %2623 = vmatprep.subr.bf16.mxu0 0
    %2624 = vmatpush1.bf16.msra.mxu0 0
    %2625 = vmatprep.subr.bf16.mxu0 0
    %2626 = vmatpush1.bf16.msra.mxu0 0
    %2627 = vmatprep.subr.bf16.mxu0 0
    %2628 = vmatpush1.bf16.msra.mxu0 0
    %2629 = vmatprep.subr.bf16.mxu0 0
    %2630 = vmatpush1.bf16.msra.mxu0 0
    %2631 = vmatprep.subr.bf16.mxu0 0
    %2632 = vmatpush1.bf16.msra.mxu0 0
    %2633 = vmatprep.subr.bf16.mxu0 0
    %2634 = vmatpush1.bf16.msra.mxu0 0
    %2635 = vmatprep.mubr.bf16.mxu0 0
    %2636 = vmatmul.mubr.bf16.gmra.mrb[0].mxu0 %v546
    %v2637 = vpop.f32.mrb[0].mxu0
    %v2638 = vadd.f32 %v2597, %v2637
    %v2639 = vpop.f32.mrb[0].mxu0
    %v2640 = vadd.f32 %v2599, %v2639
    %v2641 = vpop.f32.mrb[0].mxu0
    %v2642 = vpop.f32.mrb[0].mxu0
    %2643 = vdwg.mxu0
    %v2644 = vtanh.pop %v2269
    %v2645 = vtanh.pop %v2271
    %v2646 = vtanh.pop %v2392
    %v2647 = vtanh.pop %v2394
    %v2648 = vtanh.pop %v2515
    %v2649 = vtanh.pop %v2517
    %v2650 = vtanh.pop %v2638
    %v2651 = vtanh.pop %v2640
    %v2652 = vpack.c.bf16 %v2644, %v2644
    %v2653 = vpack.c.bf16 %v2645, %v2645
    %v2654 = vpack.c.bf16 %v2646, %v2646
    %v2655 = vpack.c.bf16 %v2647, %v2647
    %v2656 = vpack.c.bf16 %v2648, %v2648
    %v2657 = vpack.c.bf16 %v2649, %v2649
    %v2658 = vpack.c.bf16 %v2650, %v2650
    %v2659 = vpack.c.bf16 %v2651, %v2651
    %v2660 = vld [vmem:[#allocation7] sm:$0xff]
    %v2661 = vld [vmem:[#allocation7 + $0x8] sm:$0xff]
    %v2662 = vld [vmem:[#allocation7 + $0x10] sm:$0xff]
    %v2663 = vld [vmem:[#allocation7 + $0x18] sm:$0xff]
    %v2664 = vld [vmem:[#allocation7 + $0x20] sm:$0xff]
    %v2665 = vld [vmem:[#allocation7 + $0x28] sm:$0xff]
    %v2666 = vld [vmem:[#allocation7 + $0x30] sm:$0xff]
    %v2667 = vld [vmem:[#allocation7 + $0x38] sm:$0xff]
    %v2668 = vld [vmem:[#allocation7 + $0x40] sm:$0xff]
    %v2669 = vld [vmem:[#allocation7 + $0x48] sm:$0xff]
    %v2670 = vld [vmem:[#allocation7 + $0x50] sm:$0xff]
    %v2671 = vld [vmem:[#allocation7 + $0x58] sm:$0xff]
    %v2672 = vld [vmem:[#allocation7 + $0x60] sm:$0xff]
    %v2673 = vld [vmem:[#allocation7 + $0x68] sm:$0xff]
    %v2674 = vld [vmem:[#allocation7 + $0x70] sm:$0xff]
    %v2675 = vld [vmem:[#allocation7 + $0x78] sm:$0xff]
    %v2676 = vld [vmem:[#allocation7 + $0x80] sm:$0xff]
    %v2677 = vld [vmem:[#allocation7 + $0x88] sm:$0xff]
    %v2678 = vld [vmem:[#allocation7 + $0x90] sm:$0xff]
    %v2679 = vld [vmem:[#allocation7 + $0x98] sm:$0xff]
    %v2680 = vld [vmem:[#allocation7 + $0xa0] sm:$0xff]
    %v2681 = vld [vmem:[#allocation7 + $0xa8] sm:$0xff]
    %v2682 = vld [vmem:[#allocation7 + $0xb0] sm:$0xff]
    %v2683 = vld [vmem:[#allocation7 + $0xb8] sm:$0xff]
    %v2684 = vld [vmem:[#allocation7 + $0xc0] sm:$0xff]
    %v2685 = vld [vmem:[#allocation7 + $0xc8] sm:$0xff]
    %v2686 = vld [vmem:[#allocation7 + $0xd0] sm:$0xff]
    %v2687 = vld [vmem:[#allocation7 + $0xd8] sm:$0xff]
    %v2688 = vld [vmem:[#allocation7 + $0xe0] sm:$0xff]
    %v2689 = vld [vmem:[#allocation7 + $0xe8] sm:$0xff]
    %v2690 = vld [vmem:[#allocation7 + $0xf0] sm:$0xff]
    %v2691 = vld [vmem:[#allocation7 + $0xf8] sm:$0xff]
    %v2692 = vld [vmem:[#allocation7 + $0x100] sm:$0xff]
    %v2693 = vld [vmem:[#allocation7 + $0x108] sm:$0xff]
    %v2694 = vld [vmem:[#allocation7 + $0x110] sm:$0xff]
    %v2695 = vld [vmem:[#allocation7 + $0x118] sm:$0xff]
    %v2696 = vld [vmem:[#allocation7 + $0x120] sm:$0xff]
    %v2697 = vld [vmem:[#allocation7 + $0x128] sm:$0xff]
    %v2698 = vld [vmem:[#allocation7 + $0x130] sm:$0xff]
    %v2699 = vld [vmem:[#allocation7 + $0x138] sm:$0xff]
    %v2700 = vld [vmem:[#allocation7 + $0x140] sm:$0xff]
    %v2701 = vld [vmem:[#allocation7 + $0x148] sm:$0xff]
    %v2702 = vld [vmem:[#allocation7 + $0x150] sm:$0xff]
    %v2703 = vld [vmem:[#allocation7 + $0x158] sm:$0xff]
    %v2704 = vld [vmem:[#allocation7 + $0x160] sm:$0xff]
    %v2705 = vld [vmem:[#allocation7 + $0x168] sm:$0xff]
    %v2706 = vld [vmem:[#allocation7 + $0x170] sm:$0xff]
    %v2707 = vld [vmem:[#allocation7 + $0x178] sm:$0xff]
    %v2708 = vld [vmem:[#allocation7 + $0x180] sm:$0xff]
    %v2709 = vld [vmem:[#allocation7 + $0x188] sm:$0xff]
    %v2710 = vld [vmem:[#allocation7 + $0x190] sm:$0xff]
    %v2711 = vld [vmem:[#allocation7 + $0x198] sm:$0xff]
    %v2712 = vld [vmem:[#allocation7 + $0x1a0] sm:$0xff]
    %v2713 = vld [vmem:[#allocation7 + $0x1a8] sm:$0xff]
    %v2714 = vld [vmem:[#allocation7 + $0x1b0] sm:$0xff]
    %v2715 = vld [vmem:[#allocation7 + $0x1b8] sm:$0xff]
    %v2716 = vld [vmem:[#allocation7 + $0x1c0] sm:$0xff]
    %v2717 = vld [vmem:[#allocation7 + $0x1c8] sm:$0xff]
    %v2718 = vld [vmem:[#allocation7 + $0x1d0] sm:$0xff]
    %v2719 = vld [vmem:[#allocation7 + $0x1d8] sm:$0xff]
    %v2720 = vld [vmem:[#allocation7 + $0x1e0] sm:$0xff]
    %v2721 = vld [vmem:[#allocation7 + $0x1e8] sm:$0xff]
    %v2722 = vld [vmem:[#allocation7 + $0x1f0] sm:$0xff]
    %v2723 = vld [vmem:[#allocation7 + $0x1f8] sm:$0xff]
    %v2724 = vld [vmem:[#allocation7 + $0x200] sm:$0xff]
    %v2725 = vld [vmem:[#allocation7 + $0x208] sm:$0xff]
    %v2726 = vld [vmem:[#allocation7 + $0x210] sm:$0xff]
    %v2727 = vld [vmem:[#allocation7 + $0x218] sm:$0xff]
    %v2728 = vld [vmem:[#allocation7 + $0x220] sm:$0xff]
    %v2729 = vld [vmem:[#allocation7 + $0x228] sm:$0xff]
    %v2730 = vld [vmem:[#allocation7 + $0x230] sm:$0xff]
    %v2731 = vld [vmem:[#allocation7 + $0x238] sm:$0xff]
    %v2732 = vld [vmem:[#allocation7 + $0x240] sm:$0xff]
    %v2733 = vld [vmem:[#allocation7 + $0x248] sm:$0xff]
    %v2734 = vld [vmem:[#allocation7 + $0x250] sm:$0xff]
    %v2735 = vld [vmem:[#allocation7 + $0x258] sm:$0xff]
    %v2736 = vld [vmem:[#allocation7 + $0x260] sm:$0xff]
    %v2737 = vld [vmem:[#allocation7 + $0x268] sm:$0xff]
    %v2738 = vld [vmem:[#allocation7 + $0x270] sm:$0xff]
    %v2739 = vld [vmem:[#allocation7 + $0x278] sm:$0xff]
    %v2740 = vld [vmem:[#allocation7 + $0x280] sm:$0xff]
    %v2741 = vld [vmem:[#allocation7 + $0x288] sm:$0xff]
    %v2742 = vld [vmem:[#allocation7 + $0x290] sm:$0xff]
    %v2743 = vld [vmem:[#allocation7 + $0x298] sm:$0xff]
    %v2744 = vld [vmem:[#allocation7 + $0x2a0] sm:$0xff]
    %v2745 = vld [vmem:[#allocation7 + $0x2a8] sm:$0xff]
    %v2746 = vld [vmem:[#allocation7 + $0x2b0] sm:$0xff]
    %v2747 = vld [vmem:[#allocation7 + $0x2b8] sm:$0xff]
    %v2748 = vld [vmem:[#allocation7 + $0x2c0] sm:$0xff]
    %v2749 = vld [vmem:[#allocation7 + $0x2c8] sm:$0xff]
    %v2750 = vld [vmem:[#allocation7 + $0x2d0] sm:$0xff]
    %v2751 = vld [vmem:[#allocation7 + $0x2d8] sm:$0xff]
    %v2752 = vld [vmem:[#allocation7 + $0x2e0] sm:$0xff]
    %v2753 = vld [vmem:[#allocation7 + $0x2e8] sm:$0xff]
    %v2754 = vld [vmem:[#allocation7 + $0x2f0] sm:$0xff]
    %v2755 = vld [vmem:[#allocation7 + $0x2f8] sm:$0xff]
    %v2756 = vld [vmem:[#allocation7 + $0x300] sm:$0xff]
    %v2757 = vld [vmem:[#allocation7 + $0x308] sm:$0xff]
    %v2758 = vld [vmem:[#allocation7 + $0x310] sm:$0xff]
    %v2759 = vld [vmem:[#allocation7 + $0x318] sm:$0xff]
    %v2760 = vld [vmem:[#allocation7 + $0x320] sm:$0xff]
    %v2761 = vld [vmem:[#allocation7 + $0x328] sm:$0xff]
    %v2762 = vld [vmem:[#allocation7 + $0x330] sm:$0xff]
    %v2763 = vld [vmem:[#allocation7 + $0x338] sm:$0xff]
    %v2764 = vld [vmem:[#allocation7 + $0x340] sm:$0xff]
    %v2765 = vld [vmem:[#allocation7 + $0x348] sm:$0xff]
    %v2766 = vld [vmem:[#allocation7 + $0x350] sm:$0xff]
    %v2767 = vld [vmem:[#allocation7 + $0x358] sm:$0xff]
    %v2768 = vld [vmem:[#allocation7 + $0x360] sm:$0xff]
    %v2769 = vld [vmem:[#allocation7 + $0x368] sm:$0xff]
    %v2770 = vld [vmem:[#allocation7 + $0x370] sm:$0xff]
    %v2771 = vld [vmem:[#allocation7 + $0x378] sm:$0xff]
    %v2772 = vld [vmem:[#allocation7 + $0x380] sm:$0xff]
    %v2773 = vld [vmem:[#allocation7 + $0x388] sm:$0xff]
    %v2774 = vld [vmem:[#allocation7 + $0x390] sm:$0xff]
    %v2775 = vld [vmem:[#allocation7 + $0x398] sm:$0xff]
    %v2776 = vld [vmem:[#allocation7 + $0x3a0] sm:$0xff]
    %v2777 = vld [vmem:[#allocation7 + $0x3a8] sm:$0xff]
    %v2778 = vld [vmem:[#allocation7 + $0x3b0] sm:$0xff]
    %v2779 = vld [vmem:[#allocation7 + $0x3b8] sm:$0xff]
    %v2780 = vld [vmem:[#allocation7 + $0x3c0] sm:$0xff]
    %v2781 = vld [vmem:[#allocation7 + $0x3c8] sm:$0xff]
    %v2782 = vld [vmem:[#allocation7 + $0x3d0] sm:$0xff]
    %v2783 = vld [vmem:[#allocation7 + $0x3d8] sm:$0xff]
    %v2784 = vld [vmem:[#allocation7 + $0x3e0] sm:$0xff]
    %v2785 = vld [vmem:[#allocation7 + $0x3e8] sm:$0xff]
    %v2786 = vld [vmem:[#allocation7 + $0x3f0] sm:$0xff]
    %v2787 = vld [vmem:[#allocation7 + $0x3f8] sm:$0xff]
    %v2788 = vld [vmem:[#allocation7 + $0x400] sm:$0xff]
    %v2789 = vld [vmem:[#allocation7 + $0x408] sm:$0xff]
    %v2790 = vld [vmem:[#allocation7 + $0x410] sm:$0xff]
    %v2791 = vld [vmem:[#allocation7 + $0x418] sm:$0xff]
    %v2792 = vld [vmem:[#allocation7 + $0x420] sm:$0xff]
    %v2793 = vld [vmem:[#allocation7 + $0x428] sm:$0xff]
    %v2794 = vld [vmem:[#allocation7 + $0x430] sm:$0xff]
    %v2795 = vld [vmem:[#allocation7 + $0x438] sm:$0xff]
    %v2796 = vld [vmem:[#allocation7 + $0x440] sm:$0xff]
    %v2797 = vld [vmem:[#allocation7 + $0x448] sm:$0xff]
    %v2798 = vld [vmem:[#allocation7 + $0x450] sm:$0xff]
    %v2799 = vld [vmem:[#allocation7 + $0x458] sm:$0xff]
    %v2800 = vld [vmem:[#allocation7 + $0x460] sm:$0xff]
    %v2801 = vld [vmem:[#allocation7 + $0x468] sm:$0xff]
    %v2802 = vld [vmem:[#allocation7 + $0x470] sm:$0xff]
    %v2803 = vld [vmem:[#allocation7 + $0x478] sm:$0xff]
    %v2804 = vld [vmem:[#allocation7 + $0x480] sm:$0xff]
    %v2805 = vld [vmem:[#allocation7 + $0x488] sm:$0xff]
    %v2806 = vld [vmem:[#allocation7 + $0x490] sm:$0xff]
    %v2807 = vld [vmem:[#allocation7 + $0x498] sm:$0xff]
    %v2808 = vld [vmem:[#allocation7 + $0x4a0] sm:$0xff]
    %v2809 = vld [vmem:[#allocation7 + $0x4a8] sm:$0xff]
    %v2810 = vld [vmem:[#allocation7 + $0x4b0] sm:$0xff]
    %v2811 = vld [vmem:[#allocation7 + $0x4b8] sm:$0xff]
    %v2812 = vld [vmem:[#allocation7 + $0x4c0] sm:$0xff]
    %v2813 = vld [vmem:[#allocation7 + $0x4c8] sm:$0xff]
    %v2814 = vld [vmem:[#allocation7 + $0x4d0] sm:$0xff]
    %v2815 = vld [vmem:[#allocation7 + $0x4d8] sm:$0xff]
    %v2816 = vld [vmem:[#allocation7 + $0x4e0] sm:$0xff]
    %v2817 = vld [vmem:[#allocation7 + $0x4e8] sm:$0xff]
    %v2818 = vld [vmem:[#allocation7 + $0x4f0] sm:$0xff]
    %v2819 = vld [vmem:[#allocation7 + $0x4f8] sm:$0xff]
    %v2820 = vld [vmem:[#allocation7 + $0x500] sm:$0xff]
    %v2821 = vld [vmem:[#allocation7 + $0x508] sm:$0xff]
    %v2822 = vld [vmem:[#allocation7 + $0x510] sm:$0xff]
    %v2823 = vld [vmem:[#allocation7 + $0x518] sm:$0xff]
    %v2824 = vld [vmem:[#allocation7 + $0x520] sm:$0xff]
    %v2825 = vld [vmem:[#allocation7 + $0x528] sm:$0xff]
    %v2826 = vld [vmem:[#allocation7 + $0x530] sm:$0xff]
    %v2827 = vld [vmem:[#allocation7 + $0x538] sm:$0xff]
    %v2828 = vld [vmem:[#allocation7 + $0x540] sm:$0xff]
    %v2829 = vld [vmem:[#allocation7 + $0x548] sm:$0xff]
    %v2830 = vld [vmem:[#allocation7 + $0x550] sm:$0xff]
    %v2831 = vld [vmem:[#allocation7 + $0x558] sm:$0xff]
    %v2832 = vld [vmem:[#allocation7 + $0x560] sm:$0xff]
    %v2833 = vld [vmem:[#allocation7 + $0x568] sm:$0xff]
    %v2834 = vld [vmem:[#allocation7 + $0x570] sm:$0xff]
    %v2835 = vld [vmem:[#allocation7 + $0x578] sm:$0xff]
    %v2836 = vld [vmem:[#allocation7 + $0x580] sm:$0xff]
    %v2837 = vld [vmem:[#allocation7 + $0x588] sm:$0xff]
    %v2838 = vld [vmem:[#allocation7 + $0x590] sm:$0xff]
    %v2839 = vld [vmem:[#allocation7 + $0x598] sm:$0xff]
    %v2840 = vld [vmem:[#allocation7 + $0x5a0] sm:$0xff]
    %v2841 = vld [vmem:[#allocation7 + $0x5a8] sm:$0xff]
    %v2842 = vld [vmem:[#allocation7 + $0x5b0] sm:$0xff]
    %v2843 = vld [vmem:[#allocation7 + $0x5b8] sm:$0xff]
    %v2844 = vld [vmem:[#allocation7 + $0x5c0] sm:$0xff]
    %v2845 = vld [vmem:[#allocation7 + $0x5c8] sm:$0xff]
    %v2846 = vld [vmem:[#allocation7 + $0x5d0] sm:$0xff]
    %v2847 = vld [vmem:[#allocation7 + $0x5d8] sm:$0xff]
    %v2848 = vld [vmem:[#allocation7 + $0x5e0] sm:$0xff]
    %v2849 = vld [vmem:[#allocation7 + $0x5e8] sm:$0xff]
    %v2850 = vld [vmem:[#allocation7 + $0x5f0] sm:$0xff]
    %v2851 = vld [vmem:[#allocation7 + $0x5f8] sm:$0xff]
    %v2852 = vld [vmem:[#allocation7 + $0x600] sm:$0xff]
    %v2853 = vld [vmem:[#allocation7 + $0x608] sm:$0xff]
    %v2854 = vld [vmem:[#allocation7 + $0x610] sm:$0xff]
    %v2855 = vld [vmem:[#allocation7 + $0x618] sm:$0xff]
    %v2856 = vld [vmem:[#allocation7 + $0x620] sm:$0xff]
    %v2857 = vld [vmem:[#allocation7 + $0x628] sm:$0xff]
    %v2858 = vld [vmem:[#allocation7 + $0x630] sm:$0xff]
    %v2859 = vld [vmem:[#allocation7 + $0x638] sm:$0xff]
    %v2860 = vld [vmem:[#allocation7 + $0x640] sm:$0xff]
    %v2861 = vld [vmem:[#allocation7 + $0x648] sm:$0xff]
    %v2862 = vld [vmem:[#allocation7 + $0x650] sm:$0xff]
    %v2863 = vld [vmem:[#allocation7 + $0x658] sm:$0xff]
    %v2864 = vld [vmem:[#allocation7 + $0x660] sm:$0xff]
    %v2865 = vld [vmem:[#allocation7 + $0x668] sm:$0xff]
    %v2866 = vld [vmem:[#allocation7 + $0x670] sm:$0xff]
    %v2867 = vld [vmem:[#allocation7 + $0x678] sm:$0xff]
    %v2868 = vld [vmem:[#allocation7 + $0x680] sm:$0xff]
    %v2869 = vld [vmem:[#allocation7 + $0x688] sm:$0xff]
    %v2870 = vld [vmem:[#allocation7 + $0x690] sm:$0xff]
    %v2871 = vld [vmem:[#allocation7 + $0x698] sm:$0xff]
    %v2872 = vld [vmem:[#allocation7 + $0x6a0] sm:$0xff]
    %v2873 = vld [vmem:[#allocation7 + $0x6a8] sm:$0xff]
    %v2874 = vld [vmem:[#allocation7 + $0x6b0] sm:$0xff]
    %v2875 = vld [vmem:[#allocation7 + $0x6b8] sm:$0xff]
    %v2876 = vld [vmem:[#allocation7 + $0x6c0] sm:$0xff]
    %v2877 = vld [vmem:[#allocation7 + $0x6c8] sm:$0xff]
    %v2878 = vld [vmem:[#allocation7 + $0x6d0] sm:$0xff]
    %v2879 = vld [vmem:[#allocation7 + $0x6d8] sm:$0xff]
    %v2880 = vld [vmem:[#allocation7 + $0x6e0] sm:$0xff]
    %v2881 = vld [vmem:[#allocation7 + $0x6e8] sm:$0xff]
    %v2882 = vld [vmem:[#allocation7 + $0x6f0] sm:$0xff]
    %v2883 = vld [vmem:[#allocation7 + $0x6f8] sm:$0xff]
    %v2884 = vld [vmem:[#allocation7 + $0x700] sm:$0xff]
    %v2885 = vld [vmem:[#allocation7 + $0x708] sm:$0xff]
    %v2886 = vld [vmem:[#allocation7 + $0x710] sm:$0xff]
    %v2887 = vld [vmem:[#allocation7 + $0x718] sm:$0xff]
    %v2888 = vld [vmem:[#allocation7 + $0x720] sm:$0xff]
    %v2889 = vld [vmem:[#allocation7 + $0x728] sm:$0xff]
    %v2890 = vld [vmem:[#allocation7 + $0x730] sm:$0xff]
    %v2891 = vld [vmem:[#allocation7 + $0x738] sm:$0xff]
    %v2892 = vld [vmem:[#allocation7 + $0x740] sm:$0xff]
    %v2893 = vld [vmem:[#allocation7 + $0x748] sm:$0xff]
    %v2894 = vld [vmem:[#allocation7 + $0x750] sm:$0xff]
    %v2895 = vld [vmem:[#allocation7 + $0x758] sm:$0xff]
    %v2896 = vld [vmem:[#allocation7 + $0x760] sm:$0xff]
    %v2897 = vld [vmem:[#allocation7 + $0x768] sm:$0xff]
    %v2898 = vld [vmem:[#allocation7 + $0x770] sm:$0xff]
    %v2899 = vld [vmem:[#allocation7 + $0x778] sm:$0xff]
    %v2900 = vld [vmem:[#allocation7 + $0x780] sm:$0xff]
    %v2901 = vld [vmem:[#allocation7 + $0x788] sm:$0xff]
    %v2902 = vld [vmem:[#allocation7 + $0x790] sm:$0xff]
    %v2903 = vld [vmem:[#allocation7 + $0x798] sm:$0xff]
    %v2904 = vld [vmem:[#allocation7 + $0x7a0] sm:$0xff]
    %v2905 = vld [vmem:[#allocation7 + $0x7a8] sm:$0xff]
    %v2906 = vld [vmem:[#allocation7 + $0x7b0] sm:$0xff]
    %v2907 = vld [vmem:[#allocation7 + $0x7b8] sm:$0xff]
    %v2908 = vld [vmem:[#allocation7 + $0x7c0] sm:$0xff]
    %v2909 = vld [vmem:[#allocation7 + $0x7c8] sm:$0xff]
    %v2910 = vld [vmem:[#allocation7 + $0x7d0] sm:$0xff]
    %v2911 = vld [vmem:[#allocation7 + $0x7d8] sm:$0xff]
    %v2912 = vld [vmem:[#allocation7 + $0x7e0] sm:$0xff]
    %v2913 = vld [vmem:[#allocation7 + $0x7e8] sm:$0xff]
    %v2914 = vld [vmem:[#allocation7 + $0x7f0] sm:$0xff]
    %v2915 = vld [vmem:[#allocation7 + $0x7f8] sm:$0xff]
    %v2916 = vld [vmem:[#allocation8] sm:$0xf]
    %v2918 = vlaneseq
    %v2919 = vshrl.u32 %v2918, 7
    %v2920 = vsub.s32 0, %v2919
    %v2921 = vrot.slane %v2916, %v2920
    %v2922 = vlaneseq
    %v2923 = vshrl.u32 %v2922, 7
    %v2924 = vsub.s32 1, %v2923
    %v2925 = vrot.slane %v2916, %v2924
    %v2926 = vlaneseq
    %v2927 = vshrl.u32 %v2926, 7
    %v2928 = vsub.s32 2, %v2927
    %v2929 = vrot.slane %v2916, %v2928
    %v2930 = vlaneseq
    %v2931 = vshrl.u32 %v2930, 7
    %v2932 = vsub.s32 3, %v2931
    %v2933 = vrot.slane %v2916, %v2932
    %v3194 = vunpack.c.l.b16 %v2660
    %v3195 = vunpack.c.h.b16 %v2660
    %v3196 = vunpack.c.l.b16 %v2661
    %v3197 = vunpack.c.h.b16 %v2661
    %v3198 = vunpack.c.l.b16 %v2662
    %v3199 = vunpack.c.h.b16 %v2662
    %v3200 = vunpack.c.l.b16 %v2663
    %v3201 = vunpack.c.h.b16 %v2663
    %v3202 = vunpack.c.l.b16 %v2664
    %v3203 = vunpack.c.h.b16 %v2664
    %v3204 = vunpack.c.l.b16 %v2665
    %v3205 = vunpack.c.h.b16 %v2665
    %v3206 = vunpack.c.l.b16 %v2666
    %v3207 = vunpack.c.h.b16 %v2666
    %v3208 = vunpack.c.l.b16 %v2667
    %v3209 = vunpack.c.h.b16 %v2667
    %v3210 = vunpack.c.l.b16 %v2668
    %v3211 = vunpack.c.h.b16 %v2668
    %v3212 = vunpack.c.l.b16 %v2669
    %v3213 = vunpack.c.h.b16 %v2669
    %v3214 = vunpack.c.l.b16 %v2670
    %v3215 = vunpack.c.h.b16 %v2670
    %v3216 = vunpack.c.l.b16 %v2671
    %v3217 = vunpack.c.h.b16 %v2671
    %v3218 = vunpack.c.l.b16 %v2672
    %v3219 = vunpack.c.h.b16 %v2672
    %v3220 = vunpack.c.l.b16 %v2673
    %v3221 = vunpack.c.h.b16 %v2673
    %v3222 = vunpack.c.l.b16 %v2674
    %v3223 = vunpack.c.h.b16 %v2674
    %v3224 = vunpack.c.l.b16 %v2675
    %v3225 = vunpack.c.h.b16 %v2675
    %v3226 = vunpack.c.l.b16 %v2676
    %v3227 = vunpack.c.h.b16 %v2676
    %v3228 = vunpack.c.l.b16 %v2677
    %v3229 = vunpack.c.h.b16 %v2677
    %v3230 = vunpack.c.l.b16 %v2678
    %v3231 = vunpack.c.h.b16 %v2678
    %v3232 = vunpack.c.l.b16 %v2679
    %v3233 = vunpack.c.h.b16 %v2679
    %v3234 = vunpack.c.l.b16 %v2680
    %v3235 = vunpack.c.h.b16 %v2680
    %v3236 = vunpack.c.l.b16 %v2681
    %v3237 = vunpack.c.h.b16 %v2681
    %v3238 = vunpack.c.l.b16 %v2682
    %v3239 = vunpack.c.h.b16 %v2682
    %v3240 = vunpack.c.l.b16 %v2683
    %v3241 = vunpack.c.h.b16 %v2683
    %v3242 = vunpack.c.l.b16 %v2684
    %v3243 = vunpack.c.h.b16 %v2684
    %v3244 = vunpack.c.l.b16 %v2685
    %v3245 = vunpack.c.h.b16 %v2685
    %v3246 = vunpack.c.l.b16 %v2686
    %v3247 = vunpack.c.h.b16 %v2686
    %v3248 = vunpack.c.l.b16 %v2687
    %v3249 = vunpack.c.h.b16 %v2687
    %v3250 = vunpack.c.l.b16 %v2688
    %v3251 = vunpack.c.h.b16 %v2688
    %v3252 = vunpack.c.l.b16 %v2689
    %v3253 = vunpack.c.h.b16 %v2689
    %v3254 = vunpack.c.l.b16 %v2690
    %v3255 = vunpack.c.h.b16 %v2690
    %v3256 = vunpack.c.l.b16 %v2691
    %v3257 = vunpack.c.h.b16 %v2691
    %v3258 = vunpack.c.l.b16 %v2692
    %v3259 = vunpack.c.h.b16 %v2692
    %v3260 = vunpack.c.l.b16 %v2693
    %v3261 = vunpack.c.h.b16 %v2693
    %v3262 = vunpack.c.l.b16 %v2694
    %v3263 = vunpack.c.h.b16 %v2694
    %v3264 = vunpack.c.l.b16 %v2695
    %v3265 = vunpack.c.h.b16 %v2695
    %v3266 = vunpack.c.l.b16 %v2696
    %v3267 = vunpack.c.h.b16 %v2696
    %v3268 = vunpack.c.l.b16 %v2697
    %v3269 = vunpack.c.h.b16 %v2697
    %v3270 = vunpack.c.l.b16 %v2698
    %v3271 = vunpack.c.h.b16 %v2698
    %v3272 = vunpack.c.l.b16 %v2699
    %v3273 = vunpack.c.h.b16 %v2699
    %v3274 = vunpack.c.l.b16 %v2700
    %v3275 = vunpack.c.h.b16 %v2700
    %v3276 = vunpack.c.l.b16 %v2701
    %v3277 = vunpack.c.h.b16 %v2701
    %v3278 = vunpack.c.l.b16 %v2702
    %v3279 = vunpack.c.h.b16 %v2702
    %v3280 = vunpack.c.l.b16 %v2703
    %v3281 = vunpack.c.h.b16 %v2703
    %v3282 = vunpack.c.l.b16 %v2704
    %v3283 = vunpack.c.h.b16 %v2704
    %v3284 = vunpack.c.l.b16 %v2705
    %v3285 = vunpack.c.h.b16 %v2705
    %v3286 = vunpack.c.l.b16 %v2706
    %v3287 = vunpack.c.h.b16 %v2706
    %v3288 = vunpack.c.l.b16 %v2707
    %v3289 = vunpack.c.h.b16 %v2707
    %v3290 = vunpack.c.l.b16 %v2708
    %v3291 = vunpack.c.h.b16 %v2708
    %v3292 = vunpack.c.l.b16 %v2709
    %v3293 = vunpack.c.h.b16 %v2709
    %v3294 = vunpack.c.l.b16 %v2710
    %v3295 = vunpack.c.h.b16 %v2710
    %v3296 = vunpack.c.l.b16 %v2711
    %v3297 = vunpack.c.h.b16 %v2711
    %v3298 = vunpack.c.l.b16 %v2712
    %v3299 = vunpack.c.h.b16 %v2712
    %v3300 = vunpack.c.l.b16 %v2713
    %v3301 = vunpack.c.h.b16 %v2713
    %v3302 = vunpack.c.l.b16 %v2714
    %v3303 = vunpack.c.h.b16 %v2714
    %v3304 = vunpack.c.l.b16 %v2715
    %v3305 = vunpack.c.h.b16 %v2715
    %v3306 = vunpack.c.l.b16 %v2716
    %v3307 = vunpack.c.h.b16 %v2716
    %v3308 = vunpack.c.l.b16 %v2717
    %v3309 = vunpack.c.h.b16 %v2717
    %v3310 = vunpack.c.l.b16 %v2718
    %v3311 = vunpack.c.h.b16 %v2718
    %v3312 = vunpack.c.l.b16 %v2719
    %v3313 = vunpack.c.h.b16 %v2719
    %v3314 = vunpack.c.l.b16 %v2720
    %v3315 = vunpack.c.h.b16 %v2720
    %v3316 = vunpack.c.l.b16 %v2721
    %v3317 = vunpack.c.h.b16 %v2721
    %v3318 = vunpack.c.l.b16 %v2722
    %v3319 = vunpack.c.h.b16 %v2722
    %v3320 = vunpack.c.l.b16 %v2723
    %v3321 = vunpack.c.h.b16 %v2723
    %v3322 = vunpack.c.l.b16 %v2724
    %v3323 = vunpack.c.h.b16 %v2724
    %v3324 = vunpack.c.l.b16 %v2725
    %v3325 = vunpack.c.h.b16 %v2725
    %v3326 = vunpack.c.l.b16 %v2726
    %v3327 = vunpack.c.h.b16 %v2726
    %v3328 = vunpack.c.l.b16 %v2727
    %v3329 = vunpack.c.h.b16 %v2727
    %v3330 = vunpack.c.l.b16 %v2728
    %v3331 = vunpack.c.h.b16 %v2728
    %v3332 = vunpack.c.l.b16 %v2729
    %v3333 = vunpack.c.h.b16 %v2729
    %v3334 = vunpack.c.l.b16 %v2730
    %v3335 = vunpack.c.h.b16 %v2730
    %v3336 = vunpack.c.l.b16 %v2731
    %v3337 = vunpack.c.h.b16 %v2731
    %v3338 = vunpack.c.l.b16 %v2732
    %v3339 = vunpack.c.h.b16 %v2732
    %v3340 = vunpack.c.l.b16 %v2733
    %v3341 = vunpack.c.h.b16 %v2733
    %v3342 = vunpack.c.l.b16 %v2734
    %v3343 = vunpack.c.h.b16 %v2734
    %v3344 = vunpack.c.l.b16 %v2735
    %v3345 = vunpack.c.h.b16 %v2735
    %v3346 = vunpack.c.l.b16 %v2736
    %v3347 = vunpack.c.h.b16 %v2736
    %v3348 = vunpack.c.l.b16 %v2737
    %v3349 = vunpack.c.h.b16 %v2737
    %v3350 = vunpack.c.l.b16 %v2738
    %v3351 = vunpack.c.h.b16 %v2738
    %v3352 = vunpack.c.l.b16 %v2739
    %v3353 = vunpack.c.h.b16 %v2739
    %v3354 = vunpack.c.l.b16 %v2740
    %v3355 = vunpack.c.h.b16 %v2740
    %v3356 = vunpack.c.l.b16 %v2741
    %v3357 = vunpack.c.h.b16 %v2741
    %v3358 = vunpack.c.l.b16 %v2742
    %v3359 = vunpack.c.h.b16 %v2742
    %v3360 = vunpack.c.l.b16 %v2743
    %v3361 = vunpack.c.h.b16 %v2743
    %v3362 = vunpack.c.l.b16 %v2744
    %v3363 = vunpack.c.h.b16 %v2744
    %v3364 = vunpack.c.l.b16 %v2745
    %v3365 = vunpack.c.h.b16 %v2745
    %v3366 = vunpack.c.l.b16 %v2746
    %v3367 = vunpack.c.h.b16 %v2746
    %v3368 = vunpack.c.l.b16 %v2747
    %v3369 = vunpack.c.h.b16 %v2747
    %v3370 = vunpack.c.l.b16 %v2748
    %v3371 = vunpack.c.h.b16 %v2748
    %v3372 = vunpack.c.l.b16 %v2749
    %v3373 = vunpack.c.h.b16 %v2749
    %v3374 = vunpack.c.l.b16 %v2750
    %v3375 = vunpack.c.h.b16 %v2750
    %v3376 = vunpack.c.l.b16 %v2751
    %v3377 = vunpack.c.h.b16 %v2751
    %v3378 = vunpack.c.l.b16 %v2752
    %v3379 = vunpack.c.h.b16 %v2752
    %v3380 = vunpack.c.l.b16 %v2753
    %v3381 = vunpack.c.h.b16 %v2753
    %v3382 = vunpack.c.l.b16 %v2754
    %v3383 = vunpack.c.h.b16 %v2754
    %v3384 = vunpack.c.l.b16 %v2755
    %v3385 = vunpack.c.h.b16 %v2755
    %v3386 = vunpack.c.l.b16 %v2756
    %v3387 = vunpack.c.h.b16 %v2756
    %v3388 = vunpack.c.l.b16 %v2757
    %v3389 = vunpack.c.h.b16 %v2757
    %v3390 = vunpack.c.l.b16 %v2758
    %v3391 = vunpack.c.h.b16 %v2758
    %v3392 = vunpack.c.l.b16 %v2759
    %v3393 = vunpack.c.h.b16 %v2759
    %v3394 = vunpack.c.l.b16 %v2760
    %v3395 = vunpack.c.h.b16 %v2760
    %v3396 = vunpack.c.l.b16 %v2761
    %v3397 = vunpack.c.h.b16 %v2761
    %v3398 = vunpack.c.l.b16 %v2762
    %v3399 = vunpack.c.h.b16 %v2762
    %v3400 = vunpack.c.l.b16 %v2763
    %v3401 = vunpack.c.h.b16 %v2763
    %v3402 = vunpack.c.l.b16 %v2764
    %v3403 = vunpack.c.h.b16 %v2764
    %v3404 = vunpack.c.l.b16 %v2765
    %v3405 = vunpack.c.h.b16 %v2765
    %v3406 = vunpack.c.l.b16 %v2766
    %v3407 = vunpack.c.h.b16 %v2766
    %v3408 = vunpack.c.l.b16 %v2767
    %v3409 = vunpack.c.h.b16 %v2767
    %v3410 = vunpack.c.l.b16 %v2768
    %v3411 = vunpack.c.h.b16 %v2768
    %v3412 = vunpack.c.l.b16 %v2769
    %v3413 = vunpack.c.h.b16 %v2769
    %v3414 = vunpack.c.l.b16 %v2770
    %v3415 = vunpack.c.h.b16 %v2770
    %v3416 = vunpack.c.l.b16 %v2771
    %v3417 = vunpack.c.h.b16 %v2771
    %v3418 = vunpack.c.l.b16 %v2772
    %v3419 = vunpack.c.h.b16 %v2772
    %v3420 = vunpack.c.l.b16 %v2773
    %v3421 = vunpack.c.h.b16 %v2773
    %v3422 = vunpack.c.l.b16 %v2774
    %v3423 = vunpack.c.h.b16 %v2774
    %v3424 = vunpack.c.l.b16 %v2775
    %v3425 = vunpack.c.h.b16 %v2775
    %v3426 = vunpack.c.l.b16 %v2776
    %v3427 = vunpack.c.h.b16 %v2776
    %v3428 = vunpack.c.l.b16 %v2777
    %v3429 = vunpack.c.h.b16 %v2777
    %v3430 = vunpack.c.l.b16 %v2778
    %v3431 = vunpack.c.h.b16 %v2778
    %v3432 = vunpack.c.l.b16 %v2779
    %v3433 = vunpack.c.h.b16 %v2779
    %v3434 = vunpack.c.l.b16 %v2780
    %v3435 = vunpack.c.h.b16 %v2780
    %v3436 = vunpack.c.l.b16 %v2781
    %v3437 = vunpack.c.h.b16 %v2781
    %v3438 = vunpack.c.l.b16 %v2782
    %v3439 = vunpack.c.h.b16 %v2782
    %v3440 = vunpack.c.l.b16 %v2783
    %v3441 = vunpack.c.h.b16 %v2783
    %v3442 = vunpack.c.l.b16 %v2784
    %v3443 = vunpack.c.h.b16 %v2784
    %v3444 = vunpack.c.l.b16 %v2785
    %v3445 = vunpack.c.h.b16 %v2785
    %v3446 = vunpack.c.l.b16 %v2786
    %v3447 = vunpack.c.h.b16 %v2786
    %v3448 = vunpack.c.l.b16 %v2787
    %v3449 = vunpack.c.h.b16 %v2787
    %v3450 = vunpack.c.l.b16 %v2788
    %v3451 = vunpack.c.h.b16 %v2788
    %v3452 = vunpack.c.l.b16 %v2789
    %v3453 = vunpack.c.h.b16 %v2789
    %v3454 = vunpack.c.l.b16 %v2790
    %v3455 = vunpack.c.h.b16 %v2790
    %v3456 = vunpack.c.l.b16 %v2791
    %v3457 = vunpack.c.h.b16 %v2791
    %v3458 = vunpack.c.l.b16 %v2792
    %v3459 = vunpack.c.h.b16 %v2792
    %v3460 = vunpack.c.l.b16 %v2793
    %v3461 = vunpack.c.h.b16 %v2793
    %v3462 = vunpack.c.l.b16 %v2794
    %v3463 = vunpack.c.h.b16 %v2794
    %v3464 = vunpack.c.l.b16 %v2795
    %v3465 = vunpack.c.h.b16 %v2795
    %v3466 = vunpack.c.l.b16 %v2796
    %v3467 = vunpack.c.h.b16 %v2796
    %v3468 = vunpack.c.l.b16 %v2797
    %v3469 = vunpack.c.h.b16 %v2797
    %v3470 = vunpack.c.l.b16 %v2798
    %v3471 = vunpack.c.h.b16 %v2798
    %v3472 = vunpack.c.l.b16 %v2799
    %v3473 = vunpack.c.h.b16 %v2799
    %v3474 = vunpack.c.l.b16 %v2800
    %v3475 = vunpack.c.h.b16 %v2800
    %v3476 = vunpack.c.l.b16 %v2801
    %v3477 = vunpack.c.h.b16 %v2801
    %v3478 = vunpack.c.l.b16 %v2802
    %v3479 = vunpack.c.h.b16 %v2802
    %v3480 = vunpack.c.l.b16 %v2803
    %v3481 = vunpack.c.h.b16 %v2803
    %v3482 = vunpack.c.l.b16 %v2804
    %v3483 = vunpack.c.h.b16 %v2804
    %v3484 = vunpack.c.l.b16 %v2805
    %v3485 = vunpack.c.h.b16 %v2805
    %v3486 = vunpack.c.l.b16 %v2806
    %v3487 = vunpack.c.h.b16 %v2806
    %v3488 = vunpack.c.l.b16 %v2807
    %v3489 = vunpack.c.h.b16 %v2807
    %v3490 = vunpack.c.l.b16 %v2808
    %v3491 = vunpack.c.h.b16 %v2808
    %v3492 = vunpack.c.l.b16 %v2809
    %v3493 = vunpack.c.h.b16 %v2809
    %v3494 = vunpack.c.l.b16 %v2810
    %v3495 = vunpack.c.h.b16 %v2810
    %v3496 = vunpack.c.l.b16 %v2811
    %v3497 = vunpack.c.h.b16 %v2811
    %v3498 = vunpack.c.l.b16 %v2812
    %v3499 = vunpack.c.h.b16 %v2812
    %v3500 = vunpack.c.l.b16 %v2813
    %v3501 = vunpack.c.h.b16 %v2813
    %v3502 = vunpack.c.l.b16 %v2814
    %v3503 = vunpack.c.h.b16 %v2814
    %v3504 = vunpack.c.l.b16 %v2815
    %v3505 = vunpack.c.h.b16 %v2815
    %v3506 = vunpack.c.l.b16 %v2816
    %v3507 = vunpack.c.h.b16 %v2816
    %v3508 = vunpack.c.l.b16 %v2817
    %v3509 = vunpack.c.h.b16 %v2817
    %v3510 = vunpack.c.l.b16 %v2818
    %v3511 = vunpack.c.h.b16 %v2818
    %v3512 = vunpack.c.l.b16 %v2819
    %v3513 = vunpack.c.h.b16 %v2819
    %v3514 = vunpack.c.l.b16 %v2820
    %v3515 = vunpack.c.h.b16 %v2820
    %v3516 = vunpack.c.l.b16 %v2821
    %v3517 = vunpack.c.h.b16 %v2821
    %v3518 = vunpack.c.l.b16 %v2822
    %v3519 = vunpack.c.h.b16 %v2822
    %v3520 = vunpack.c.l.b16 %v2823
    %v3521 = vunpack.c.h.b16 %v2823
    %v3522 = vunpack.c.l.b16 %v2824
    %v3523 = vunpack.c.h.b16 %v2824
    %v3524 = vunpack.c.l.b16 %v2825
    %v3525 = vunpack.c.h.b16 %v2825
    %v3526 = vunpack.c.l.b16 %v2826
    %v3527 = vunpack.c.h.b16 %v2826
    %v3528 = vunpack.c.l.b16 %v2827
    %v3529 = vunpack.c.h.b16 %v2827
    %v3530 = vunpack.c.l.b16 %v2828
    %v3531 = vunpack.c.h.b16 %v2828
    %v3532 = vunpack.c.l.b16 %v2829
    %v3533 = vunpack.c.h.b16 %v2829
    %v3534 = vunpack.c.l.b16 %v2830
    %v3535 = vunpack.c.h.b16 %v2830
    %v3536 = vunpack.c.l.b16 %v2831
    %v3537 = vunpack.c.h.b16 %v2831
    %v3538 = vunpack.c.l.b16 %v2832
    %v3539 = vunpack.c.h.b16 %v2832
    %v3540 = vunpack.c.l.b16 %v2833
    %v3541 = vunpack.c.h.b16 %v2833
    %v3542 = vunpack.c.l.b16 %v2834
    %v3543 = vunpack.c.h.b16 %v2834
    %v3544 = vunpack.c.l.b16 %v2835
    %v3545 = vunpack.c.h.b16 %v2835
    %v3546 = vunpack.c.l.b16 %v2836
    %v3547 = vunpack.c.h.b16 %v2836
    %v3548 = vunpack.c.l.b16 %v2837
    %v3549 = vunpack.c.h.b16 %v2837
    %v3550 = vunpack.c.l.b16 %v2838
    %v3551 = vunpack.c.h.b16 %v2838
    %v3552 = vunpack.c.l.b16 %v2839
    %v3553 = vunpack.c.h.b16 %v2839
    %v3554 = vunpack.c.l.b16 %v2840
    %v3555 = vunpack.c.h.b16 %v2840
    %v3556 = vunpack.c.l.b16 %v2841
    %v3557 = vunpack.c.h.b16 %v2841
    %v3558 = vunpack.c.l.b16 %v2842
    %v3559 = vunpack.c.h.b16 %v2842
    %v3560 = vunpack.c.l.b16 %v2843
    %v3561 = vunpack.c.h.b16 %v2843
    %v3562 = vunpack.c.l.b16 %v2844
    %v3563 = vunpack.c.h.b16 %v2844
    %v3564 = vunpack.c.l.b16 %v2845
    %v3565 = vunpack.c.h.b16 %v2845
    %v3566 = vunpack.c.l.b16 %v2846
    %v3567 = vunpack.c.h.b16 %v2846
    %v3568 = vunpack.c.l.b16 %v2847
    %v3569 = vunpack.c.h.b16 %v2847
    %v3570 = vunpack.c.l.b16 %v2848
    %v3571 = vunpack.c.h.b16 %v2848
    %v3572 = vunpack.c.l.b16 %v2849
    %v3573 = vunpack.c.h.b16 %v2849
    %v3574 = vunpack.c.l.b16 %v2850
    %v3575 = vunpack.c.h.b16 %v2850
    %v3576 = vunpack.c.l.b16 %v2851
    %v3577 = vunpack.c.h.b16 %v2851
    %v3578 = vunpack.c.l.b16 %v2852
    %v3579 = vunpack.c.h.b16 %v2852
    %v3580 = vunpack.c.l.b16 %v2853
    %v3581 = vunpack.c.h.b16 %v2853
    %v3582 = vunpack.c.l.b16 %v2854
    %v3583 = vunpack.c.h.b16 %v2854
    %v3584 = vunpack.c.l.b16 %v2855
    %v3585 = vunpack.c.h.b16 %v2855
    %v3586 = vunpack.c.l.b16 %v2856
    %v3587 = vunpack.c.h.b16 %v2856
    %v3588 = vunpack.c.l.b16 %v2857
    %v3589 = vunpack.c.h.b16 %v2857
    %v3590 = vunpack.c.l.b16 %v2858
    %v3591 = vunpack.c.h.b16 %v2858
    %v3592 = vunpack.c.l.b16 %v2859
    %v3593 = vunpack.c.h.b16 %v2859
    %v3594 = vunpack.c.l.b16 %v2860
    %v3595 = vunpack.c.h.b16 %v2860
    %v3596 = vunpack.c.l.b16 %v2861
    %v3597 = vunpack.c.h.b16 %v2861
    %v3598 = vunpack.c.l.b16 %v2862
    %v3599 = vunpack.c.h.b16 %v2862
    %v3600 = vunpack.c.l.b16 %v2863
    %v3601 = vunpack.c.h.b16 %v2863
    %v3602 = vunpack.c.l.b16 %v2864
    %v3603 = vunpack.c.h.b16 %v2864
    %v3604 = vunpack.c.l.b16 %v2865
    %v3605 = vunpack.c.h.b16 %v2865
    %v3606 = vunpack.c.l.b16 %v2866
    %v3607 = vunpack.c.h.b16 %v2866
    %v3608 = vunpack.c.l.b16 %v2867
    %v3609 = vunpack.c.h.b16 %v2867
    %v3610 = vunpack.c.l.b16 %v2868
    %v3611 = vunpack.c.h.b16 %v2868
    %v3612 = vunpack.c.l.b16 %v2869
    %v3613 = vunpack.c.h.b16 %v2869
    %v3614 = vunpack.c.l.b16 %v2870
    %v3615 = vunpack.c.h.b16 %v2870
    %v3616 = vunpack.c.l.b16 %v2871
    %v3617 = vunpack.c.h.b16 %v2871
    %v3618 = vunpack.c.l.b16 %v2872
    %v3619 = vunpack.c.h.b16 %v2872
    %v3620 = vunpack.c.l.b16 %v2873
    %v3621 = vunpack.c.h.b16 %v2873
    %v3622 = vunpack.c.l.b16 %v2874
    %v3623 = vunpack.c.h.b16 %v2874
    %v3624 = vunpack.c.l.b16 %v2875
    %v3625 = vunpack.c.h.b16 %v2875
    %v3626 = vunpack.c.l.b16 %v2876
    %v3627 = vunpack.c.h.b16 %v2876
    %v3628 = vunpack.c.l.b16 %v2877
    %v3629 = vunpack.c.h.b16 %v2877
    %v3630 = vunpack.c.l.b16 %v2878
    %v3631 = vunpack.c.h.b16 %v2878
    %v3632 = vunpack.c.l.b16 %v2879
    %v3633 = vunpack.c.h.b16 %v2879
    %v3634 = vunpack.c.l.b16 %v2880
    %v3635 = vunpack.c.h.b16 %v2880
    %v3636 = vunpack.c.l.b16 %v2881
    %v3637 = vunpack.c.h.b16 %v2881
    %v3638 = vunpack.c.l.b16 %v2882
    %v3639 = vunpack.c.h.b16 %v2882
    %v3640 = vunpack.c.l.b16 %v2883
    %v3641 = vunpack.c.h.b16 %v2883
    %v3642 = vunpack.c.l.b16 %v2884
    %v3643 = vunpack.c.h.b16 %v2884
    %v3644 = vunpack.c.l.b16 %v2885
    %v3645 = vunpack.c.h.b16 %v2885
    %v3646 = vunpack.c.l.b16 %v2886
    %v3647 = vunpack.c.h.b16 %v2886
    %v3648 = vunpack.c.l.b16 %v2887
    %v3649 = vunpack.c.h.b16 %v2887
    %v3650 = vunpack.c.l.b16 %v2888
    %v3651 = vunpack.c.h.b16 %v2888
    %v3652 = vunpack.c.l.b16 %v2889
    %v3653 = vunpack.c.h.b16 %v2889
    %v3654 = vunpack.c.l.b16 %v2890
    %v3655 = vunpack.c.h.b16 %v2890
    %v3656 = vunpack.c.l.b16 %v2891
    %v3657 = vunpack.c.h.b16 %v2891
    %v3658 = vunpack.c.l.b16 %v2892
    %v3659 = vunpack.c.h.b16 %v2892
    %v3660 = vunpack.c.l.b16 %v2893
    %v3661 = vunpack.c.h.b16 %v2893
    %v3662 = vunpack.c.l.b16 %v2894
    %v3663 = vunpack.c.h.b16 %v2894
    %v3664 = vunpack.c.l.b16 %v2895
    %v3665 = vunpack.c.h.b16 %v2895
    %v3666 = vunpack.c.l.b16 %v2896
    %v3667 = vunpack.c.h.b16 %v2896
    %v3668 = vunpack.c.l.b16 %v2897
    %v3669 = vunpack.c.h.b16 %v2897
    %v3670 = vunpack.c.l.b16 %v2898
    %v3671 = vunpack.c.h.b16 %v2898
    %v3672 = vunpack.c.l.b16 %v2899
    %v3673 = vunpack.c.h.b16 %v2899
    %v3674 = vunpack.c.l.b16 %v2900
    %v3675 = vunpack.c.h.b16 %v2900
    %v3676 = vunpack.c.l.b16 %v2901
    %v3677 = vunpack.c.h.b16 %v2901
    %v3678 = vunpack.c.l.b16 %v2902
    %v3679 = vunpack.c.h.b16 %v2902
    %v3680 = vunpack.c.l.b16 %v2903
    %v3681 = vunpack.c.h.b16 %v2903
    %v3682 = vunpack.c.l.b16 %v2904
    %v3683 = vunpack.c.h.b16 %v2904
    %v3684 = vunpack.c.l.b16 %v2905
    %v3685 = vunpack.c.h.b16 %v2905
    %v3686 = vunpack.c.l.b16 %v2906
    %v3687 = vunpack.c.h.b16 %v2906
    %v3688 = vunpack.c.l.b16 %v2907
    %v3689 = vunpack.c.h.b16 %v2907
    %v3690 = vunpack.c.l.b16 %v2908
    %v3691 = vunpack.c.h.b16 %v2908
    %v3692 = vunpack.c.l.b16 %v2909
    %v3693 = vunpack.c.h.b16 %v2909
    %v3694 = vunpack.c.l.b16 %v2910
    %v3695 = vunpack.c.h.b16 %v2910
    %v3696 = vunpack.c.l.b16 %v2911
    %v3697 = vunpack.c.h.b16 %v2911
    %v3698 = vunpack.c.l.b16 %v2912
    %v3699 = vunpack.c.h.b16 %v2912
    %v3700 = vunpack.c.l.b16 %v2913
    %v3701 = vunpack.c.h.b16 %v2913
    %v3702 = vunpack.c.l.b16 %v2914
    %v3703 = vunpack.c.h.b16 %v2914
    %v3704 = vunpack.c.l.b16 %v2915
    %v3705 = vunpack.c.h.b16 %v2915
    %v3706 = vpack.c.b16 %v3198, %v3194
    %v3707 = vpack.c.b16 %v3199, %v3195
    %v3708 = vpack.c.b16 %v3200, %v3196
    %v3709 = vpack.c.b16 %v3201, %v3197
    %v3710 = vpack.c.b16 %v3206, %v3202
    %v3711 = vpack.c.b16 %v3207, %v3203
    %v3712 = vpack.c.b16 %v3208, %v3204
    %v3713 = vpack.c.b16 %v3209, %v3205
    %v3714 = vpack.c.b16 %v3214, %v3210
    %v3715 = vpack.c.b16 %v3215, %v3211
    %v3716 = vpack.c.b16 %v3216, %v3212
    %v3717 = vpack.c.b16 %v3217, %v3213
    %v3718 = vpack.c.b16 %v3222, %v3218
    %v3719 = vpack.c.b16 %v3223, %v3219
    %v3720 = vpack.c.b16 %v3224, %v3220
    %v3721 = vpack.c.b16 %v3225, %v3221
    %v3722 = vpack.c.b16 %v3230, %v3226
    %v3723 = vpack.c.b16 %v3231, %v3227
    %v3724 = vpack.c.b16 %v3232, %v3228
    %v3725 = vpack.c.b16 %v3233, %v3229
    %v3726 = vpack.c.b16 %v3238, %v3234
    %v3727 = vpack.c.b16 %v3239, %v3235
    %v3728 = vpack.c.b16 %v3240, %v3236
    %v3729 = vpack.c.b16 %v3241, %v3237
    %v3730 = vpack.c.b16 %v3246, %v3242
    %v3731 = vpack.c.b16 %v3247, %v3243
    %v3732 = vpack.c.b16 %v3248, %v3244
    %v3733 = vpack.c.b16 %v3249, %v3245
    %v3734 = vpack.c.b16 %v3254, %v3250
    %v3735 = vpack.c.b16 %v3255, %v3251
    %v3736 = vpack.c.b16 %v3256, %v3252
    %v3737 = vpack.c.b16 %v3257, %v3253
    %v3738 = vpack.c.b16 %v3262, %v3258
    %v3739 = vpack.c.b16 %v3263, %v3259
    %v3740 = vpack.c.b16 %v3264, %v3260
    %v3741 = vpack.c.b16 %v3265, %v3261
    %v3742 = vpack.c.b16 %v3270, %v3266
    %v3743 = vpack.c.b16 %v3271, %v3267
    %v3744 = vpack.c.b16 %v3272, %v3268
    %v3745 = vpack.c.b16 %v3273, %v3269
    %v3746 = vpack.c.b16 %v3278, %v3274
    %v3747 = vpack.c.b16 %v3279, %v3275
    %v3748 = vpack.c.b16 %v3280, %v3276
    %v3749 = vpack.c.b16 %v3281, %v3277
    %v3750 = vpack.c.b16 %v3286, %v3282
    %v3751 = vpack.c.b16 %v3287, %v3283
    %v3752 = vpack.c.b16 %v3288, %v3284
    %v3753 = vpack.c.b16 %v3289, %v3285
    %v3754 = vpack.c.b16 %v3294, %v3290
    %v3755 = vpack.c.b16 %v3295, %v3291
    %v3756 = vpack.c.b16 %v3296, %v3292
    %v3757 = vpack.c.b16 %v3297, %v3293
    %v3758 = vpack.c.b16 %v3302, %v3298
    %v3759 = vpack.c.b16 %v3303, %v3299
    %v3760 = vpack.c.b16 %v3304, %v3300
    %v3761 = vpack.c.b16 %v3305, %v3301
    %v3762 = vpack.c.b16 %v3310, %v3306
    %v3763 = vpack.c.b16 %v3311, %v3307
    %v3764 = vpack.c.b16 %v3312, %v3308
    %v3765 = vpack.c.b16 %v3313, %v3309
    %v3766 = vpack.c.b16 %v3318, %v3314
    %v3767 = vpack.c.b16 %v3319, %v3315
    %v3768 = vpack.c.b16 %v3320, %v3316
    %v3769 = vpack.c.b16 %v3321, %v3317
    %v3770 = vpack.c.b16 %v3326, %v3322
    %v3771 = vpack.c.b16 %v3327, %v3323
    %v3772 = vpack.c.b16 %v3328, %v3324
    %v3773 = vpack.c.b16 %v3329, %v3325
    %v3774 = vpack.c.b16 %v3334, %v3330
    %v3775 = vpack.c.b16 %v3335, %v3331
    %v3776 = vpack.c.b16 %v3336, %v3332
    %v3777 = vpack.c.b16 %v3337, %v3333
    %v3778 = vpack.c.b16 %v3342, %v3338
    %v3779 = vpack.c.b16 %v3343, %v3339
    %v3780 = vpack.c.b16 %v3344, %v3340
    %v3781 = vpack.c.b16 %v3345, %v3341
    %v3782 = vpack.c.b16 %v3350, %v3346
    %v3783 = vpack.c.b16 %v3351, %v3347
    %v3784 = vpack.c.b16 %v3352, %v3348
    %v3785 = vpack.c.b16 %v3353, %v3349
    %v3786 = vpack.c.b16 %v3358, %v3354
    %v3787 = vpack.c.b16 %v3359, %v3355
    %v3788 = vpack.c.b16 %v3360, %v3356
    %v3789 = vpack.c.b16 %v3361, %v3357
    %v3790 = vpack.c.b16 %v3366, %v3362
    %v3791 = vpack.c.b16 %v3367, %v3363
    %v3792 = vpack.c.b16 %v3368, %v3364
    %v3793 = vpack.c.b16 %v3369, %v3365
    %v3794 = vpack.c.b16 %v3374, %v3370
    %v3795 = vpack.c.b16 %v3375, %v3371
    %v3796 = vpack.c.b16 %v3376, %v3372
    %v3797 = vpack.c.b16 %v3377, %v3373
    %v3798 = vpack.c.b16 %v3382, %v3378
    %v3799 = vpack.c.b16 %v3383, %v3379
    %v3800 = vpack.c.b16 %v3384, %v3380
    %v3801 = vpack.c.b16 %v3385, %v3381
    %v3802 = vpack.c.b16 %v3390, %v3386
    %v3803 = vpack.c.b16 %v3391, %v3387
    %v3804 = vpack.c.b16 %v3392, %v3388
    %v3805 = vpack.c.b16 %v3393, %v3389
    %v3806 = vpack.c.b16 %v3398, %v3394
    %v3807 = vpack.c.b16 %v3399, %v3395
    %v3808 = vpack.c.b16 %v3400, %v3396
    %v3809 = vpack.c.b16 %v3401, %v3397
    %v3810 = vpack.c.b16 %v3406, %v3402
    %v3811 = vpack.c.b16 %v3407, %v3403
    %v3812 = vpack.c.b16 %v3408, %v3404
    %v3813 = vpack.c.b16 %v3409, %v3405
    %v3814 = vpack.c.b16 %v3414, %v3410
    %v3815 = vpack.c.b16 %v3415, %v3411
    %v3816 = vpack.c.b16 %v3416, %v3412
    %v3817 = vpack.c.b16 %v3417, %v3413
    %v3818 = vpack.c.b16 %v3422, %v3418
    %v3819 = vpack.c.b16 %v3423, %v3419
    %v3820 = vpack.c.b16 %v3424, %v3420
    %v3821 = vpack.c.b16 %v3425, %v3421
    %v3822 = vpack.c.b16 %v3430, %v3426
    %v3823 = vpack.c.b16 %v3431, %v3427
    %v3824 = vpack.c.b16 %v3432, %v3428
    %v3825 = vpack.c.b16 %v3433, %v3429
    %v3826 = vpack.c.b16 %v3438, %v3434
    %v3827 = vpack.c.b16 %v3439, %v3435
    %v3828 = vpack.c.b16 %v3440, %v3436
    %v3829 = vpack.c.b16 %v3441, %v3437
    %v3830 = vpack.c.b16 %v3446, %v3442
    %v3831 = vpack.c.b16 %v3447, %v3443
    %v3832 = vpack.c.b16 %v3448, %v3444
    %v3833 = vpack.c.b16 %v3449, %v3445
    %v3834 = vpack.c.b16 %v3454, %v3450
    %v3835 = vpack.c.b16 %v3455, %v3451
    %v3836 = vpack.c.b16 %v3456, %v3452
    %v3837 = vpack.c.b16 %v3457, %v3453
    %v3838 = vpack.c.b16 %v3462, %v3458
    %v3839 = vpack.c.b16 %v3463, %v3459
    %v3840 = vpack.c.b16 %v3464, %v3460
    %v3841 = vpack.c.b16 %v3465, %v3461
    %v3842 = vpack.c.b16 %v3470, %v3466
    %v3843 = vpack.c.b16 %v3471, %v3467
    %v3844 = vpack.c.b16 %v3472, %v3468
    %v3845 = vpack.c.b16 %v3473, %v3469
    %v3846 = vpack.c.b16 %v3478, %v3474
    %v3847 = vpack.c.b16 %v3479, %v3475
    %v3848 = vpack.c.b16 %v3480, %v3476
    %v3849 = vpack.c.b16 %v3481, %v3477
    %v3850 = vpack.c.b16 %v3486, %v3482
    %v3851 = vpack.c.b16 %v3487, %v3483
    %v3852 = vpack.c.b16 %v3488, %v3484
    %v3853 = vpack.c.b16 %v3489, %v3485
    %v3854 = vpack.c.b16 %v3494, %v3490
    %v3855 = vpack.c.b16 %v3495, %v3491
    %v3856 = vpack.c.b16 %v3496, %v3492
    %v3857 = vpack.c.b16 %v3497, %v3493
    %v3858 = vpack.c.b16 %v3502, %v3498
    %v3859 = vpack.c.b16 %v3503, %v3499
    %v3860 = vpack.c.b16 %v3504, %v3500
    %v3861 = vpack.c.b16 %v3505, %v3501
    %v3862 = vpack.c.b16 %v3510, %v3506
    %v3863 = vpack.c.b16 %v3511, %v3507
    %v3864 = vpack.c.b16 %v3512, %v3508
    %v3865 = vpack.c.b16 %v3513, %v3509
    %v3866 = vpack.c.b16 %v3518, %v3514
    %v3867 = vpack.c.b16 %v3519, %v3515
    %v3868 = vpack.c.b16 %v3520, %v3516
    %v3869 = vpack.c.b16 %v3521, %v3517
    %v3870 = vpack.c.b16 %v3526, %v3522
    %v3871 = vpack.c.b16 %v3527, %v3523
    %v3872 = vpack.c.b16 %v3528, %v3524
    %v3873 = vpack.c.b16 %v3529, %v3525
    %v3874 = vpack.c.b16 %v3534, %v3530
    %v3875 = vpack.c.b16 %v3535, %v3531
    %v3876 = vpack.c.b16 %v3536, %v3532
    %v3877 = vpack.c.b16 %v3537, %v3533
    %v3878 = vpack.c.b16 %v3542, %v3538
    %v3879 = vpack.c.b16 %v3543, %v3539
    %v3880 = vpack.c.b16 %v3544, %v3540
    %v3881 = vpack.c.b16 %v3545, %v3541
    %v3882 = vpack.c.b16 %v3550, %v3546
    %v3883 = vpack.c.b16 %v3551, %v3547
    %v3884 = vpack.c.b16 %v3552, %v3548
    %v3885 = vpack.c.b16 %v3553, %v3549
    %v3886 = vpack.c.b16 %v3558, %v3554
    %v3887 = vpack.c.b16 %v3559, %v3555
    %v3888 = vpack.c.b16 %v3560, %v3556
    %v3889 = vpack.c.b16 %v3561, %v3557
    %v3890 = vpack.c.b16 %v3566, %v3562
    %v3891 = vpack.c.b16 %v3567, %v3563
    %v3892 = vpack.c.b16 %v3568, %v3564
    %v3893 = vpack.c.b16 %v3569, %v3565
    %v3894 = vpack.c.b16 %v3574, %v3570
    %v3895 = vpack.c.b16 %v3575, %v3571
    %v3896 = vpack.c.b16 %v3576, %v3572
    %v3897 = vpack.c.b16 %v3577, %v3573
    %v3898 = vpack.c.b16 %v3582, %v3578
    %v3899 = vpack.c.b16 %v3583, %v3579
    %v3900 = vpack.c.b16 %v3584, %v3580
    %v3901 = vpack.c.b16 %v3585, %v3581
    %v3902 = vpack.c.b16 %v3590, %v3586
    %v3903 = vpack.c.b16 %v3591, %v3587
    %v3904 = vpack.c.b16 %v3592, %v3588
    %v3905 = vpack.c.b16 %v3593, %v3589
    %v3906 = vpack.c.b16 %v3598, %v3594
    %v3907 = vpack.c.b16 %v3599, %v3595
    %v3908 = vpack.c.b16 %v3600, %v3596
    %v3909 = vpack.c.b16 %v3601, %v3597
    %v3910 = vpack.c.b16 %v3606, %v3602
    %v3911 = vpack.c.b16 %v3607, %v3603
    %v3912 = vpack.c.b16 %v3608, %v3604
    %v3913 = vpack.c.b16 %v3609, %v3605
    %v3914 = vpack.c.b16 %v3614, %v3610
    %v3915 = vpack.c.b16 %v3615, %v3611
    %v3916 = vpack.c.b16 %v3616, %v3612
    %v3917 = vpack.c.b16 %v3617, %v3613
    %v3918 = vpack.c.b16 %v3622, %v3618
    %v3919 = vpack.c.b16 %v3623, %v3619
    %v3920 = vpack.c.b16 %v3624, %v3620
    %v3921 = vpack.c.b16 %v3625, %v3621
    %v3922 = vpack.c.b16 %v3630, %v3626
    %v3923 = vpack.c.b16 %v3631, %v3627
    %v3924 = vpack.c.b16 %v3632, %v3628
    %v3925 = vpack.c.b16 %v3633, %v3629
    %v3926 = vpack.c.b16 %v3638, %v3634
    %v3927 = vpack.c.b16 %v3639, %v3635
    %v3928 = vpack.c.b16 %v3640, %v3636
    %v3929 = vpack.c.b16 %v3641, %v3637
    %v3930 = vpack.c.b16 %v3646, %v3642
    %v3931 = vpack.c.b16 %v3647, %v3643
    %v3932 = vpack.c.b16 %v3648, %v3644
    %v3933 = vpack.c.b16 %v3649, %v3645
    %v3934 = vpack.c.b16 %v3654, %v3650
    %v3935 = vpack.c.b16 %v3655, %v3651
    %v3936 = vpack.c.b16 %v3656, %v3652
    %v3937 = vpack.c.b16 %v3657, %v3653
    %v3938 = vpack.c.b16 %v3662, %v3658
    %v3939 = vpack.c.b16 %v3663, %v3659
    %v3940 = vpack.c.b16 %v3664, %v3660
    %v3941 = vpack.c.b16 %v3665, %v3661
    %v3942 = vpack.c.b16 %v3670, %v3666
    %v3943 = vpack.c.b16 %v3671, %v3667
    %v3944 = vpack.c.b16 %v3672, %v3668
    %v3945 = vpack.c.b16 %v3673, %v3669
    %v3946 = vpack.c.b16 %v3678, %v3674
    %v3947 = vpack.c.b16 %v3679, %v3675
    %v3948 = vpack.c.b16 %v3680, %v3676
    %v3949 = vpack.c.b16 %v3681, %v3677
    %v3950 = vpack.c.b16 %v3686, %v3682
    %v3951 = vpack.c.b16 %v3687, %v3683
    %v3952 = vpack.c.b16 %v3688, %v3684
    %v3953 = vpack.c.b16 %v3689, %v3685
    %v3954 = vpack.c.b16 %v3694, %v3690
    %v3955 = vpack.c.b16 %v3695, %v3691
    %v3956 = vpack.c.b16 %v3696, %v3692
    %v3957 = vpack.c.b16 %v3697, %v3693
    %v3958 = vpack.c.b16 %v3702, %v3698
    %v3959 = vpack.c.b16 %v3703, %v3699
    %v3960 = vpack.c.b16 %v3704, %v3700
    %v3961 = vpack.c.b16 %v3705, %v3701
    %4218 = vmatprep.subr.bf16.mxu0 %v3707
    %4219 = vmatpush1.bf16.msra.mxu0 %v3706
    %4220 = vmatprep.subr.bf16.mxu0 %v3711
    %4221 = vmatpush1.bf16.msra.mxu0 %v3710
    %4222 = vmatprep.subr.bf16.mxu0 %v3715
    %4223 = vmatpush1.bf16.msra.mxu0 %v3714
    %4224 = vmatprep.subr.bf16.mxu0 %v3719
    %4225 = vmatpush1.bf16.msra.mxu0 %v3718
    %4226 = vmatprep.subr.bf16.mxu0 %v3723
    %4227 = vmatpush1.bf16.msra.mxu0 %v3722
    %4228 = vmatprep.subr.bf16.mxu0 %v3727
    %4229 = vmatpush1.bf16.msra.mxu0 %v3726
    %4230 = vmatprep.subr.bf16.mxu0 %v3731
    %4231 = vmatpush1.bf16.msra.mxu0 %v3730
    %4232 = vmatprep.subr.bf16.mxu0 %v3735
    %4233 = vmatpush1.bf16.msra.mxu0 %v3734
    %4234 = vmatprep.subr.bf16.mxu0 %v3739
    %4235 = vmatpush1.bf16.msra.mxu0 %v3738
    %4236 = vmatprep.subr.bf16.mxu0 %v3743
    %4237 = vmatpush1.bf16.msra.mxu0 %v3742
    %4238 = vmatprep.subr.bf16.mxu0 %v3747
    %4239 = vmatpush1.bf16.msra.mxu0 %v3746
    %4240 = vmatprep.subr.bf16.mxu0 %v3751
    %4241 = vmatpush1.bf16.msra.mxu0 %v3750
    %4242 = vmatprep.subr.bf16.mxu0 %v3755
    %4243 = vmatpush1.bf16.msra.mxu0 %v3754
    %4244 = vmatprep.subr.bf16.mxu0 %v3759
    %4245 = vmatpush1.bf16.msra.mxu0 %v3758
    %4246 = vmatprep.subr.bf16.mxu0 %v3763
    %4247 = vmatpush1.bf16.msra.mxu0 %v3762
    %4248 = vmatprep.subr.bf16.mxu0 %v3767
    %4249 = vmatpush1.bf16.msra.mxu0 %v3766
    %4250 = vmatprep.mubr.bf16.mxu0 %v2653
    %4251 = vmatmul.mubr.bf16.gmra.mrb[0].mxu0 %v2652
    %v4252 = vpop.f32.mrb[0].mxu0
    %v4253 = vadd.f32 %v2921, %v4252
    %v4254 = vpop.f32.mrb[0].mxu0
    %v4255 = vadd.f32 %v2925, %v4254
    %v4256 = vpop.f32.mrb[0].mxu0
    %v4257 = vpop.f32.mrb[0].mxu0
    %4258 = vdwg.mxu0
    %4259 = vmatprep.subr.bf16.mxu0 %v3771
    %4260 = vmatpush1.bf16.msra.mxu0 %v3770
    %4261 = vmatprep.subr.bf16.mxu0 %v3775
    %4262 = vmatpush1.bf16.msra.mxu0 %v3774
    %4263 = vmatprep.subr.bf16.mxu0 %v3779
    %4264 = vmatpush1.bf16.msra.mxu0 %v3778
    %4265 = vmatprep.subr.bf16.mxu0 %v3783
    %4266 = vmatpush1.bf16.msra.mxu0 %v3782
    %4267 = vmatprep.subr.bf16.mxu0 %v3787
    %4268 = vmatpush1.bf16.msra.mxu0 %v3786
    %4269 = vmatprep.subr.bf16.mxu0 %v3791
    %4270 = vmatpush1.bf16.msra.mxu0 %v3790
    %4271 = vmatprep.subr.bf16.mxu0 %v3795
    %4272 = vmatpush1.bf16.msra.mxu0 %v3794
    %4273 = vmatprep.subr.bf16.mxu0 %v3799
    %4274 = vmatpush1.bf16.msra.mxu0 %v3798
    %4275 = vmatprep.subr.bf16.mxu0 %v3803
    %4276 = vmatpush1.bf16.msra.mxu0 %v3802
    %4277 = vmatprep.subr.bf16.mxu0 %v3807
    %4278 = vmatpush1.bf16.msra.mxu0 %v3806
    %4279 = vmatprep.subr.bf16.mxu0 %v3811
    %4280 = vmatpush1.bf16.msra.mxu0 %v3810
    %4281 = vmatprep.subr.bf16.mxu0 %v3815
    %4282 = vmatpush1.bf16.msra.mxu0 %v3814
    %4283 = vmatprep.subr.bf16.mxu0 %v3819
    %4284 = vmatpush1.bf16.msra.mxu0 %v3818
    %4285 = vmatprep.subr.bf16.mxu0 %v3823
    %4286 = vmatpush1.bf16.msra.mxu0 %v3822
    %4287 = vmatprep.subr.bf16.mxu0 %v3827
    %4288 = vmatpush1.bf16.msra.mxu0 %v3826
    %4289 = vmatprep.subr.bf16.mxu0 %v3831
    %4290 = vmatpush1.bf16.msra.mxu0 %v3830
    %4291 = vmatprep.mubr.bf16.mxu0 %v2655
    %4292 = vmatmul.mubr.bf16.gmra.mrb[0].mxu0 %v2654
    %v4293 = vpop.f32.mrb[0].mxu0
    %v4294 = vadd.f32 %v4253, %v4293
    %v4295 = vpop.f32.mrb[0].mxu0
    %v4296 = vadd.f32 %v4255, %v4295
    %v4297 = vpop.f32.mrb[0].mxu0
    %v4298 = vpop.f32.mrb[0].mxu0
    %4299 = vdwg.mxu0
    %4300 = vmatprep.subr.bf16.mxu0 %v3835
    %4301 = vmatpush1.bf16.msra.mxu0 %v3834
    %4302 = vmatprep.subr.bf16.mxu0 %v3839
    %4303 = vmatpush1.bf16.msra.mxu0 %v3838
    %4304 = vmatprep.subr.bf16.mxu0 %v3843
    %4305 = vmatpush1.bf16.msra.mxu0 %v3842
    %4306 = vmatprep.subr.bf16.mxu0 %v3847
    %4307 = vmatpush1.bf16.msra.mxu0 %v3846
    %4308 = vmatprep.subr.bf16.mxu0 %v3851
    %4309 = vmatpush1.bf16.msra.mxu0 %v3850
    %4310 = vmatprep.subr.bf16.mxu0 %v3855
    %4311 = vmatpush1.bf16.msra.mxu0 %v3854
    %4312 = vmatprep.subr.bf16.mxu0 %v3859
    %4313 = vmatpush1.bf16.msra.mxu0 %v3858
    %4314 = vmatprep.subr.bf16.mxu0 %v3863
    %4315 = vmatpush1.bf16.msra.mxu0 %v3862
    %4316 = vmatprep.subr.bf16.mxu0 %v3867
    %4317 = vmatpush1.bf16.msra.mxu0 %v3866
    %4318 = vmatprep.subr.bf16.mxu0 %v3871
    %4319 = vmatpush1.bf16.msra.mxu0 %v3870
    %4320 = vmatprep.subr.bf16.mxu0 %v3875
    %4321 = vmatpush1.bf16.msra.mxu0 %v3874
    %4322 = vmatprep.subr.bf16.mxu0 %v3879
    %4323 = vmatpush1.bf16.msra.mxu0 %v3878
    %4324 = vmatprep.subr.bf16.mxu0 %v3883
    %4325 = vmatpush1.bf16.msra.mxu0 %v3882
    %4326 = vmatprep.subr.bf16.mxu0 %v3887
    %4327 = vmatpush1.bf16.msra.mxu0 %v3886
    %4328 = vmatprep.subr.bf16.mxu0 %v3891
    %4329 = vmatpush1.bf16.msra.mxu0 %v3890
    %4330 = vmatprep.subr.bf16.mxu0 %v3895
    %4331 = vmatpush1.bf16.msra.mxu0 %v3894
    %4332 = vmatprep.mubr.bf16.mxu0 %v2657
    %4333 = vmatmul.mubr.bf16.gmra.mrb[0].mxu0 %v2656
    %v4334 = vpop.f32.mrb[0].mxu0
    %v4335 = vadd.f32 %v4294, %v4334
    %v4336 = vpop.f32.mrb[0].mxu0
    %v4337 = vadd.f32 %v4296, %v4336
    %v4338 = vpop.f32.mrb[0].mxu0
    %v4339 = vpop.f32.mrb[0].mxu0
    %4340 = vdwg.mxu0
    %4341 = vmatprep.subr.bf16.mxu0 %v3899
    %4342 = vmatpush1.bf16.msra.mxu0 %v3898
    %4343 = vmatprep.subr.bf16.mxu0 %v3903
    %4344 = vmatpush1.bf16.msra.mxu0 %v3902
    %4345 = vmatprep.subr.bf16.mxu0 %v3907
    %4346 = vmatpush1.bf16.msra.mxu0 %v3906
    %4347 = vmatprep.subr.bf16.mxu0 %v3911
    %4348 = vmatpush1.bf16.msra.mxu0 %v3910
    %4349 = vmatprep.subr.bf16.mxu0 %v3915
    %4350 = vmatpush1.bf16.msra.mxu0 %v3914
    %4351 = vmatprep.subr.bf16.mxu0 %v3919
    %4352 = vmatpush1.bf16.msra.mxu0 %v3918
    %4353 = vmatprep.subr.bf16.mxu0 %v3923
    %4354 = vmatpush1.bf16.msra.mxu0 %v3922
    %4355 = vmatprep.subr.bf16.mxu0 %v3927
    %4356 = vmatpush1.bf16.msra.mxu0 %v3926
    %4357 = vmatprep.subr.bf16.mxu0 %v3931
    %4358 = vmatpush1.bf16.msra.mxu0 %v3930
    %4359 = vmatprep.subr.bf16.mxu0 %v3935
    %4360 = vmatpush1.bf16.msra.mxu0 %v3934
    %4361 = vmatprep.subr.bf16.mxu0 %v3939
    %4362 = vmatpush1.bf16.msra.mxu0 %v3938
    %4363 = vmatprep.subr.bf16.mxu0 %v3943
    %4364 = vmatpush1.bf16.msra.mxu0 %v3942
    %4365 = vmatprep.subr.bf16.mxu0 %v3947
    %4366 = vmatpush1.bf16.msra.mxu0 %v3946
    %4367 = vmatprep.subr.bf16.mxu0 %v3951
    %4368 = vmatpush1.bf16.msra.mxu0 %v3950
    %4369 = vmatprep.subr.bf16.mxu0 %v3955
    %4370 = vmatpush1.bf16.msra.mxu0 %v3954
    %4371 = vmatprep.subr.bf16.mxu0 %v3959
    %4372 = vmatpush1.bf16.msra.mxu0 %v3958
    %4373 = vmatprep.mubr.bf16.mxu0 %v2659
    %4374 = vmatmul.mubr.bf16.gmra.mrb[0].mxu0 %v2658
    %v4375 = vpop.f32.mrb[0].mxu0
    %v4376 = vadd.f32 %v4335, %v4375
    %v4377 = vpop.f32.mrb[0].mxu0
    %v4378 = vadd.f32 %v4337, %v4377
    %v4379 = vpop.f32.mrb[0].mxu0
    %v4380 = vpop.f32.mrb[0].mxu0
    %4381 = vdwg.mxu0
    %4382 = vmatprep.subr.bf16.mxu0 %v3709
    %4383 = vmatpush1.bf16.msra.mxu0 %v3708
    %4384 = vmatprep.subr.bf16.mxu0 %v3713
    %4385 = vmatpush1.bf16.msra.mxu0 %v3712
    %4386 = vmatprep.subr.bf16.mxu0 %v3717
    %4387 = vmatpush1.bf16.msra.mxu0 %v3716
    %4388 = vmatprep.subr.bf16.mxu0 %v3721
    %4389 = vmatpush1.bf16.msra.mxu0 %v3720
    %4390 = vmatprep.subr.bf16.mxu0 %v3725
    %4391 = vmatpush1.bf16.msra.mxu0 %v3724
    %4392 = vmatprep.subr.bf16.mxu0 %v3729
    %4393 = vmatpush1.bf16.msra.mxu0 %v3728
    %4394 = vmatprep.subr.bf16.mxu0 %v3733
    %4395 = vmatpush1.bf16.msra.mxu0 %v3732
    %4396 = vmatprep.subr.bf16.mxu0 %v3737
    %4397 = vmatpush1.bf16.msra.mxu0 %v3736
    %4398 = vmatprep.subr.bf16.mxu0 %v3741
    %4399 = vmatpush1.bf16.msra.mxu0 %v3740
    %4400 = vmatprep.subr.bf16.mxu0 %v3745
    %4401 = vmatpush1.bf16.msra.mxu0 %v3744
    %4402 = vmatprep.subr.bf16.mxu0 %v3749
    %4403 = vmatpush1.bf16.msra.mxu0 %v3748
    %4404 = vmatprep.subr.bf16.mxu0 %v3753
    %4405 = vmatpush1.bf16.msra.mxu0 %v3752
    %4406 = vmatprep.subr.bf16.mxu0 %v3757
    %4407 = vmatpush1.bf16.msra.mxu0 %v3756
    %4408 = vmatprep.subr.bf16.mxu0 %v3761
    %4409 = vmatpush1.bf16.msra.mxu0 %v3760
    %4410 = vmatprep.subr.bf16.mxu0 %v3765
    %4411 = vmatpush1.bf16.msra.mxu0 %v3764
    %4412 = vmatprep.subr.bf16.mxu0 %v3769
    %4413 = vmatpush1.bf16.msra.mxu0 %v3768
    %4414 = vmatprep.mubr.bf16.mxu0 %v2653
    %4415 = vmatmul.mubr.bf16.gmra.mrb[0].mxu0 %v2652
    %v4416 = vpop.f32.mrb[0].mxu0
    %v4417 = vadd.f32 %v2929, %v4416
    %v4418 = vpop.f32.mrb[0].mxu0
    %v4419 = vadd.f32 %v2933, %v4418
    %v4420 = vpop.f32.mrb[0].mxu0
    %v4421 = vpop.f32.mrb[0].mxu0
    %4422 = vdwg.mxu0
    %4423 = vmatprep.subr.bf16.mxu0 %v3773
    %4424 = vmatpush1.bf16.msra.mxu0 %v3772
    %4425 = vmatprep.subr.bf16.mxu0 %v3777
    %4426 = vmatpush1.bf16.msra.mxu0 %v3776
    %4427 = vmatprep.subr.bf16.mxu0 %v3781
    %4428 = vmatpush1.bf16.msra.mxu0 %v3780
    %4429 = vmatprep.subr.bf16.mxu0 %v3785
    %4430 = vmatpush1.bf16.msra.mxu0 %v3784
    %4431 = vmatprep.subr.bf16.mxu0 %v3789
    %4432 = vmatpush1.bf16.msra.mxu0 %v3788
    %4433 = vmatprep.subr.bf16.mxu0 %v3793
    %4434 = vmatpush1.bf16.msra.mxu0 %v3792
    %4435 = vmatprep.subr.bf16.mxu0 %v3797
    %4436 = vmatpush1.bf16.msra.mxu0 %v3796
    %4437 = vmatprep.subr.bf16.mxu0 %v3801
    %4438 = vmatpush1.bf16.msra.mxu0 %v3800
    %4439 = vmatprep.subr.bf16.mxu0 %v3805
    %4440 = vmatpush1.bf16.msra.mxu0 %v3804
    %4441 = vmatprep.subr.bf16.mxu0 %v3809
    %4442 = vmatpush1.bf16.msra.mxu0 %v3808
    %4443 = vmatprep.subr.bf16.mxu0 %v3813
    %4444 = vmatpush1.bf16.msra.mxu0 %v3812
    %4445 = vmatprep.subr.bf16.mxu0 %v3817
    %4446 = vmatpush1.bf16.msra.mxu0 %v3816
    %4447 = vmatprep.subr.bf16.mxu0 %v3821
    %4448 = vmatpush1.bf16.msra.mxu0 %v3820
    %4449 = vmatprep.subr.bf16.mxu0 %v3825
    %4450 = vmatpush1.bf16.msra.mxu0 %v3824
    %4451 = vmatprep.subr.bf16.mxu0 %v3829
    %4452 = vmatpush1.bf16.msra.mxu0 %v3828
    %4453 = vmatprep.subr.bf16.mxu0 %v3833
    %4454 = vmatpush1.bf16.msra.mxu0 %v3832
    %4455 = vmatprep.mubr.bf16.mxu0 %v2655
    %4456 = vmatmul.mubr.bf16.gmra.mrb[0].mxu0 %v2654
    %v4457 = vpop.f32.mrb[0].mxu0
    %v4458 = vadd.f32 %v4417, %v4457
    %v4459 = vpop.f32.mrb[0].mxu0
    %v4460 = vadd.f32 %v4419, %v4459
    %v4461 = vpop.f32.mrb[0].mxu0
    %v4462 = vpop.f32.mrb[0].mxu0
    %4463 = vdwg.mxu0
    %4464 = vmatprep.subr.bf16.mxu0 %v3837
    %4465 = vmatpush1.bf16.msra.mxu0 %v3836
    %4466 = vmatprep.subr.bf16.mxu0 %v3841
    %4467 = vmatpush1.bf16.msra.mxu0 %v3840
    %4468 = vmatprep.subr.bf16.mxu0 %v3845
    %4469 = vmatpush1.bf16.msra.mxu0 %v3844
    %4470 = vmatprep.subr.bf16.mxu0 %v3849
    %4471 = vmatpush1.bf16.msra.mxu0 %v3848
    %4472 = vmatprep.subr.bf16.mxu0 %v3853
    %4473 = vmatpush1.bf16.msra.mxu0 %v3852
    %4474 = vmatprep.subr.bf16.mxu0 %v3857
    %4475 = vmatpush1.bf16.msra.mxu0 %v3856
    %4476 = vmatprep.subr.bf16.mxu0 %v3861
    %4477 = vmatpush1.bf16.msra.mxu0 %v3860
    %4478 = vmatprep.subr.bf16.mxu0 %v3865
    %4479 = vmatpush1.bf16.msra.mxu0 %v3864
    %4480 = vmatprep.subr.bf16.mxu0 %v3869
    %4481 = vmatpush1.bf16.msra.mxu0 %v3868
    %4482 = vmatprep.subr.bf16.mxu0 %v3873
    %4483 = vmatpush1.bf16.msra.mxu0 %v3872
    %4484 = vmatprep.subr.bf16.mxu0 %v3877
    %4485 = vmatpush1.bf16.msra.mxu0 %v3876
    %4486 = vmatprep.subr.bf16.mxu0 %v3881
    %4487 = vmatpush1.bf16.msra.mxu0 %v3880
    %4488 = vmatprep.subr.bf16.mxu0 %v3885
    %4489 = vmatpush1.bf16.msra.mxu0 %v3884
    %4490 = vmatprep.subr.bf16.mxu0 %v3889
    %4491 = vmatpush1.bf16.msra.mxu0 %v3888
    %4492 = vmatprep.subr.bf16.mxu0 %v3893
    %4493 = vmatpush1.bf16.msra.mxu0 %v3892
    %4494 = vmatprep.subr.bf16.mxu0 %v3897
    %4495 = vmatpush1.bf16.msra.mxu0 %v3896
    %4496 = vmatprep.mubr.bf16.mxu0 %v2657
    %4497 = vmatmul.mubr.bf16.gmra.mrb[0].mxu0 %v2656
    %v4498 = vpop.f32.mrb[0].mxu0
    %v4499 = vadd.f32 %v4458, %v4498
    %v4500 = vpop.f32.mrb[0].mxu0
    %v4501 = vadd.f32 %v4460, %v4500
    %v4502 = vpop.f32.mrb[0].mxu0
    %v4503 = vpop.f32.mrb[0].mxu0
    %4504 = vdwg.mxu0
    %4505 = vmatprep.subr.bf16.mxu0 %v3901
    %4506 = vmatpush1.bf16.msra.mxu0 %v3900
    %4507 = vmatprep.subr.bf16.mxu0 %v3905
    %4508 = vmatpush1.bf16.msra.mxu0 %v3904
    %4509 = vmatprep.subr.bf16.mxu0 %v3909
    %4510 = vmatpush1.bf16.msra.mxu0 %v3908
    %4511 = vmatprep.subr.bf16.mxu0 %v3913
    %4512 = vmatpush1.bf16.msra.mxu0 %v3912
    %4513 = vmatprep.subr.bf16.mxu0 %v3917
    %4514 = vmatpush1.bf16.msra.mxu0 %v3916
    %4515 = vmatprep.subr.bf16.mxu0 %v3921
    %4516 = vmatpush1.bf16.msra.mxu0 %v3920
    %4517 = vmatprep.subr.bf16.mxu0 %v3925
    %4518 = vmatpush1.bf16.msra.mxu0 %v3924
    %4519 = vmatprep.subr.bf16.mxu0 %v3929
    %4520 = vmatpush1.bf16.msra.mxu0 %v3928
    %4521 = vmatprep.subr.bf16.mxu0 %v3933
    %4522 = vmatpush1.bf16.msra.mxu0 %v3932
    %4523 = vmatprep.subr.bf16.mxu0 %v3937
    %4524 = vmatpush1.bf16.msra.mxu0 %v3936
    %4525 = vmatprep.subr.bf16.mxu0 %v3941
    %4526 = vmatpush1.bf16.msra.mxu0 %v3940
    %4527 = vmatprep.subr.bf16.mxu0 %v3945
    %4528 = vmatpush1.bf16.msra.mxu0 %v3944
    %4529 = vmatprep.subr.bf16.mxu0 %v3949
    %4530 = vmatpush1.bf16.msra.mxu0 %v3948
    %4531 = vmatprep.subr.bf16.mxu0 %v3953
    %4532 = vmatpush1.bf16.msra.mxu0 %v3952
    %4533 = vmatprep.subr.bf16.mxu0 %v3957
    %4534 = vmatpush1.bf16.msra.mxu0 %v3956
    %4535 = vmatprep.subr.bf16.mxu0 %v3961
    %4536 = vmatpush1.bf16.msra.mxu0 %v3960
    %4537 = vmatprep.mubr.bf16.mxu0 %v2659
    %4538 = vmatmul.mubr.bf16.gmra.mrb[0].mxu0 %v2658
    %v4539 = vpop.f32.mrb[0].mxu0
    %v4540 = vadd.f32 %v4499, %v4539
    %v4541 = vpop.f32.mrb[0].mxu0
    %v4542 = vadd.f32 %v4501, %v4541
    %v4543 = vpop.f32.mrb[0].mxu0
    %v4544 = vpop.f32.mrb[0].mxu0
    %4545 = vdwg.mxu0
    %v4546 = vtanh.pop %v4376
    %v4547 = vtanh.pop %v4378
    %v4548 = vtanh.pop %v4540
    %v4549 = vtanh.pop %v4542
    %v4550 = vpack.c.bf16 %v4546, %v4546
    %v4551 = vpack.c.bf16 %v4547, %v4547
    %v4552 = vpack.c.bf16 %v4548, %v4548
    %v4553 = vpack.c.bf16 %v4549, %v4549
    %v4554 = vld [vmem:[#allocation10] sm:$0xff]
    %v4555 = vld [vmem:[#allocation10 + $0x8] sm:$0xff]
    %v4556 = vld [vmem:[#allocation10 + $0x10] sm:$0xff]
    %v4557 = vld [vmem:[#allocation10 + $0x18] sm:$0xff]
    %v4558 = vld [vmem:[#allocation10 + $0x20] sm:$0xff]
    %v4559 = vld [vmem:[#allocation10 + $0x28] sm:$0xff]
    %v4560 = vld [vmem:[#allocation10 + $0x30] sm:$0xff]
    %v4561 = vld [vmem:[#allocation10 + $0x38] sm:$0xff]
    %v4562 = vld [vmem:[#allocation10 + $0x40] sm:$0xff]
    %v4563 = vld [vmem:[#allocation10 + $0x48] sm:$0xff]
    %v4564 = vld [vmem:[#allocation10 + $0x50] sm:$0xff]
    %v4565 = vld [vmem:[#allocation10 + $0x58] sm:$0xff]
    %v4566 = vld [vmem:[#allocation10 + $0x60] sm:$0xff]
    %v4567 = vld [vmem:[#allocation10 + $0x68] sm:$0xff]
    %v4568 = vld [vmem:[#allocation10 + $0x70] sm:$0xff]
    %v4569 = vld [vmem:[#allocation10 + $0x78] sm:$0xff]
    %v4570 = vld [vmem:[#allocation10 + $0x80] sm:$0xff]
    %v4571 = vld [vmem:[#allocation10 + $0x88] sm:$0xff]
    %v4572 = vld [vmem:[#allocation10 + $0x90] sm:$0xff]
    %v4573 = vld [vmem:[#allocation10 + $0x98] sm:$0xff]
    %v4574 = vld [vmem:[#allocation10 + $0xa0] sm:$0xff]
    %v4575 = vld [vmem:[#allocation10 + $0xa8] sm:$0xff]
    %v4576 = vld [vmem:[#allocation10 + $0xb0] sm:$0xff]
    %v4577 = vld [vmem:[#allocation10 + $0xb8] sm:$0xff]
    %v4578 = vld [vmem:[#allocation10 + $0xc0] sm:$0xff]
    %v4579 = vld [vmem:[#allocation10 + $0xc8] sm:$0xff]
    %v4580 = vld [vmem:[#allocation10 + $0xd0] sm:$0xff]
    %v4581 = vld [vmem:[#allocation10 + $0xd8] sm:$0xff]
    %v4582 = vld [vmem:[#allocation10 + $0xe0] sm:$0xff]
    %v4583 = vld [vmem:[#allocation10 + $0xe8] sm:$0xff]
    %v4584 = vld [vmem:[#allocation10 + $0xf0] sm:$0xff]
    %v4585 = vld [vmem:[#allocation10 + $0xf8] sm:$0xff]
    %v4586 = vld [vmem:[#allocation10 + $0x100] sm:$0xff]
    %v4587 = vld [vmem:[#allocation10 + $0x108] sm:$0xff]
    %v4588 = vld [vmem:[#allocation10 + $0x110] sm:$0xff]
    %v4589 = vld [vmem:[#allocation10 + $0x118] sm:$0xff]
    %v4590 = vld [vmem:[#allocation10 + $0x120] sm:$0xff]
    %v4591 = vld [vmem:[#allocation10 + $0x128] sm:$0xff]
    %v4592 = vld [vmem:[#allocation10 + $0x130] sm:$0xff]
    %v4593 = vld [vmem:[#allocation10 + $0x138] sm:$0xff]
    %v4594 = vld [vmem:[#allocation10 + $0x140] sm:$0xff]
    %v4595 = vld [vmem:[#allocation10 + $0x148] sm:$0xff]
    %v4596 = vld [vmem:[#allocation10 + $0x150] sm:$0xff]
    %v4597 = vld [vmem:[#allocation10 + $0x158] sm:$0xff]
    %v4598 = vld [vmem:[#allocation10 + $0x160] sm:$0xff]
    %v4599 = vld [vmem:[#allocation10 + $0x168] sm:$0xff]
    %v4600 = vld [vmem:[#allocation10 + $0x170] sm:$0xff]
    %v4601 = vld [vmem:[#allocation10 + $0x178] sm:$0xff]
    %v4602 = vld [vmem:[#allocation10 + $0x180] sm:$0xff]
    %v4603 = vld [vmem:[#allocation10 + $0x188] sm:$0xff]
    %v4604 = vld [vmem:[#allocation10 + $0x190] sm:$0xff]
    %v4605 = vld [vmem:[#allocation10 + $0x198] sm:$0xff]
    %v4606 = vld [vmem:[#allocation10 + $0x1a0] sm:$0xff]
    %v4607 = vld [vmem:[#allocation10 + $0x1a8] sm:$0xff]
    %v4608 = vld [vmem:[#allocation10 + $0x1b0] sm:$0xff]
    %v4609 = vld [vmem:[#allocation10 + $0x1b8] sm:$0xff]
    %v4610 = vld [vmem:[#allocation10 + $0x1c0] sm:$0xff]
    %v4611 = vld [vmem:[#allocation10 + $0x1c8] sm:$0xff]
    %v4612 = vld [vmem:[#allocation10 + $0x1d0] sm:$0xff]
    %v4613 = vld [vmem:[#allocation10 + $0x1d8] sm:$0xff]
    %v4614 = vld [vmem:[#allocation10 + $0x1e0] sm:$0xff]
    %v4615 = vld [vmem:[#allocation10 + $0x1e8] sm:$0xff]
    %v4616 = vld [vmem:[#allocation10 + $0x1f0] sm:$0xff]
    %v4617 = vld [vmem:[#allocation10 + $0x1f8] sm:$0xff]
    %v4618 = vld [vmem:[#allocation11] sm:$0x3]
    %v4620 = vlaneseq
    %v4621 = vshrl.u32 %v4620, 7
    %v4622 = vsub.s32 0, %v4621
    %v4623 = vrot.slane %v4618, %v4622
    %v4624 = vlaneseq
    %v4625 = vshrl.u32 %v4624, 7
    %v4626 = vsub.s32 1, %v4625
    %v4627 = vrot.slane %v4618, %v4626
    %v4694 = vunpack.c.l.b16 %v4554
    %v4695 = vunpack.c.h.b16 %v4554
    %v4696 = vunpack.c.l.b16 %v4555
    %v4697 = vunpack.c.h.b16 %v4555
    %v4698 = vunpack.c.l.b16 %v4556
    %v4699 = vunpack.c.h.b16 %v4556
    %v4700 = vunpack.c.l.b16 %v4557
    %v4701 = vunpack.c.h.b16 %v4557
    %v4702 = vunpack.c.l.b16 %v4558
    %v4703 = vunpack.c.h.b16 %v4558
    %v4704 = vunpack.c.l.b16 %v4559
    %v4705 = vunpack.c.h.b16 %v4559
    %v4706 = vunpack.c.l.b16 %v4560
    %v4707 = vunpack.c.h.b16 %v4560
    %v4708 = vunpack.c.l.b16 %v4561
    %v4709 = vunpack.c.h.b16 %v4561
    %v4710 = vunpack.c.l.b16 %v4562
    %v4711 = vunpack.c.h.b16 %v4562
    %v4712 = vunpack.c.l.b16 %v4563
    %v4713 = vunpack.c.h.b16 %v4563
    %v4714 = vunpack.c.l.b16 %v4564
    %v4715 = vunpack.c.h.b16 %v4564
    %v4716 = vunpack.c.l.b16 %v4565
    %v4717 = vunpack.c.h.b16 %v4565
    %v4718 = vunpack.c.l.b16 %v4566
    %v4719 = vunpack.c.h.b16 %v4566
    %v4720 = vunpack.c.l.b16 %v4567
    %v4721 = vunpack.c.h.b16 %v4567
    %v4722 = vunpack.c.l.b16 %v4568
    %v4723 = vunpack.c.h.b16 %v4568
    %v4724 = vunpack.c.l.b16 %v4569
    %v4725 = vunpack.c.h.b16 %v4569
    %v4726 = vunpack.c.l.b16 %v4570
    %v4727 = vunpack.c.h.b16 %v4570
    %v4728 = vunpack.c.l.b16 %v4571
    %v4729 = vunpack.c.h.b16 %v4571
    %v4730 = vunpack.c.l.b16 %v4572
    %v4731 = vunpack.c.h.b16 %v4572
    %v4732 = vunpack.c.l.b16 %v4573
    %v4733 = vunpack.c.h.b16 %v4573
    %v4734 = vunpack.c.l.b16 %v4574
    %v4735 = vunpack.c.h.b16 %v4574
    %v4736 = vunpack.c.l.b16 %v4575
    %v4737 = vunpack.c.h.b16 %v4575
    %v4738 = vunpack.c.l.b16 %v4576
    %v4739 = vunpack.c.h.b16 %v4576
    %v4740 = vunpack.c.l.b16 %v4577
    %v4741 = vunpack.c.h.b16 %v4577
    %v4742 = vunpack.c.l.b16 %v4578
    %v4743 = vunpack.c.h.b16 %v4578
    %v4744 = vunpack.c.l.b16 %v4579
    %v4745 = vunpack.c.h.b16 %v4579
    %v4746 = vunpack.c.l.b16 %v4580
    %v4747 = vunpack.c.h.b16 %v4580
    %v4748 = vunpack.c.l.b16 %v4581
    %v4749 = vunpack.c.h.b16 %v4581
    %v4750 = vunpack.c.l.b16 %v4582
    %v4751 = vunpack.c.h.b16 %v4582
    %v4752 = vunpack.c.l.b16 %v4583
    %v4753 = vunpack.c.h.b16 %v4583
    %v4754 = vunpack.c.l.b16 %v4584
    %v4755 = vunpack.c.h.b16 %v4584
    %v4756 = vunpack.c.l.b16 %v4585
    %v4757 = vunpack.c.h.b16 %v4585
    %v4758 = vunpack.c.l.b16 %v4586
    %v4759 = vunpack.c.h.b16 %v4586
    %v4760 = vunpack.c.l.b16 %v4587
    %v4761 = vunpack.c.h.b16 %v4587
    %v4762 = vunpack.c.l.b16 %v4588
    %v4763 = vunpack.c.h.b16 %v4588
    %v4764 = vunpack.c.l.b16 %v4589
    %v4765 = vunpack.c.h.b16 %v4589
    %v4766 = vunpack.c.l.b16 %v4590
    %v4767 = vunpack.c.h.b16 %v4590
    %v4768 = vunpack.c.l.b16 %v4591
    %v4769 = vunpack.c.h.b16 %v4591
    %v4770 = vunpack.c.l.b16 %v4592
    %v4771 = vunpack.c.h.b16 %v4592
    %v4772 = vunpack.c.l.b16 %v4593
    %v4773 = vunpack.c.h.b16 %v4593
    %v4774 = vunpack.c.l.b16 %v4594
    %v4775 = vunpack.c.h.b16 %v4594
    %v4776 = vunpack.c.l.b16 %v4595
    %v4777 = vunpack.c.h.b16 %v4595
    %v4778 = vunpack.c.l.b16 %v4596
    %v4779 = vunpack.c.h.b16 %v4596
    %v4780 = vunpack.c.l.b16 %v4597
    %v4781 = vunpack.c.h.b16 %v4597
    %v4782 = vunpack.c.l.b16 %v4598
    %v4783 = vunpack.c.h.b16 %v4598
    %v4784 = vunpack.c.l.b16 %v4599
    %v4785 = vunpack.c.h.b16 %v4599
    %v4786 = vunpack.c.l.b16 %v4600
    %v4787 = vunpack.c.h.b16 %v4600
    %v4788 = vunpack.c.l.b16 %v4601
    %v4789 = vunpack.c.h.b16 %v4601
    %v4790 = vunpack.c.l.b16 %v4602
    %v4791 = vunpack.c.h.b16 %v4602
    %v4792 = vunpack.c.l.b16 %v4603
    %v4793 = vunpack.c.h.b16 %v4603
    %v4794 = vunpack.c.l.b16 %v4604
    %v4795 = vunpack.c.h.b16 %v4604
    %v4796 = vunpack.c.l.b16 %v4605
    %v4797 = vunpack.c.h.b16 %v4605
    %v4798 = vunpack.c.l.b16 %v4606
    %v4799 = vunpack.c.h.b16 %v4606
    %v4800 = vunpack.c.l.b16 %v4607
    %v4801 = vunpack.c.h.b16 %v4607
    %v4802 = vunpack.c.l.b16 %v4608
    %v4803 = vunpack.c.h.b16 %v4608
    %v4804 = vunpack.c.l.b16 %v4609
    %v4805 = vunpack.c.h.b16 %v4609
    %v4806 = vunpack.c.l.b16 %v4610
    %v4807 = vunpack.c.h.b16 %v4610
    %v4808 = vunpack.c.l.b16 %v4611
    %v4809 = vunpack.c.h.b16 %v4611
    %v4810 = vunpack.c.l.b16 %v4612
    %v4811 = vunpack.c.h.b16 %v4612
    %v4812 = vunpack.c.l.b16 %v4613
    %v4813 = vunpack.c.h.b16 %v4613
    %v4814 = vunpack.c.l.b16 %v4614
    %v4815 = vunpack.c.h.b16 %v4614
    %v4816 = vunpack.c.l.b16 %v4615
    %v4817 = vunpack.c.h.b16 %v4615
    %v4818 = vunpack.c.l.b16 %v4616
    %v4819 = vunpack.c.h.b16 %v4616
    %v4820 = vunpack.c.l.b16 %v4617
    %v4821 = vunpack.c.h.b16 %v4617
    %v4822 = vpack.c.b16 %v4696, %v4694
    %v4823 = vpack.c.b16 %v4697, %v4695
    %v4824 = vpack.c.b16 %v4700, %v4698
    %v4825 = vpack.c.b16 %v4701, %v4699
    %v4826 = vpack.c.b16 %v4704, %v4702
    %v4827 = vpack.c.b16 %v4705, %v4703
    %v4828 = vpack.c.b16 %v4708, %v4706
    %v4829 = vpack.c.b16 %v4709, %v4707
    %v4830 = vpack.c.b16 %v4712, %v4710
    %v4831 = vpack.c.b16 %v4713, %v4711
    %v4832 = vpack.c.b16 %v4716, %v4714
    %v4833 = vpack.c.b16 %v4717, %v4715
    %v4834 = vpack.c.b16 %v4720, %v4718
    %v4835 = vpack.c.b16 %v4721, %v4719
    %v4836 = vpack.c.b16 %v4724, %v4722
    %v4837 = vpack.c.b16 %v4725, %v4723
    %v4838 = vpack.c.b16 %v4728, %v4726
    %v4839 = vpack.c.b16 %v4729, %v4727
    %v4840 = vpack.c.b16 %v4732, %v4730
    %v4841 = vpack.c.b16 %v4733, %v4731
    %v4842 = vpack.c.b16 %v4736, %v4734
    %v4843 = vpack.c.b16 %v4737, %v4735
    %v4844 = vpack.c.b16 %v4740, %v4738
    %v4845 = vpack.c.b16 %v4741, %v4739
    %v4846 = vpack.c.b16 %v4744, %v4742
    %v4847 = vpack.c.b16 %v4745, %v4743
    %v4848 = vpack.c.b16 %v4748, %v4746
    %v4849 = vpack.c.b16 %v4749, %v4747
    %v4850 = vpack.c.b16 %v4752, %v4750
    %v4851 = vpack.c.b16 %v4753, %v4751
    %v4852 = vpack.c.b16 %v4756, %v4754
    %v4853 = vpack.c.b16 %v4757, %v4755
    %v4854 = vpack.c.b16 %v4760, %v4758
    %v4855 = vpack.c.b16 %v4761, %v4759
    %v4856 = vpack.c.b16 %v4764, %v4762
    %v4857 = vpack.c.b16 %v4765, %v4763
    %v4858 = vpack.c.b16 %v4768, %v4766
    %v4859 = vpack.c.b16 %v4769, %v4767
    %v4860 = vpack.c.b16 %v4772, %v4770
    %v4861 = vpack.c.b16 %v4773, %v4771
    %v4862 = vpack.c.b16 %v4776, %v4774
    %v4863 = vpack.c.b16 %v4777, %v4775
    %v4864 = vpack.c.b16 %v4780, %v4778
    %v4865 = vpack.c.b16 %v4781, %v4779
    %v4866 = vpack.c.b16 %v4784, %v4782
    %v4867 = vpack.c.b16 %v4785, %v4783
    %v4868 = vpack.c.b16 %v4788, %v4786
    %v4869 = vpack.c.b16 %v4789, %v4787
    %v4870 = vpack.c.b16 %v4792, %v4790
    %v4871 = vpack.c.b16 %v4793, %v4791
    %v4872 = vpack.c.b16 %v4796, %v4794
    %v4873 = vpack.c.b16 %v4797, %v4795
    %v4874 = vpack.c.b16 %v4800, %v4798
    %v4875 = vpack.c.b16 %v4801, %v4799
    %v4876 = vpack.c.b16 %v4804, %v4802
    %v4877 = vpack.c.b16 %v4805, %v4803
    %v4878 = vpack.c.b16 %v4808, %v4806
    %v4879 = vpack.c.b16 %v4809, %v4807
    %v4880 = vpack.c.b16 %v4812, %v4810
    %v4881 = vpack.c.b16 %v4813, %v4811
    %v4882 = vpack.c.b16 %v4816, %v4814
    %v4883 = vpack.c.b16 %v4817, %v4815
    %v4884 = vpack.c.b16 %v4820, %v4818
    %v4885 = vpack.c.b16 %v4821, %v4819
    %4950 = vmatprep.subr.bf16.mxu0 %v4823
    %4951 = vmatpush1.bf16.msra.mxu0 %v4822
    %4952 = vmatprep.subr.bf16.mxu0 %v4825
    %4953 = vmatpush1.bf16.msra.mxu0 %v4824
    %4954 = vmatprep.subr.bf16.mxu0 %v4827
    %4955 = vmatpush1.bf16.msra.mxu0 %v4826
    %4956 = vmatprep.subr.bf16.mxu0 %v4829
    %4957 = vmatpush1.bf16.msra.mxu0 %v4828
    %4958 = vmatprep.subr.bf16.mxu0 %v4831
    %4959 = vmatpush1.bf16.msra.mxu0 %v4830
    %4960 = vmatprep.subr.bf16.mxu0 %v4833
    %4961 = vmatpush1.bf16.msra.mxu0 %v4832
    %4962 = vmatprep.subr.bf16.mxu0 %v4835
    %4963 = vmatpush1.bf16.msra.mxu0 %v4834
    %4964 = vmatprep.subr.bf16.mxu0 %v4837
    %4965 = vmatpush1.bf16.msra.mxu0 %v4836
    %4966 = vmatprep.subr.bf16.mxu0 %v4839
    %4967 = vmatpush1.bf16.msra.mxu0 %v4838
    %4968 = vmatprep.subr.bf16.mxu0 %v4841
    %4969 = vmatpush1.bf16.msra.mxu0 %v4840
    %4970 = vmatprep.subr.bf16.mxu0 %v4843
    %4971 = vmatpush1.bf16.msra.mxu0 %v4842
    %4972 = vmatprep.subr.bf16.mxu0 %v4845
    %4973 = vmatpush1.bf16.msra.mxu0 %v4844
    %4974 = vmatprep.subr.bf16.mxu0 %v4847
    %4975 = vmatpush1.bf16.msra.mxu0 %v4846
    %4976 = vmatprep.subr.bf16.mxu0 %v4849
    %4977 = vmatpush1.bf16.msra.mxu0 %v4848
    %4978 = vmatprep.subr.bf16.mxu0 %v4851
    %4979 = vmatpush1.bf16.msra.mxu0 %v4850
    %4980 = vmatprep.subr.bf16.mxu0 %v4853
    %4981 = vmatpush1.bf16.msra.mxu0 %v4852
    %4982 = vmatprep.mubr.bf16.mxu0 %v4551
    %4983 = vmatmul.mubr.bf16.gmra.mrb[0].mxu0 %v4550
    %v4984 = vpop.f32.mrb[0].mxu0
    %v4985 = vadd.f32 %v4623, %v4984
    %v4986 = vpop.f32.mrb[0].mxu0
    %v4987 = vadd.f32 %v4627, %v4986
    %v4988 = vpop.f32.mrb[0].mxu0
    %v4989 = vpop.f32.mrb[0].mxu0
    %4990 = vdwg.mxu0
    %4991 = vmatprep.subr.bf16.mxu0 %v4855
    %4992 = vmatpush1.bf16.msra.mxu0 %v4854
    %4993 = vmatprep.subr.bf16.mxu0 %v4857
    %4994 = vmatpush1.bf16.msra.mxu0 %v4856
    %4995 = vmatprep.subr.bf16.mxu0 %v4859
    %4996 = vmatpush1.bf16.msra.mxu0 %v4858
    %4997 = vmatprep.subr.bf16.mxu0 %v4861
    %4998 = vmatpush1.bf16.msra.mxu0 %v4860
    %4999 = vmatprep.subr.bf16.mxu0 %v4863
    %5000 = vmatpush1.bf16.msra.mxu0 %v4862
    %5001 = vmatprep.subr.bf16.mxu0 %v4865
    %5002 = vmatpush1.bf16.msra.mxu0 %v4864
    %5003 = vmatprep.subr.bf16.mxu0 %v4867
    %5004 = vmatpush1.bf16.msra.mxu0 %v4866
    %5005 = vmatprep.subr.bf16.mxu0 %v4869
    %5006 = vmatpush1.bf16.msra.mxu0 %v4868
    %5007 = vmatprep.subr.bf16.mxu0 %v4871
    %5008 = vmatpush1.bf16.msra.mxu0 %v4870
    %5009 = vmatprep.subr.bf16.mxu0 %v4873
    %5010 = vmatpush1.bf16.msra.mxu0 %v4872
    %5011 = vmatprep.subr.bf16.mxu0 %v4875
    %5012 = vmatpush1.bf16.msra.mxu0 %v4874
    %5013 = vmatprep.subr.bf16.mxu0 %v4877
    %5014 = vmatpush1.bf16.msra.mxu0 %v4876
    %5015 = vmatprep.subr.bf16.mxu0 %v4879
    %5016 = vmatpush1.bf16.msra.mxu0 %v4878
    %5017 = vmatprep.subr.bf16.mxu0 %v4881
    %5018 = vmatpush1.bf16.msra.mxu0 %v4880
    %5019 = vmatprep.subr.bf16.mxu0 %v4883
    %5020 = vmatpush1.bf16.msra.mxu0 %v4882
    %5021 = vmatprep.subr.bf16.mxu0 %v4885
    %5022 = vmatpush1.bf16.msra.mxu0 %v4884
    %5023 = vmatprep.mubr.bf16.mxu0 %v4553
    %5024 = vmatmul.mubr.bf16.gmra.mrb[0].mxu0 %v4552
    %v5025 = vpop.f32.mrb[0].mxu0
    %v5026 = vadd.f32 %v4985, %v5025
    %v5027 = vpop.f32.mrb[0].mxu0
    %v5028 = vadd.f32 %v4987, %v5027
    %v5029 = vpop.f32.mrb[0].mxu0
    %v5030 = vpop.f32.mrb[0].mxu0
    %5031 = vdwg.mxu0
    %v5032 = vtanh.pop %v5026
    %v5033 = vtanh.pop %v5028
    %v5034 = vpack.c.bf16 %v5032, %v5032
    %v5035 = vpack.c.bf16 %v5033, %v5033
    %v5036 = vld [vmem:[#allocation13] sm:$0xf]
    %v5037 = vld [vmem:[#allocation13 + $0x4] sm:$0xf]
    %v5038 = vld [vmem:[#allocation13 + $0x8] sm:$0xf]
    %v5039 = vld [vmem:[#allocation13 + $0xc] sm:$0xf]
    %v5040 = vld [vmem:[#allocation13 + $0x10] sm:$0xf]
    %v5041 = vld [vmem:[#allocation13 + $0x14] sm:$0xf]
    %v5042 = vld [vmem:[#allocation13 + $0x18] sm:$0xf]
    %v5043 = vld [vmem:[#allocation13 + $0x1c] sm:$0xf]
    %v5044 = vld [vmem:[#allocation13 + $0x20] sm:$0xf]
    %v5045 = vld [vmem:[#allocation13 + $0x24] sm:$0xf]
    %v5046 = vld [vmem:[#allocation13 + $0x28] sm:$0xf]
    %v5047 = vld [vmem:[#allocation13 + $0x2c] sm:$0xf]
    %v5048 = vld [vmem:[#allocation13 + $0x30] sm:$0xf]
    %v5049 = vld [vmem:[#allocation13 + $0x34] sm:$0xf]
    %v5050 = vld [vmem:[#allocation13 + $0x38] sm:$0xf]
    %v5051 = vld [vmem:[#allocation13 + $0x3c] sm:$0xf]
    %v5052 = vld [vmem:[#allocation13 + $0x40] sm:$0xf]
    %v5053 = vld [vmem:[#allocation13 + $0x44] sm:$0xf]
    %v5054 = vld [vmem:[#allocation13 + $0x48] sm:$0xf]
    %v5055 = vld [vmem:[#allocation13 + $0x4c] sm:$0xf]
    %v5056 = vld [vmem:[#allocation13 + $0x50] sm:$0xf]
    %v5057 = vld [vmem:[#allocation13 + $0x54] sm:$0xf]
    %v5058 = vld [vmem:[#allocation13 + $0x58] sm:$0xf]
    %v5059 = vld [vmem:[#allocation13 + $0x5c] sm:$0xf]
    %v5060 = vld [vmem:[#allocation13 + $0x60] sm:$0xf]
    %v5061 = vld [vmem:[#allocation13 + $0x64] sm:$0xf]
    %v5062 = vld [vmem:[#allocation13 + $0x68] sm:$0xf]
    %v5063 = vld [vmem:[#allocation13 + $0x6c] sm:$0xf]
    %v5064 = vld [vmem:[#allocation13 + $0x70] sm:$0xf]
    %v5065 = vld [vmem:[#allocation13 + $0x74] sm:$0xf]
    %v5066 = vld [vmem:[#allocation13 + $0x78] sm:$0xf]
    %v5067 = vld [vmem:[#allocation13 + $0x7c] sm:$0xf]
    %v5068 = vld [vmem:[#allocation14] sm:$0x1]
    %v5070 = vlaneseq
    %v5071 = vshrl.u32 %v5070, 7
    %v5072 = vsub.s32 0, %v5071
    %v5073 = vrot.slane %v5068, %v5072
    %v5107 = vunpack.c.l.b16 %v5036
    %v5108 = vunpack.c.l.b16 %v5037
    %v5109 = vunpack.c.l.b16 %v5038
    %v5110 = vunpack.c.l.b16 %v5039
    %v5111 = vunpack.c.l.b16 %v5040
    %v5112 = vunpack.c.l.b16 %v5041
    %v5113 = vunpack.c.l.b16 %v5042
    %v5114 = vunpack.c.l.b16 %v5043
    %v5115 = vunpack.c.l.b16 %v5044
    %v5116 = vunpack.c.l.b16 %v5045
    %v5117 = vunpack.c.l.b16 %v5046
    %v5118 = vunpack.c.l.b16 %v5047
    %v5119 = vunpack.c.l.b16 %v5048
    %v5120 = vunpack.c.l.b16 %v5049
    %v5121 = vunpack.c.l.b16 %v5050
    %v5122 = vunpack.c.l.b16 %v5051
    %v5123 = vunpack.c.l.b16 %v5052
    %v5124 = vunpack.c.l.b16 %v5053
    %v5125 = vunpack.c.l.b16 %v5054
    %v5126 = vunpack.c.l.b16 %v5055
    %v5127 = vunpack.c.l.b16 %v5056
    %v5128 = vunpack.c.l.b16 %v5057
    %v5129 = vunpack.c.l.b16 %v5058
    %v5130 = vunpack.c.l.b16 %v5059
    %v5131 = vunpack.c.l.b16 %v5060
    %v5132 = vunpack.c.l.b16 %v5061
    %v5133 = vunpack.c.l.b16 %v5062
    %v5134 = vunpack.c.l.b16 %v5063
    %v5135 = vunpack.c.l.b16 %v5064
    %v5136 = vunpack.c.l.b16 %v5065
    %v5137 = vunpack.c.l.b16 %v5066
    %v5138 = vunpack.c.l.b16 %v5067
    %v5139 = vpack.c.b16 %v5108, %v5107
    %v5140 = vpack.c.b16 %v5110, %v5109
    %v5141 = vpack.c.b16 %v5112, %v5111
    %v5142 = vpack.c.b16 %v5114, %v5113
    %v5143 = vpack.c.b16 %v5116, %v5115
    %v5144 = vpack.c.b16 %v5118, %v5117
    %v5145 = vpack.c.b16 %v5120, %v5119
    %v5146 = vpack.c.b16 %v5122, %v5121
    %v5147 = vpack.c.b16 %v5124, %v5123
    %v5148 = vpack.c.b16 %v5126, %v5125
    %v5149 = vpack.c.b16 %v5128, %v5127
    %v5150 = vpack.c.b16 %v5130, %v5129
    %v5151 = vpack.c.b16 %v5132, %v5131
    %v5152 = vpack.c.b16 %v5134, %v5133
    %v5153 = vpack.c.b16 %v5136, %v5135
    %v5154 = vpack.c.b16 %v5138, %v5137
    %5171 = vmatprep.subr.bf16.mxu0 0
    %5172 = vmatpush1.bf16.msra.mxu0 %v5139
    %5173 = vmatprep.subr.bf16.mxu0 0
    %5174 = vmatpush1.bf16.msra.mxu0 %v5140
    %5175 = vmatprep.subr.bf16.mxu0 0
    %5176 = vmatpush1.bf16.msra.mxu0 %v5141
    %5177 = vmatprep.subr.bf16.mxu0 0
    %5178 = vmatpush1.bf16.msra.mxu0 %v5142
    %5179 = vmatprep.subr.bf16.mxu0 0
    %5180 = vmatpush1.bf16.msra.mxu0 %v5143
    %5181 = vmatprep.subr.bf16.mxu0 0
    %5182 = vmatpush1.bf16.msra.mxu0 %v5144
    %5183 = vmatprep.subr.bf16.mxu0 0
    %5184 = vmatpush1.bf16.msra.mxu0 %v5145
    %5185 = vmatprep.subr.bf16.mxu0 0
    %5186 = vmatpush1.bf16.msra.mxu0 %v5146
    %5187 = vmatprep.subr.bf16.mxu0 0
    %5188 = vmatpush1.bf16.msra.mxu0 %v5147
    %5189 = vmatprep.subr.bf16.mxu0 0
    %5190 = vmatpush1.bf16.msra.mxu0 %v5148
    %5191 = vmatprep.subr.bf16.mxu0 0
    %5192 = vmatpush1.bf16.msra.mxu0 %v5149
    %5193 = vmatprep.subr.bf16.mxu0 0
    %5194 = vmatpush1.bf16.msra.mxu0 %v5150
    %5195 = vmatprep.subr.bf16.mxu0 0
    %5196 = vmatpush1.bf16.msra.mxu0 %v5151
    %5197 = vmatprep.subr.bf16.mxu0 0
    %5198 = vmatpush1.bf16.msra.mxu0 %v5152
    %5199 = vmatprep.subr.bf16.mxu0 0
    %5200 = vmatpush1.bf16.msra.mxu0 %v5153
    %5201 = vmatprep.subr.bf16.mxu0 0
    %5202 = vmatpush1.bf16.msra.mxu0 %v5154
    %5203 = vmatprep.mubr.bf16.mxu0 %v5035
    %5204 = vmatmul.mubr.bf16.gmra.mrb[0].mxu0 %v5034
    %v5205 = vpop.f32.mrb[0].mxu0
    %v5206 = vadd.f32 %v5073, %v5205
    %v5207 = vpop.f32.mrb[0].mxu0
    %v5208 = vpop.f32.mrb[0].mxu0
    %v5209 = vpop.f32.mrb[0].mxu0
    %5210 = vdwg.mxu0
    %v5211 = vtanh.pop %v5206
    %v5212 = vpack.c.bf16 %v5211, %v5211
    %v5213 = vunpack.c.l.bf16 %v5212
    %5214 = vst [vmem:[#allocation20] sm:$0xff] %v5213
    %v5215 = vld [vmem:[#allocation16] sm:$0xf]
    %v5216 = vld [vmem:[#allocation16 + $0x4] sm:$0xf]
    %v5217 = vld [vmem:[#allocation16 + $0x8] sm:$0xf]
    %v5218 = vld [vmem:[#allocation16 + $0xc] sm:$0xf]
    %v5219 = vld [vmem:[#allocation16 + $0x10] sm:$0xf]
    %v5220 = vld [vmem:[#allocation16 + $0x14] sm:$0xf]
    %v5221 = vld [vmem:[#allocation16 + $0x18] sm:$0xf]
    %v5222 = vld [vmem:[#allocation16 + $0x1c] sm:$0xf]
    %v5223 = vld [vmem:[#allocation16 + $0x20] sm:$0xf]
    %v5224 = vld [vmem:[#allocation16 + $0x24] sm:$0xf]
    %v5225 = vld [vmem:[#allocation16 + $0x28] sm:$0xf]
    %v5226 = vld [vmem:[#allocation16 + $0x2c] sm:$0xf]
    %v5227 = vld [vmem:[#allocation16 + $0x30] sm:$0xf]
    %v5228 = vld [vmem:[#allocation16 + $0x34] sm:$0xf]
    %v5229 = vld [vmem:[#allocation16 + $0x38] sm:$0xf]
    %v5230 = vld [vmem:[#allocation16 + $0x3c] sm:$0xf]
    %v5231 = vld [vmem:[#allocation17] sm:$0x1]
    %v5233 = vlaneseq
    %v5234 = vshrl.u32 %v5233, 7
    %v5235 = vsub.s32 0, %v5234
    %v5236 = vrot.slane %v5231, %v5235
    %v5254 = vunpack.c.l.b16 %v5215
    %v5255 = vunpack.c.l.b16 %v5216
    %v5256 = vunpack.c.l.b16 %v5217
    %v5257 = vunpack.c.l.b16 %v5218
    %v5258 = vunpack.c.l.b16 %v5219
    %v5259 = vunpack.c.l.b16 %v5220
    %v5260 = vunpack.c.l.b16 %v5221
    %v5261 = vunpack.c.l.b16 %v5222
    %v5262 = vunpack.c.l.b16 %v5223
    %v5263 = vunpack.c.l.b16 %v5224
    %v5264 = vunpack.c.l.b16 %v5225
    %v5265 = vunpack.c.l.b16 %v5226
    %v5266 = vunpack.c.l.b16 %v5227
    %v5267 = vunpack.c.l.b16 %v5228
    %v5268 = vunpack.c.l.b16 %v5229
    %v5269 = vunpack.c.l.b16 %v5230
    %v5270 = vpack.c.b16 %v5255, %v5254
    %v5271 = vpack.c.b16 %v5257, %v5256
    %v5272 = vpack.c.b16 %v5259, %v5258
    %v5273 = vpack.c.b16 %v5261, %v5260
    %v5274 = vpack.c.b16 %v5263, %v5262
    %v5275 = vpack.c.b16 %v5265, %v5264
    %v5276 = vpack.c.b16 %v5267, %v5266
    %v5277 = vpack.c.b16 %v5269, %v5268
    %5286 = vmatprep.subr.bf16.mxu0 0
    %5287 = vmatpush1.bf16.msra.mxu0 %v5270
    %5288 = vmatprep.subr.bf16.mxu0 0
    %5289 = vmatpush1.bf16.msra.mxu0 %v5271
    %5290 = vmatprep.subr.bf16.mxu0 0
    %5291 = vmatpush1.bf16.msra.mxu0 %v5272
    %5292 = vmatprep.subr.bf16.mxu0 0
    %5293 = vmatpush1.bf16.msra.mxu0 %v5273
    %5294 = vmatprep.subr.bf16.mxu0 0
    %5295 = vmatpush1.bf16.msra.mxu0 %v5274
    %5296 = vmatprep.subr.bf16.mxu0 0
    %5297 = vmatpush1.bf16.msra.mxu0 %v5275
    %5298 = vmatprep.subr.bf16.mxu0 0
    %5299 = vmatpush1.bf16.msra.mxu0 %v5276
    %5300 = vmatprep.subr.bf16.mxu0 0
    %5301 = vmatpush1.bf16.msra.mxu0 %v5277
    %5302 = vmatprep.subr.bf16.mxu0 0
    %5303 = vmatpush1.bf16.msra.mxu0 0
    %5304 = vmatprep.subr.bf16.mxu0 0
    %5305 = vmatpush1.bf16.msra.mxu0 0
    %5306 = vmatprep.subr.bf16.mxu0 0
    %5307 = vmatpush1.bf16.msra.mxu0 0
    %5308 = vmatprep.subr.bf16.mxu0 0
    %5309 = vmatpush1.bf16.msra.mxu0 0
    %5310 = vmatprep.subr.bf16.mxu0 0
    %5311 = vmatpush1.bf16.msra.mxu0 0
    %5312 = vmatprep.subr.bf16.mxu0 0
    %5313 = vmatpush1.bf16.msra.mxu0 0
    %5314 = vmatprep.subr.bf16.mxu0 0
    %5315 = vmatpush1.bf16.msra.mxu0 0
    %5316 = vmatprep.subr.bf16.mxu0 0
    %5317 = vmatpush1.bf16.msra.mxu0 0
    %5318 = vmatprep.mubr.bf16.mxu0 0
    %5319 = vmatmul.mubr.bf16.gmra.mrb[0].mxu0 %v5212
    %v5320 = vpop.f32.mrb[0].mxu0
    %v5321 = vadd.f32 %v5236, %v5320
    %v5322 = vpop.f32.mrb[0].mxu0
    %v5323 = vpop.f32.mrb[0].mxu0
    %v5324 = vpop.f32.mrb[0].mxu0
    %5325 = vdwg.mxu0
    %5326 = vst [vmem:[#allocation19] sm:$0xff] %v5321
    // Predicated region
    $region86: #{purchase_classifier_forward.1} parent=1 // pred_check
      _
    $region87: #{purchase_classifier_forward.1} parent=1 // pred_check_branch
      %5328 = sbr.rel (0) target = $region89
    $region88: #{purchase_classifier_forward.1} parent=1 // pred_region
      %s5330 = ssub.s32 128, 128
      %5331 = vsyncadd [#allocation4], %s5330
      %s5333 = sshll.u32 [#allocation19], 4
      %s5334 = int_to_ptr.vmem [resolvable:$true] %s5333
      %5336 = dma.vmem_to_hbm [thread:$0]  %s5334, 128, %s11, [#allocation4]
    $region89: #{purchase_classifier_forward.1} parent=1 // pred_fallthru
      _
    // Predicated region
    $region90: #{purchase_classifier_forward.1} parent=1 // pred_check
      _
    $region91: #{purchase_classifier_forward.1} parent=1 // pred_check_branch
      %5338 = sbr.rel (0) target = $region93
    $region92: #{purchase_classifier_forward.1} parent=1 // pred_region
      %s5340 = ssub.s32 128, 128
      %5341 = vsyncadd [#allocation21], %s5340
      %s5343 = sshll.u32 [#allocation20], 4
      %s5344 = int_to_ptr.vmem [resolvable:$true] %s5343
      %5346 = dma.vmem_to_hbm [thread:$0]  %s5344, 128, %s12, [#allocation21]
    $region93: #{purchase_classifier_forward.1} parent=1 // pred_fallthru
      _
    // Predicated region
    $region94: #{purchase_classifier_forward.1} parent=1 // pred_check
      _
    $region95: #{purchase_classifier_forward.1} parent=1 // pred_check_branch
      %5348 = sbr.rel (0) target = $region97
    $region96: #{purchase_classifier_forward.1} parent=1 // pred_region
      %5349 = dma.done [#allocation4], 128
    $region97: #{purchase_classifier_forward.1} parent=1 // pred_fallthru
      _
    // Predicated region
    $region98: #{purchase_classifier_forward.1} parent=1 // pred_check
      _
    $region99: #{purchase_classifier_forward.1} parent=1 // pred_check_branch
      %5351 = sbr.rel (0) target = $region101
    $region100: #{purchase_classifier_forward.1} parent=1 // pred_region
      %5352 = dma.done [#allocation21], 128
    $region101: #{purchase_classifier_forward.1} parent=1 // pred_fallthru
      _
    %5353 = vsyncpa [#allocation3], 1
    %5354 = vsyncpa [#allocation6], 1
    %5355 = vsyncpa [#allocation9], 1
    %5356 = vsyncpa [#allocation12], 1
    %5357 = vsyncpa [#allocation15], 1
    %5358 = vsyncpa [#allocation18], 1
    %5359 = vsyncpa [#allocation4], 1
    %5360 = vsyncpa [#allocation21], 1

</llo_original>
